<compile_context>
chip_gen: v6e
topology: v6e:2x2x1
jax: 0.10.0
libtpu: 0.0.40
codegen_flags: <defaults>
</compile_context>

<pallas_src>
import functools
import numpy as np
import jax
import jax.numpy as jnp
from jax.experimental import pallas as pl
from jax.experimental.pallas import tpu as pltpu  # noqa: F401  (kept for TPU-specific tuning hooks)


N_HEAD, D_MODEL, D_K, D_V = 4, 32, 8, 8
NUM_EMB = 64
COMMITMENT_COST = 0.25


# ----------------------------- fused Pallas kernel -----------------------------

def _mha_vq_fused_kernel(
    # inputs
    x_ref,      # (3, sz_b*seq, d_model)   stacked q / k / v activations
    w_ref,      # (3*n_head, d_model, d_k) per-head projection weights (Q pre-scaled by 1/temp)
    b_ref,      # (3*n_head, 1, d_k)       per-head projection biases  (Q pre-scaled by 1/temp)
    wfc_ref,    # (n_head, d_v, d_model)   per-head fc weights
    vec_ref,    # (3, 1, d_model)          [b_fc; ln_gamma; ln_beta]
    emb_ref,    # (num_emb, d_v)           VQ codebook
    rand_ref,   # (1, N) int32             random codebook ids for rows 27:36, -1 elsewhere
    # outputs
    y_ref,      # (sz_b*seq, d_model)
    attn_ref,   # (N, N)  block-diagonal softmax; host extracts the diagonal blocks
    idx_ref,    # (1, N) int32  encoding indices (lane-dense)
    misc_ref,   # (1, 2)  [loss, perplexity]
    *, n_head, sz_b, seq, d_v, num_emb, commitment,
):
    f32 = jnp.float32
    bl = sz_b * seq          # rows per head group
    n = n_head * bl          # total (head, batch, time) rows

    # ---- per-head Q/K/V projections, written head-major along rows (sublanes).
    #      12 tiny matmuls on an otherwise idle MXU instead of 3 wide matmuls
    #      followed by ~24 lane-offset slices.
    def project(m):
        x = x_ref[m]                                               # (bl, d_model)
        return jnp.concatenate(
            [jnp.dot(x, w_ref[m * n_head + h], preferred_element_type=f32)
             + b_ref[m * n_head + h]
             for h in range(n_head)],
            axis=0)                                                # (n, d_k)

    qf = project(0)            # 1/temperature already folded into W_q, b_q on host
    kf = project(1)
    flat_v = project(2)        # == VQ flat_input rows in torch's (head, batch, time) order

    emb = emb_ref[...]                                             # (K, d_v)

    # ---- VectorQuantizer ('vqvae') in transposed (K, N) layout so the argmin
    #      indices come out lane-dense (1, N) with no transposes.
    e2 = jnp.sum(emb * emb, axis=1, keepdims=True)                 # (K, 1)
    ev = jax.lax.dot_general(emb, flat_v, (((1,), (1,)), ((), ())),
                             preferred_element_type=f32)           # (K, N) = E V^T
    # ||v||^2 is constant per column -> irrelevant for the argmin over K.
    score = e2 - 2.0 * ev                                          # (K, N)
    kcol_i = jax.lax.broadcasted_iota(jnp.int32, score.shape, 0)
    kcol_f = kcol_i.astype(f32)
    smin = jnp.min(score, axis=0, keepdims=True)                   # (1, N)
    idx = jnp.min(jnp.where(score == smin, kcol_f, float(num_emb)),
                  axis=0, keepdims=True).astype(jnp.int32)         # first-occurrence argmin
    # NOTE: NaN inputs would leave the sentinel `num_emb` here (out-of-range, all-zero one-hot).
    rand = rand_ref[...]
    idx = jnp.where(rand >= 0, rand, idx)                          # torch's randint rows 27:36
    idx_ref[...] = idx

    enc_t = (kcol_i == idx).astype(f32)                            # (K, N) one-hot columns

    # ---- VQ loss (forward value) & perplexity without materializing `quantized`:
    #      sum((q - v)^2) = sum_k cnt_k*||e_k||^2 - 2*sum(enc_t * EV^T) + sum ||v||^2
    cnt = jnp.sum(enc_t, axis=1, keepdims=True)                    # (K, 1)
    sum_q2 = jnp.sum(cnt * e2, axis=0, keepdims=True)              # (1, 1)
    sum_qv = jnp.sum(jnp.sum(enc_t * ev, axis=1, keepdims=True), axis=0, keepdims=True)
    sum_v2 = jnp.sum(jnp.sum(flat_v * flat_v, axis=1, keepdims=True), axis=0, keepdims=True)
    sse = sum_q2 - 2.0 * sum_qv + sum_v2
    loss = (1.0 + commitment) * sse * (1.0 / (n * d_v))            # q_latent + c * e_latent

    avg = cnt * (1.0 / n)                                          # (K, 1)
    neg_ent = -jnp.sum(avg * jnp.log(avg + 1e-10), axis=0, keepdims=True)
    perp = jnp.exp(neg_ent)
    lane2 = jax.lax.broadcasted_iota(jnp.int32, (1, 2), 1)
    misc_ref[...] = jnp.where(lane2 == 0, loss, perp)              # [loss, perplexity]

    # ---- scaled dot-product attention: all (head, batch) blocks in ONE masked matmul.
    # TODO(synk): attention-dropout and output-dropout are identity (eval mode).
    s = jax.lax.dot_general(qf, kf, (((1,), (1,)), ((), ())),
                            preferred_element_type=f32)            # (N, N)
    inv_seq = 1.0 / float(seq)
    rpos = jax.lax.broadcasted_iota(jnp.int32, s.shape, 0).astype(f32)
    cpos = jax.lax.broadcasted_iota(jnp.int32, s.shape, 1).astype(f32)
    same_blk = jnp.floor((rpos + 0.5) * inv_seq) == jnp.floor((cpos + 0.5) * inv_seq)
    s = jnp.where(same_blk, s, -1e30)                              # off-block -> softmax 0
    s = s - jnp.max(s, axis=1, keepdims=True)
    p = jnp.exp(s)
    p = p / jnp.sum(p, axis=1, keepdims=True)                      # exact normalize (parity)
    attn_ref[...] = p

    # attention output: O = P @ quantized == (P @ enc) @ emb ; both matmuls are
    # standard-orientation MXU patterns, `quantized` never materialized.
    g = jax.lax.dot_general(p, enc_t, (((1,), (1,)), ((), ())),
                            preferred_element_type=f32)            # (N, K)
    o = jnp.dot(g, emb, preferred_element_type=f32)                # (N, d_v)

    # ---- per-head fc accumulation (no lane-offset cat assembly) + LayerNorm ----
    yy = vec_ref[0]                                                # (1, d_model) = b_fc
    for h in range(n_head):
        yy = yy + jnp.dot(o[h * bl:(h + 1) * bl, :], wfc_ref[h],
                          preferred_element_type=f32)              # (bl, d_model)
    mu = jnp.mean(yy, axis=-1, keepdims=True)
    var = jnp.mean((yy - mu) ** 2, axis=-1, keepdims=True)
    y_ref[...] = (yy - mu) * jax.lax.rsqrt(var + 1e-5) * vec_ref[1] + vec_ref[2]


# ----------------------------- wrapper -----------------------------

def multi_head_attention_forward(params, q_in, k_in, v_in, noise_key):
    sz_b, seq, d_model = q_in.shape
    # Fused block-diagonal path assumes equal q/k/v lengths (true for this module's usage).
    assert k_in.shape == q_in.shape and v_in.shape == q_in.shape
    bl = sz_b * seq
    n_total = N_HEAD * bl
    n_blk = N_HEAD * sz_b
    inv_temp = float(1.0 / np.power(D_K, 0.5))

    # ---------------- host-side packing / folding (pure layout plumbing) ----------------
    x_qkv = jnp.stack([q_in.reshape(bl, d_model),
                       k_in.reshape(bl, d_model),
                       v_in.reshape(bl, d_model)], axis=0)           # (3, bl, d_model)

    def split_heads(w, b, scale):
        w = (w * scale).reshape(d_model, N_HEAD, D_K).transpose(1, 0, 2)   # (H, d_model, d_k)
        b = (b * scale).reshape(N_HEAD, 1, D_K)                            # (H, 1, d_k)
        return w, b

    wq, bq = split_heads(params["w_qs"], params["b_qs"], inv_temp)   # fold 1/temperature into Q
    wk, bk = split_heads(params["w_ks"], params["b_ks"], 1.0)
    wv, bv = split_heads(params["w_vs"], params["b_vs"], 1.0)
    w_qkv = jnp.concatenate([wq, wk, wv], axis=0)                    # (3*H, d_model, d_k)
    b_qkv = jnp.concatenate([bq, bk, bv], axis=0)                    # (3*H, 1, d_k)
    w_fc_h = params["w_fc"].reshape(N_HEAD, D_V, D_MODEL)            # (H, d_v, d_model)
    vecs = jnp.stack([params["b_fc"], params["ln_gamma"], params["ln_beta"]],
                     axis=0).reshape(3, 1, D_MODEL)

    # torch: rows 27:36 of encoding_indices get random codebook ids
    a_lo, a_hi = min(27, n_total), min(36, n_total)
    rand_row = jnp.full((1, n_total), -1, dtype=jnp.int32)
    if a_hi > a_lo:
        rand_vals = jax.random.randint(noise_key, (1, a_hi - a_lo), 0, NUM_EMB, dtype=jnp.int32)
        rand_row = rand_row.at[:, a_lo:a_hi].set(rand_vals)

    kern = functools.partial(
        _mha_vq_fused_kernel,
        n_head=N_HEAD, sz_b=sz_b, seq=seq, d_v=D_V,
        num_emb=NUM_EMB, commitment=COMMITMENT_COST)

    out_shapes = (
        jax.ShapeDtypeStruct((bl, D_MODEL), jnp.float32),            # y (flat)
        jax.ShapeDtypeStruct((n_total, n_total), jnp.float32),       # block-diag attention
        jax.ShapeDtypeStruct((1, n_total), jnp.int32),               # encoding indices
        jax.ShapeDtypeStruct((1, 2), jnp.float32),                   # [loss, perplexity]
    )

    y2, p_full, idx_row, misc = pl.pallas_call(
        kern,
        out_shape=out_shapes,
    )(x_qkv, w_qkv, b_qkv, w_fc_h, vecs, params["embedding"], rand_row)

    # ---------------- host-side unpacking (layout only) ----------------
    y = y2.reshape(sz_b, seq, D_MODEL)
    attn = jnp.stack([p_full[i * seq:(i + 1) * seq, i * seq:(i + 1) * seq]
                      for i in range(n_blk)], axis=0)                # (H*B, seq, seq)
    idx = idx_row.reshape(n_total, 1)
    return y, attn, misc[0, 0], misc[0, 1], idx


# ----------------------------- params -----------------------------

def init_params(key):
    ks = jax.random.split(key, 10)
    std_qk = float(np.sqrt(2.0 / (D_MODEL + D_K)))
    std_v = float(np.sqrt(2.0 / (D_MODEL + D_V)))
    bnd = 1.0 / float(np.sqrt(D_MODEL))
    fc_std = float(np.sqrt(2.0 / (N_HEAD * D_V + D_MODEL)))
    fc_bnd = 1.0 / float(np.sqrt(N_HEAD * D_V))
    return dict(
        # weights stored as (in, out) so kernels do x @ W (== torch x @ W.T)
        w_qs=(jax.random.normal(ks[0], (D_MODEL, N_HEAD * D_K)) * std_qk).astype(jnp.float32),
        b_qs=jax.random.uniform(ks[1], (N_HEAD * D_K,), minval=-bnd, maxval=bnd).astype(jnp.float32),
        w_ks=(jax.random.normal(ks[2], (D_MODEL, N_HEAD * D_K)) * std_qk).astype(jnp.float32),
        b_ks=jax.random.uniform(ks[3], (N_HEAD * D_K,), minval=-bnd, maxval=bnd).astype(jnp.float32),
        w_vs=(jax.random.normal(ks[4], (D_MODEL, N_HEAD * D_V)) * std_v).astype(jnp.float32),
        b_vs=jax.random.uniform(ks[5], (N_HEAD * D_V,), minval=-bnd, maxval=bnd).astype(jnp.float32),
        w_fc=(jax.random.normal(ks[6], (N_HEAD * D_V, D_MODEL)) * fc_std).astype(jnp.float32),
        b_fc=jax.random.uniform(ks[7], (D_MODEL,), minval=-fc_bnd, maxval=fc_bnd).astype(jnp.float32),
        ln_gamma=jnp.ones((D_MODEL,), jnp.float32),
        ln_beta=jnp.zeros((D_MODEL,), jnp.float32),
        embedding=jax.random.uniform(
            ks[8], (NUM_EMB, D_V), minval=-1.0 / NUM_EMB, maxval=1.0 / NUM_EMB
        ).astype(jnp.float32),
    )


# ----------------------------- main -----------------------------

if __name__ == "__main__":
    key = jax.random.PRNGKey(0)
    k_params, k_q, k_k, k_v, k_noise = jax.random.split(key, 5)

    params = init_params(k_params)

    sz_b, seq = 2, 8
    q_in = jax.random.normal(k_q, (sz_b, seq, D_MODEL), dtype=jnp.float32)
    k_in = jax.random.normal(k_k, (sz_b, seq, D_MODEL), dtype=jnp.float32)
    v_in = jax.random.normal(k_v, (sz_b, seq, D_MODEL), dtype=jnp.float32)

    fwd = jax.jit(multi_head_attention_forward)
    out, attn, loss, perplexity, indices = fwd(params, q_in, k_in, v_in, k_noise)
    jax.block_until_ready((out, attn, loss, perplexity, indices))

    assert out.shape == (sz_b, seq, D_MODEL)
    assert attn.shape == (N_HEAD * sz_b, seq, seq)
    assert indices.shape == (N_HEAD * sz_b * seq, 1)
    print("KERNEL_OK")
</pallas_src>

<mosaic_0001>
module attributes {stable_mosaic.version = 11 : i64} {
  func.func @_mha_vq_fused_kernel(%arg0: memref<3x16x32xf32, #tpu.memory_space<vmem>>, %arg1: memref<12x32x8xf32, #tpu.memory_space<vmem>>, %arg2: memref<12x1x8xf32, #tpu.memory_space<vmem>>, %arg3: memref<4x8x32xf32, #tpu.memory_space<vmem>>, %arg4: memref<3x1x32xf32, #tpu.memory_space<vmem>>, %arg5: memref<64x8xf32, #tpu.memory_space<vmem>>, %arg6: memref<1x64xi32, #tpu.memory_space<vmem>>, %arg7: memref<16x32xf32, #tpu.memory_space<vmem>>, %arg8: memref<64x64xf32, #tpu.memory_space<vmem>>, %arg9: memref<1x64xi32, #tpu.memory_space<vmem>>, %arg10: memref<1x2xf32, #tpu.memory_space<vmem>>) attributes {dimension_semantics = [], scalar_prefetch = 0 : i64, scratch_operands = 0 : i64, tpu.core_type = #tpu.core_type<tc>} {
    %c0 = arith.constant 0 : index
    %c0_0 = arith.constant 0 : index
    %c0_1 = arith.constant 0 : index
    %0 = vector.load %arg0[%c0, %c0_0, %c0_1] : memref<3x16x32xf32, #tpu.memory_space<vmem>>, vector<1x16x32xf32>
    %1 = vector.shape_cast %0 : vector<1x16x32xf32> to vector<16x32xf32>
    %c0_2 = arith.constant 0 : index
    %c0_3 = arith.constant 0 : index
    %c0_4 = arith.constant 0 : index
    %2 = vector.load %arg1[%c0_2, %c0_3, %c0_4] : memref<12x32x8xf32, #tpu.memory_space<vmem>>, vector<1x32x8xf32>
    %3 = vector.shape_cast %2 : vector<1x32x8xf32> to vector<32x8xf32>
    %cst = arith.constant dense<0.000000e+00> : vector<16x8xf32>
    %4 = tpu.matmul %1, %3, %cst {dimension_numbers = #tpu.dot_dimension_numbers<[1], [0], [0], [1], [0, 0, 1, 1], [], []>} : vector<16x32xf32>, vector<32x8xf32>, vector<16x8xf32> -> vector<16x8xf32>
    %c0_5 = arith.constant 0 : index
    %c0_6 = arith.constant 0 : index
    %c0_7 = arith.constant 0 : index
    %5 = vector.load %arg2[%c0_5, %c0_6, %c0_7] : memref<12x1x8xf32, #tpu.memory_space<vmem>>, vector<1x1x8xf32>
    %6 = vector.shape_cast %5 : vector<1x1x8xf32> to vector<1x8xf32>
    %7 = vector.broadcast %6 : vector<1x8xf32> to vector<16x8xf32>
    %8 = arith.addf %4, %7 : vector<16x8xf32>
    %c1 = arith.constant 1 : index
    %c0_8 = arith.constant 0 : index
    %c0_9 = arith.constant 0 : index
    %9 = vector.load %arg1[%c1, %c0_8, %c0_9] : memref<12x32x8xf32, #tpu.memory_space<vmem>>, vector<1x32x8xf32>
    %10 = vector.shape_cast %9 : vector<1x32x8xf32> to vector<32x8xf32>
    %cst_10 = arith.constant dense<0.000000e+00> : vector<16x8xf32>
    %11 = tpu.matmul %1, %10, %cst_10 {dimension_numbers = #tpu.dot_dimension_numbers<[1], [0], [0], [1], [0, 0, 1, 1], [], []>} : vector<16x32xf32>, vector<32x8xf32>, vector<16x8xf32> -> vector<16x8xf32>
    %c1_11 = arith.constant 1 : index
    %c0_12 = arith.constant 0 : index
    %c0_13 = arith.constant 0 : index
    %12 = vector.load %arg2[%c1_11, %c0_12, %c0_13] : memref<12x1x8xf32, #tpu.memory_space<vmem>>, vector<1x1x8xf32>
    %13 = vector.shape_cast %12 : vector<1x1x8xf32> to vector<1x8xf32>
    %14 = vector.broadcast %13 : vector<1x8xf32> to vector<16x8xf32>
    %15 = arith.addf %11, %14 : vector<16x8xf32>
    %c2 = arith.constant 2 : index
    %c0_14 = arith.constant 0 : index
    %c0_15 = arith.constant 0 : index
    %16 = vector.load %arg1[%c2, %c0_14, %c0_15] : memref<12x32x8xf32, #tpu.memory_space<vmem>>, vector<1x32x8xf32>
    %17 = vector.shape_cast %16 : vector<1x32x8xf32> to vector<32x8xf32>
    %cst_16 = arith.constant dense<0.000000e+00> : vector<16x8xf32>
    %18 = tpu.matmul %1, %17, %cst_16 {dimension_numbers = #tpu.dot_dimension_numbers<[1], [0], [0], [1], [0, 0, 1, 1], [], []>} : vector<16x32xf32>, vector<32x8xf32>, vector<16x8xf32> -> vector<16x8xf32>
    %c2_17 = arith.constant 2 : index
    %c0_18 = arith.constant 0 : index
    %c0_19 = arith.constant 0 : index
    %19 = vector.load %arg2[%c2_17, %c0_18, %c0_19] : memref<12x1x8xf32, #tpu.memory_space<vmem>>, vector<1x1x8xf32>
    %20 = vector.shape_cast %19 : vector<1x1x8xf32> to vector<1x8xf32>
    %21 = vector.broadcast %20 : vector<1x8xf32> to vector<16x8xf32>
    %22 = arith.addf %18, %21 : vector<16x8xf32>
    %c3 = arith.constant 3 : index
    %c0_20 = arith.constant 0 : index
    %c0_21 = arith.constant 0 : index
    %23 = vector.load %arg1[%c3, %c0_20, %c0_21] : memref<12x32x8xf32, #tpu.memory_space<vmem>>, vector<1x32x8xf32>
    %24 = vector.shape_cast %23 : vector<1x32x8xf32> to vector<32x8xf32>
    %cst_22 = arith.constant dense<0.000000e+00> : vector<16x8xf32>
    %25 = tpu.matmul %1, %24, %cst_22 {dimension_numbers = #tpu.dot_dimension_numbers<[1], [0], [0], [1], [0, 0, 1, 1], [], []>} : vector<16x32xf32>, vector<32x8xf32>, vector<16x8xf32> -> vector<16x8xf32>
    %c3_23 = arith.constant 3 : index
    %c0_24 = arith.constant 0 : index
    %c0_25 = arith.constant 0 : index
    %26 = vector.load %arg2[%c3_23, %c0_24, %c0_25] : memref<12x1x8xf32, #tpu.memory_space<vmem>>, vector<1x1x8xf32>
    %27 = vector.shape_cast %26 : vector<1x1x8xf32> to vector<1x8xf32>
    %28 = vector.broadcast %27 : vector<1x8xf32> to vector<16x8xf32>
    %29 = arith.addf %25, %28 : vector<16x8xf32>
    %30 = tpu.concatenate %8, %15, %22, %29 in 0 : vector<16x8xf32>, vector<16x8xf32>, vector<16x8xf32>, vector<16x8xf32> -> vector<64x8xf32>
    %c1_26 = arith.constant 1 : index
    %c0_27 = arith.constant 0 : index
    %c0_28 = arith.constant 0 : index
    %31 = vector.load %arg0[%c1_26, %c0_27, %c0_28] : memref<3x16x32xf32, #tpu.memory_space<vmem>>, vector<1x16x32xf32>
    %32 = vector.shape_cast %31 : vector<1x16x32xf32> to vector<16x32xf32>
    %c4 = arith.constant 4 : index
    %c0_29 = arith.constant 0 : index
    %c0_30 = arith.constant 0 : index
    %33 = vector.load %arg1[%c4, %c0_29, %c0_30] : memref<12x32x8xf32, #tpu.memory_space<vmem>>, vector<1x32x8xf32>
    %34 = vector.shape_cast %33 : vector<1x32x8xf32> to vector<32x8xf32>
    %cst_31 = arith.constant dense<0.000000e+00> : vector<16x8xf32>
    %35 = tpu.matmul %32, %34, %cst_31 {dimension_numbers = #tpu.dot_dimension_numbers<[1], [0], [0], [1], [0, 0, 1, 1], [], []>} : vector<16x32xf32>, vector<32x8xf32>, vector<16x8xf32> -> vector<16x8xf32>
    %c4_32 = arith.constant 4 : index
    %c0_33 = arith.constant 0 : index
    %c0_34 = arith.constant 0 : index
    %36 = vector.load %arg2[%c4_32, %c0_33, %c0_34] : memref<12x1x8xf32, #tpu.memory_space<vmem>>, vector<1x1x8xf32>
    %37 = vector.shape_cast %36 : vector<1x1x8xf32> to vector<1x8xf32>
    %38 = vector.broadcast %37 : vector<1x8xf32> to vector<16x8xf32>
    %39 = arith.addf %35, %38 : vector<16x8xf32>
    %c5 = arith.constant 5 : index
    %c0_35 = arith.constant 0 : index
    %c0_36 = arith.constant 0 : index
    %40 = vector.load %arg1[%c5, %c0_35, %c0_36] : memref<12x32x8xf32, #tpu.memory_space<vmem>>, vector<1x32x8xf32>
    %41 = vector.shape_cast %40 : vector<1x32x8xf32> to vector<32x8xf32>
    %cst_37 = arith.constant dense<0.000000e+00> : vector<16x8xf32>
    %42 = tpu.matmul %32, %41, %cst_37 {dimension_numbers = #tpu.dot_dimension_numbers<[1], [0], [0], [1], [0, 0, 1, 1], [], []>} : vector<16x32xf32>, vector<32x8xf32>, vector<16x8xf32> -> vector<16x8xf32>
    %c5_38 = arith.constant 5 : index
    %c0_39 = arith.constant 0 : index
    %c0_40 = arith.constant 0 : index
    %43 = vector.load %arg2[%c5_38, %c0_39, %c0_40] : memref<12x1x8xf32, #tpu.memory_space<vmem>>, vector<1x1x8xf32>
    %44 = vector.shape_cast %43 : vector<1x1x8xf32> to vector<1x8xf32>
    %45 = vector.broadcast %44 : vector<1x8xf32> to vector<16x8xf32>
    %46 = arith.addf %42, %45 : vector<16x8xf32>
    %c6 = arith.constant 6 : index
    %c0_41 = arith.constant 0 : index
    %c0_42 = arith.constant 0 : index
    %47 = vector.load %arg1[%c6, %c0_41, %c0_42] : memref<12x32x8xf32, #tpu.memory_space<vmem>>, vector<1x32x8xf32>
    %48 = vector.shape_cast %47 : vector<1x32x8xf32> to vector<32x8xf32>
    %cst_43 = arith.constant dense<0.000000e+00> : vector<16x8xf32>
    %49 = tpu.matmul %32, %48, %cst_43 {dimension_numbers = #tpu.dot_dimension_numbers<[1], [0], [0], [1], [0, 0, 1, 1], [], []>} : vector<16x32xf32>, vector<32x8xf32>, vector<16x8xf32> -> vector<16x8xf32>
    %c6_44 = arith.constant 6 : index
    %c0_45 = arith.constant 0 : index
    %c0_46 = arith.constant 0 : index
    %50 = vector.load %arg2[%c6_44, %c0_45, %c0_46] : memref<12x1x8xf32, #tpu.memory_space<vmem>>, vector<1x1x8xf32>
    %51 = vector.shape_cast %50 : vector<1x1x8xf32> to vector<1x8xf32>
    %52 = vector.broadcast %51 : vector<1x8xf32> to vector<16x8xf32>
    %53 = arith.addf %49, %52 : vector<16x8xf32>
    %c7 = arith.constant 7 : index
    %c0_47 = arith.constant 0 : index
    %c0_48 = arith.constant 0 : index
    %54 = vector.load %arg1[%c7, %c0_47, %c0_48] : memref<12x32x8xf32, #tpu.memory_space<vmem>>, vector<1x32x8xf32>
    %55 = vector.shape_cast %54 : vector<1x32x8xf32> to vector<32x8xf32>
    %cst_49 = arith.constant dense<0.000000e+00> : vector<16x8xf32>
    %56 = tpu.matmul %32, %55, %cst_49 {dimension_numbers = #tpu.dot_dimension_numbers<[1], [0], [0], [1], [0, 0, 1, 1], [], []>} : vector<16x32xf32>, vector<32x8xf32>, vector<16x8xf32> -> vector<16x8xf32>
    %c7_50 = arith.constant 7 : index
    %c0_51 = arith.constant 0 : index
    %c0_52 = arith.constant 0 : index
    %57 = vector.load %arg2[%c7_50, %c0_51, %c0_52] : memref<12x1x8xf32, #tpu.memory_space<vmem>>, vector<1x1x8xf32>
    %58 = vector.shape_cast %57 : vector<1x1x8xf32> to vector<1x8xf32>
    %59 = vector.broadcast %58 : vector<1x8xf32> to vector<16x8xf32>
    %60 = arith.addf %56, %59 : vector<16x8xf32>
    %61 = tpu.concatenate %39, %46, %53, %60 in 0 : vector<16x8xf32>, vector<16x8xf32>, vector<16x8xf32>, vector<16x8xf32> -> vector<64x8xf32>
    %c2_53 = arith.constant 2 : index
    %c0_54 = arith.constant 0 : index
    %c0_55 = arith.constant 0 : index
    %62 = vector.load %arg0[%c2_53, %c0_54, %c0_55] : memref<3x16x32xf32, #tpu.memory_space<vmem>>, vector<1x16x32xf32>
    %63 = vector.shape_cast %62 : vector<1x16x32xf32> to vector<16x32xf32>
    %c8 = arith.constant 8 : index
    %c0_56 = arith.constant 0 : index
    %c0_57 = arith.constant 0 : index
    %64 = vector.load %arg1[%c8, %c0_56, %c0_57] : memref<12x32x8xf32, #tpu.memory_space<vmem>>, vector<1x32x8xf32>
    %65 = vector.shape_cast %64 : vector<1x32x8xf32> to vector<32x8xf32>
    %cst_58 = arith.constant dense<0.000000e+00> : vector<16x8xf32>
    %66 = tpu.matmul %63, %65, %cst_58 {dimension_numbers = #tpu.dot_dimension_numbers<[1], [0], [0], [1], [0, 0, 1, 1], [], []>} : vector<16x32xf32>, vector<32x8xf32>, vector<16x8xf32> -> vector<16x8xf32>
    %c8_59 = arith.constant 8 : index
    %c0_60 = arith.constant 0 : index
    %c0_61 = arith.constant 0 : index
    %67 = vector.load %arg2[%c8_59, %c0_60, %c0_61] : memref<12x1x8xf32, #tpu.memory_space<vmem>>, vector<1x1x8xf32>
    %68 = vector.shape_cast %67 : vector<1x1x8xf32> to vector<1x8xf32>
    %69 = vector.broadcast %68 : vector<1x8xf32> to vector<16x8xf32>
    %70 = arith.addf %66, %69 : vector<16x8xf32>
    %c9 = arith.constant 9 : index
    %c0_62 = arith.constant 0 : index
    %c0_63 = arith.constant 0 : index
    %71 = vector.load %arg1[%c9, %c0_62, %c0_63] : memref<12x32x8xf32, #tpu.memory_space<vmem>>, vector<1x32x8xf32>
    %72 = vector.shape_cast %71 : vector<1x32x8xf32> to vector<32x8xf32>
    %cst_64 = arith.constant dense<0.000000e+00> : vector<16x8xf32>
    %73 = tpu.matmul %63, %72, %cst_64 {dimension_numbers = #tpu.dot_dimension_numbers<[1], [0], [0], [1], [0, 0, 1, 1], [], []>} : vector<16x32xf32>, vector<32x8xf32>, vector<16x8xf32> -> vector<16x8xf32>
    %c9_65 = arith.constant 9 : index
    %c0_66 = arith.constant 0 : index
    %c0_67 = arith.constant 0 : index
    %74 = vector.load %arg2[%c9_65, %c0_66, %c0_67] : memref<12x1x8xf32, #tpu.memory_space<vmem>>, vector<1x1x8xf32>
    %75 = vector.shape_cast %74 : vector<1x1x8xf32> to vector<1x8xf32>
    %76 = vector.broadcast %75 : vector<1x8xf32> to vector<16x8xf32>
    %77 = arith.addf %73, %76 : vector<16x8xf32>
    %c10 = arith.constant 10 : index
    %c0_68 = arith.constant 0 : index
    %c0_69 = arith.constant 0 : index
    %78 = vector.load %arg1[%c10, %c0_68, %c0_69] : memref<12x32x8xf32, #tpu.memory_space<vmem>>, vector<1x32x8xf32>
    %79 = vector.shape_cast %78 : vector<1x32x8xf32> to vector<32x8xf32>
    %cst_70 = arith.constant dense<0.000000e+00> : vector<16x8xf32>
    %80 = tpu.matmul %63, %79, %cst_70 {dimension_numbers = #tpu.dot_dimension_numbers<[1], [0], [0], [1], [0, 0, 1, 1], [], []>} : vector<16x32xf32>, vector<32x8xf32>, vector<16x8xf32> -> vector<16x8xf32>
    %c10_71 = arith.constant 10 : index
    %c0_72 = arith.constant 0 : index
    %c0_73 = arith.constant 0 : index
    %81 = vector.load %arg2[%c10_71, %c0_72, %c0_73] : memref<12x1x8xf32, #tpu.memory_space<vmem>>, vector<1x1x8xf32>
    %82 = vector.shape_cast %81 : vector<1x1x8xf32> to vector<1x8xf32>
    %83 = vector.broadcast %82 : vector<1x8xf32> to vector<16x8xf32>
    %84 = arith.addf %80, %83 : vector<16x8xf32>
    %c11 = arith.constant 11 : index
    %c0_74 = arith.constant 0 : index
    %c0_75 = arith.constant 0 : index
    %85 = vector.load %arg1[%c11, %c0_74, %c0_75] : memref<12x32x8xf32, #tpu.memory_space<vmem>>, vector<1x32x8xf32>
    %86 = vector.shape_cast %85 : vector<1x32x8xf32> to vector<32x8xf32>
    %cst_76 = arith.constant dense<0.000000e+00> : vector<16x8xf32>
    %87 = tpu.matmul %63, %86, %cst_76 {dimension_numbers = #tpu.dot_dimension_numbers<[1], [0], [0], [1], [0, 0, 1, 1], [], []>} : vector<16x32xf32>, vector<32x8xf32>, vector<16x8xf32> -> vector<16x8xf32>
    %c11_77 = arith.constant 11 : index
    %c0_78 = arith.constant 0 : index
    %c0_79 = arith.constant 0 : index
    %88 = vector.load %arg2[%c11_77, %c0_78, %c0_79] : memref<12x1x8xf32, #tpu.memory_space<vmem>>, vector<1x1x8xf32>
    %89 = vector.shape_cast %88 : vector<1x1x8xf32> to vector<1x8xf32>
    %90 = vector.broadcast %89 : vector<1x8xf32> to vector<16x8xf32>
    %91 = arith.addf %87, %90 : vector<16x8xf32>
    %92 = tpu.concatenate %70, %77, %84, %91 in 0 : vector<16x8xf32>, vector<16x8xf32>, vector<16x8xf32>, vector<16x8xf32> -> vector<64x8xf32>
    %c0_80 = arith.constant 0 : index
    %c0_81 = arith.constant 0 : index
    %93 = vector.load %arg5[%c0_80, %c0_81] : memref<64x8xf32, #tpu.memory_space<vmem>>, vector<64x8xf32>
    %94 = arith.mulf %93, %93 : vector<64x8xf32>
    %cst_82 = arith.constant dense<0.000000e+00> : vector<64xf32>
    %95 = vector.multi_reduction <add>, %94, %cst_82 [1] : vector<64x8xf32> to vector<64xf32>
    %96 = vector.shape_cast %95 : vector<64xf32> to vector<64x1xf32>
    %cst_83 = arith.constant dense<0.000000e+00> : vector<64x64xf32>
    %97 = tpu.matmul %93, %92, %cst_83 {dimension_numbers = #tpu.dot_dimension_numbers<[1], [1], [0], [0], [0, 0, 1, 0], [], []>} : vector<64x8xf32>, vector<64x8xf32>, vector<64x64xf32> -> vector<64x64xf32>
    %cst_84 = arith.constant 2.000000e+00 : f32
    %98 = vector.broadcast %cst_84 : f32 to vector<64x64xf32>
    %99 = arith.mulf %98, %97 : vector<64x64xf32>
    %100 = vector.broadcast %96 : vector<64x1xf32> to vector<64x64xf32>
    %101 = arith.subf %100, %99 : vector<64x64xf32>
    %102 = tpu.iota {dimensions = array<i32: 0>} : vector<64x64xi32>
    %103 = arith.sitofp %102 : vector<64x64xi32> to vector<64x64xf32>
    %cst_85 = arith.constant dense<0x7F800000> : vector<64xf32>
    %104 = vector.multi_reduction <minimumf>, %101, %cst_85 [0] : vector<64x64xf32> to vector<64xf32>
    %105 = vector.shape_cast %104 : vector<64xf32> to vector<1x64xf32>
    %106 = vector.broadcast %105 : vector<1x64xf32> to vector<64x64xf32>
    %107 = arith.cmpf oeq, %101, %106 : vector<64x64xf32>
    %cst_86 = arith.constant 6.400000e+01 : f32
    %108 = vector.broadcast %cst_86 : f32 to vector<64x64xf32>
    %109 = arith.select %107, %103, %108 : vector<64x64xi1>, vector<64x64xf32>
    %cst_87 = arith.constant dense<0x7F800000> : vector<64xf32>
    %110 = vector.multi_reduction <minimumf>, %109, %cst_87 [0] : vector<64x64xf32> to vector<64xf32>
    %111 = vector.shape_cast %110 : vector<64xf32> to vector<1x64xf32>
    %112 = arith.fptosi %111 : vector<1x64xf32> to vector<1x64xi32>
    %c0_88 = arith.constant 0 : index
    %c0_89 = arith.constant 0 : index
    %113 = vector.load %arg6[%c0_88, %c0_89] : memref<1x64xi32, #tpu.memory_space<vmem>>, vector<1x64xi32>
    %c0_i32 = arith.constant 0 : i32
    %114 = vector.broadcast %c0_i32 : i32 to vector<1x64xi32>
    %115 = arith.cmpi sge, %113, %114 : vector<1x64xi32>
    %116 = arith.select %115, %113, %112 : vector<1x64xi1>, vector<1x64xi32>
    %c0_90 = arith.constant 0 : index
    %c0_91 = arith.constant 0 : index
    %117 = vector.load %arg9[%c0_90, %c0_91] : memref<1x64xi32, #tpu.memory_space<vmem>>, vector<1x64xi32>
    tpu.vector_store %arg9[%c0_90, %c0_91], %116 {strides = array<i32>} : memref<1x64xi32, #tpu.memory_space<vmem>>, vector<1x64xi32>,
    %118 = vector.broadcast %116 : vector<1x64xi32> to vector<64x64xi32>
    %119 = arith.cmpi eq, %102, %118 : vector<64x64xi32>
    %120 = arith.extui %119 : vector<64x64xi1> to vector<64x64xi32>
    %121 = arith.sitofp %120 : vector<64x64xi32> to vector<64x64xf32>
    %cst_92 = arith.constant dense<0.000000e+00> : vector<64xf32>
    %122 = vector.multi_reduction <add>, %121, %cst_92 [1] : vector<64x64xf32> to vector<64xf32>
    %123 = vector.shape_cast %122 : vector<64xf32> to vector<64x1xf32>
    %124 = arith.mulf %123, %96 : vector<64x1xf32>
    %cst_93 = arith.constant dense<0.000000e+00> : vector<1xf32>
    %125 = vector.multi_reduction <add>, %124, %cst_93 [0] : vector<64x1xf32> to vector<1xf32>
    %126 = vector.shape_cast %125 : vector<1xf32> to vector<1x1xf32>
    %127 = arith.mulf %121, %97 : vector<64x64xf32>
    %cst_94 = arith.constant dense<0.000000e+00> : vector<64xf32>
    %128 = vector.multi_reduction <add>, %127, %cst_94 [1] : vector<64x64xf32> to vector<64xf32>
    %129 = vector.shape_cast %128 : vector<64xf32> to vector<64x1xf32>
    %cst_95 = arith.constant dense<0.000000e+00> : vector<1xf32>
    %130 = vector.multi_reduction <add>, %129, %cst_95 [0] : vector<64x1xf32> to vector<1xf32>
    %131 = vector.shape_cast %130 : vector<1xf32> to vector<1x1xf32>
    %132 = arith.mulf %92, %92 : vector<64x8xf32>
    %cst_96 = arith.constant dense<0.000000e+00> : vector<64xf32>
    %133 = vector.multi_reduction <add>, %132, %cst_96 [1] : vector<64x8xf32> to vector<64xf32>
    %134 = vector.shape_cast %133 : vector<64xf32> to vector<64x1xf32>
    %cst_97 = arith.constant dense<0.000000e+00> : vector<1xf32>
    %135 = vector.multi_reduction <add>, %134, %cst_97 [0] : vector<64x1xf32> to vector<1xf32>
    %136 = vector.shape_cast %135 : vector<1xf32> to vector<1x1xf32>
    %cst_98 = arith.constant 2.000000e+00 : f32
    %137 = vector.broadcast %cst_98 : f32 to vector<1x1xf32>
    %138 = arith.mulf %137, %131 : vector<1x1xf32>
    %139 = arith.subf %126, %138 : vector<1x1xf32>
    %140 = arith.addf %139, %136 : vector<1x1xf32>
    %cst_99 = arith.constant 1.250000e+00 : f32
    %141 = vector.broadcast %cst_99 : f32 to vector<1x1xf32>
    %142 = arith.mulf %141, %140 : vector<1x1xf32>
    %cst_100 = arith.constant 0.001953125 : f32
    %143 = vector.broadcast %cst_100 : f32 to vector<1x1xf32>
    %144 = arith.mulf %142, %143 : vector<1x1xf32>
    %cst_101 = arith.constant 1.562500e-02 : f32
    %145 = vector.broadcast %cst_101 : f32 to vector<64x1xf32>
    %146 = arith.mulf %123, %145 : vector<64x1xf32>
    %cst_102 = arith.constant 1.000000e-10 : f32
    %147 = vector.broadcast %cst_102 : f32 to vector<64x1xf32>
    %148 = arith.addf %146, %147 : vector<64x1xf32>
    %149 = math.log %148 : vector<64x1xf32>
    %150 = arith.mulf %146, %149 : vector<64x1xf32>
    %cst_103 = arith.constant dense<0.000000e+00> : vector<1xf32>
    %151 = vector.multi_reduction <add>, %150, %cst_103 [0] : vector<64x1xf32> to vector<1xf32>
    %152 = vector.shape_cast %151 : vector<1xf32> to vector<1x1xf32>
    %cst_104 = arith.constant 0.000000e+00 : f32
    %153 = vector.broadcast %cst_104 : f32 to vector<1x1xf32>
    %154 = arith.subf %153, %152 : vector<1x1xf32>
    %155 = math.exp %154 : vector<1x1xf32>
    %156 = tpu.iota {dimensions = array<i32: 1>} : vector<1x2xi32>
    %c0_i32_105 = arith.constant 0 : i32
    %157 = vector.broadcast %c0_i32_105 : i32 to vector<1x2xi32>
    %158 = arith.cmpi eq, %156, %157 : vector<1x2xi32>
    %159 = vector.shape_cast %144 : vector<1x1xf32> to vector<1x1xf32>
    %160 = vector.broadcast %159 : vector<1x1xf32> to vector<1x2xf32>
    %161 = vector.shape_cast %155 : vector<1x1xf32> to vector<1x1xf32>
    %162 = vector.broadcast %161 : vector<1x1xf32> to vector<1x2xf32>
    %163 = arith.select %158, %160, %162 : vector<1x2xi1>, vector<1x2xf32>
    %c0_106 = arith.constant 0 : index
    %c0_107 = arith.constant 0 : index
    %164 = vector.load %arg10[%c0_106, %c0_107] : memref<1x2xf32, #tpu.memory_space<vmem>>, vector<1x2xf32>
    tpu.vector_store %arg10[%c0_106, %c0_107], %163 {strides = array<i32>} : memref<1x2xf32, #tpu.memory_space<vmem>>, vector<1x2xf32>,
    %cst_108 = arith.constant dense<0.000000e+00> : vector<64x64xf32>
    %165 = tpu.matmul %30, %61, %cst_108 {dimension_numbers = #tpu.dot_dimension_numbers<[1], [1], [0], [0], [0, 0, 1, 0], [], []>} : vector<64x8xf32>, vector<64x8xf32>, vector<64x64xf32> -> vector<64x64xf32>
    %166 = tpu.iota {dimensions = array<i32: 0>} : vector<64x64xi32>
    %167 = arith.sitofp %166 : vector<64x64xi32> to vector<64x64xf32>
    %168 = tpu.iota {dimensions = array<i32: 1>} : vector<64x64xi32>
    %169 = arith.sitofp %168 : vector<64x64xi32> to vector<64x64xf32>
    %cst_109 = arith.constant 5.000000e-01 : f32
    %170 = vector.broadcast %cst_109 : f32 to vector<64x64xf32>
    %171 = arith.addf %167, %170 : vector<64x64xf32>
    %cst_110 = arith.constant 1.250000e-01 : f32
    %172 = vector.broadcast %cst_110 : f32 to vector<64x64xf32>
    %173 = arith.mulf %171, %172 : vector<64x64xf32>
    %174 = math.floor %173 : vector<64x64xf32>
    %cst_111 = arith.constant 5.000000e-01 : f32
    %175 = vector.broadcast %cst_111 : f32 to vector<64x64xf32>
    %176 = arith.addf %169, %175 : vector<64x64xf32>
    %cst_112 = arith.constant 1.250000e-01 : f32
    %177 = vector.broadcast %cst_112 : f32 to vector<64x64xf32>
    %178 = arith.mulf %176, %177 : vector<64x64xf32>
    %179 = math.floor %178 : vector<64x64xf32>
    %180 = arith.cmpf oeq, %174, %179 : vector<64x64xf32>
    %cst_113 = arith.constant -1.000000e+30 : f32
    %181 = vector.broadcast %cst_113 : f32 to vector<64x64xf32>
    %182 = arith.select %180, %165, %181 : vector<64x64xi1>, vector<64x64xf32>
    %cst_114 = arith.constant dense<0xFF800000> : vector<64xf32>
    %183 = vector.multi_reduction <maximumf>, %182, %cst_114 [1] : vector<64x64xf32> to vector<64xf32>
    %184 = vector.shape_cast %183 : vector<64xf32> to vector<64x1xf32>
    %185 = vector.broadcast %184 : vector<64x1xf32> to vector<64x64xf32>
    %186 = arith.subf %182, %185 : vector<64x64xf32>
    %187 = math.exp %186 : vector<64x64xf32>
    %cst_115 = arith.constant dense<0.000000e+00> : vector<64xf32>
    %188 = vector.multi_reduction <add>, %187, %cst_115 [1] : vector<64x64xf32> to vector<64xf32>
    %189 = vector.shape_cast %188 : vector<64xf32> to vector<64x1xf32>
    %190 = vector.broadcast %189 : vector<64x1xf32> to vector<64x64xf32>
    %191 = arith.divf %187, %190 : vector<64x64xf32>
    %c0_116 = arith.constant 0 : index
    %c0_117 = arith.constant 0 : index
    %192 = vector.load %arg8[%c0_116, %c0_117] : memref<64x64xf32, #tpu.memory_space<vmem>>, vector<64x64xf32>
    tpu.vector_store %arg8[%c0_116, %c0_117], %191 {strides = array<i32>} : memref<64x64xf32, #tpu.memory_space<vmem>>, vector<64x64xf32>,
    %cst_118 = arith.constant dense<0.000000e+00> : vector<64x64xf32>
    %193 = tpu.matmul %191, %121, %cst_118 {dimension_numbers = #tpu.dot_dimension_numbers<[1], [1], [0], [0], [0, 0, 1, 0], [], []>} : vector<64x64xf32>, vector<64x64xf32>, vector<64x64xf32> -> vector<64x64xf32>
    %cst_119 = arith.constant dense<0.000000e+00> : vector<64x8xf32>
    %194 = tpu.matmul %193, %93, %cst_119 {dimension_numbers = #tpu.dot_dimension_numbers<[1], [0], [0], [1], [0, 0, 1, 1], [], []>} : vector<64x64xf32>, vector<64x8xf32>, vector<64x8xf32> -> vector<64x8xf32>
    %c0_120 = arith.constant 0 : index
    %c0_121 = arith.constant 0 : index
    %c0_122 = arith.constant 0 : index
    %195 = vector.load %arg4[%c0_120, %c0_121, %c0_122] : memref<3x1x32xf32, #tpu.memory_space<vmem>>, vector<1x1x32xf32>
    %196 = vector.shape_cast %195 : vector<1x1x32xf32> to vector<1x32xf32>
    %197 = vector.extract_strided_slice %194 {offsets = [0, 0], sizes = [16, 8], strides = [1, 1]} : vector<64x8xf32> to vector<16x8xf32>
    %c0_123 = arith.constant 0 : index
    %c0_124 = arith.constant 0 : index
    %c0_125 = arith.constant 0 : index
    %198 = vector.load %arg3[%c0_123, %c0_124, %c0_125] : memref<4x8x32xf32, #tpu.memory_space<vmem>>, vector<1x8x32xf32>
    %199 = vector.shape_cast %198 : vector<1x8x32xf32> to vector<8x32xf32>
    %cst_126 = arith.constant dense<0.000000e+00> : vector<16x32xf32>
    %200 = tpu.matmul %197, %199, %cst_126 {dimension_numbers = #tpu.dot_dimension_numbers<[1], [0], [0], [1], [0, 0, 1, 1], [], []>} : vector<16x8xf32>, vector<8x32xf32>, vector<16x32xf32> -> vector<16x32xf32>
    %201 = vector.broadcast %196 : vector<1x32xf32> to vector<16x32xf32>
    %202 = arith.addf %201, %200 : vector<16x32xf32>
    %203 = vector.extract_strided_slice %194 {offsets = [16, 0], sizes = [16, 8], strides = [1, 1]} : vector<64x8xf32> to vector<16x8xf32>
    %c1_127 = arith.constant 1 : index
    %c0_128 = arith.constant 0 : index
    %c0_129 = arith.constant 0 : index
    %204 = vector.load %arg3[%c1_127, %c0_128, %c0_129] : memref<4x8x32xf32, #tpu.memory_space<vmem>>, vector<1x8x32xf32>
    %205 = vector.shape_cast %204 : vector<1x8x32xf32> to vector<8x32xf32>
    %cst_130 = arith.constant dense<0.000000e+00> : vector<16x32xf32>
    %206 = tpu.matmul %203, %205, %cst_130 {dimension_numbers = #tpu.dot_dimension_numbers<[1], [0], [0], [1], [0, 0, 1, 1], [], []>} : vector<16x8xf32>, vector<8x32xf32>, vector<16x32xf32> -> vector<16x32xf32>
    %207 = arith.addf %202, %206 : vector<16x32xf32>
    %208 = vector.extract_strided_slice %194 {offsets = [32, 0], sizes = [16, 8], strides = [1, 1]} : vector<64x8xf32> to vector<16x8xf32>
    %c2_131 = arith.constant 2 : index
    %c0_132 = arith.constant 0 : index
    %c0_133 = arith.constant 0 : index
    %209 = vector.load %arg3[%c2_131, %c0_132, %c0_133] : memref<4x8x32xf32, #tpu.memory_space<vmem>>, vector<1x8x32xf32>
    %210 = vector.shape_cast %209 : vector<1x8x32xf32> to vector<8x32xf32>
    %cst_134 = arith.constant dense<0.000000e+00> : vector<16x32xf32>
    %211 = tpu.matmul %208, %210, %cst_134 {dimension_numbers = #tpu.dot_dimension_numbers<[1], [0], [0], [1], [0, 0, 1, 1], [], []>} : vector<16x8xf32>, vector<8x32xf32>, vector<16x32xf32> -> vector<16x32xf32>
    %212 = arith.addf %207, %211 : vector<16x32xf32>
    %213 = vector.extract_strided_slice %194 {offsets = [48, 0], sizes = [16, 8], strides = [1, 1]} : vector<64x8xf32> to vector<16x8xf32>
    %c3_135 = arith.constant 3 : index
    %c0_136 = arith.constant 0 : index
    %c0_137 = arith.constant 0 : index
    %214 = vector.load %arg3[%c3_135, %c0_136, %c0_137] : memref<4x8x32xf32, #tpu.memory_space<vmem>>, vector<1x8x32xf32>
    %215 = vector.shape_cast %214 : vector<1x8x32xf32> to vector<8x32xf32>
    %cst_138 = arith.constant dense<0.000000e+00> : vector<16x32xf32>
    %216 = tpu.matmul %213, %215, %cst_138 {dimension_numbers = #tpu.dot_dimension_numbers<[1], [0], [0], [1], [0, 0, 1, 1], [], []>} : vector<16x8xf32>, vector<8x32xf32>, vector<16x32xf32> -> vector<16x32xf32>
    %217 = arith.addf %212, %216 : vector<16x32xf32>
    %cst_139 = arith.constant dense<0.000000e+00> : vector<16xf32>
    %218 = vector.multi_reduction <add>, %217, %cst_139 [1] : vector<16x32xf32> to vector<16xf32>
    %219 = vector.shape_cast %218 : vector<16xf32> to vector<16x1xf32>
    %cst_140 = arith.constant 3.200000e+01 : f32
    %220 = vector.broadcast %cst_140 : f32 to vector<16x1xf32>
    %221 = arith.divf %219, %220 : vector<16x1xf32>
    %222 = vector.broadcast %221 : vector<16x1xf32> to vector<16x32xf32>
    %223 = arith.subf %217, %222 : vector<16x32xf32>
    %224 = arith.mulf %223, %223 : vector<16x32xf32>
    %cst_141 = arith.constant dense<0.000000e+00> : vector<16xf32>
    %225 = vector.multi_reduction <add>, %224, %cst_141 [1] : vector<16x32xf32> to vector<16xf32>
    %226 = vector.shape_cast %225 : vector<16xf32> to vector<16x1xf32>
    %cst_142 = arith.constant 3.200000e+01 : f32
    %227 = vector.broadcast %cst_142 : f32 to vector<16x1xf32>
    %228 = arith.divf %226, %227 : vector<16x1xf32>
    %229 = vector.broadcast %221 : vector<16x1xf32> to vector<16x32xf32>
    %230 = arith.subf %217, %229 : vector<16x32xf32>
    %cst_143 = arith.constant 9.99999974E-6 : f32
    %231 = vector.broadcast %cst_143 : f32 to vector<16x1xf32>
    %232 = arith.addf %228, %231 : vector<16x1xf32>
    %233 = math.rsqrt %232 : vector<16x1xf32>
    %234 = vector.broadcast %233 : vector<16x1xf32> to vector<16x32xf32>
    %235 = arith.mulf %230, %234 : vector<16x32xf32>
    %c1_144 = arith.constant 1 : index
    %c0_145 = arith.constant 0 : index
    %c0_146 = arith.constant 0 : index
    %236 = vector.load %arg4[%c1_144, %c0_145, %c0_146] : memref<3x1x32xf32, #tpu.memory_space<vmem>>, vector<1x1x32xf32>
    %237 = vector.shape_cast %236 : vector<1x1x32xf32> to vector<1x32xf32>
    %238 = vector.broadcast %237 : vector<1x32xf32> to vector<16x32xf32>
    %239 = arith.mulf %235, %238 : vector<16x32xf32>
    %c2_147 = arith.constant 2 : index
    %c0_148 = arith.constant 0 : index
    %c0_149 = arith.constant 0 : index
    %240 = vector.load %arg4[%c2_147, %c0_148, %c0_149] : memref<3x1x32xf32, #tpu.memory_space<vmem>>, vector<1x1x32xf32>
    %241 = vector.shape_cast %240 : vector<1x1x32xf32> to vector<1x32xf32>
    %242 = vector.broadcast %241 : vector<1x32xf32> to vector<16x32xf32>
    %243 = arith.addf %239, %242 : vector<16x32xf32>
    %c0_150 = arith.constant 0 : index
    %c0_151 = arith.constant 0 : index
    %244 = vector.load %arg7[%c0_150, %c0_151] : memref<16x32xf32, #tpu.memory_space<vmem>>, vector<16x32xf32>
    tpu.vector_store %arg7[%c0_150, %c0_151], %243 {strides = array<i32>} : memref<16x32xf32, #tpu.memory_space<vmem>>, vector<16x32xf32>,
    return
  }
}

</mosaic_0001>

<llo_original>
// kernel: multi_head_attention_forward.1
$region0: #{multi_head_attention_forward.1}
  #allocation0 [shape = 'u32[]', space=smem, size = 0x4, offset = 0x4, fixed_abs, tag = 'smem constant byte address 0x4 - core index']
  #allocation1 [shape = 'u32[144,128]{1,0:T(1,128)}', space=vmem, size = 0x12000, scoped, tag = 'internal scratch']
  %s0 = inlined_call_operand.vmem [shape: f32[3,16,32], index: 0, kind: input, shape index: {}]
  %s1 = inlined_call_operand.vmem [shape: f32[12,32,8], index: 1, kind: input, shape index: {}]
  %s2 = inlined_call_operand.vmem [shape: f32[12,1,8], index: 2, kind: input, shape index: {}]
  %s3 = inlined_call_operand.vmem [shape: f32[4,8,32], index: 3, kind: input, shape index: {}]
  %s4 = inlined_call_operand.vmem [shape: f32[3,1,32], index: 4, kind: input, shape index: {}]
  %s5 = inlined_call_operand.vmem [shape: f32[64,8], index: 5, kind: input, shape index: {}]
  %s6 = inlined_call_operand.vmem [shape: s32[1,64], index: 6, kind: input, shape index: {}]
  %s7 = inlined_call_operand.hbm [shape: f32[16,32], index: 7, kind: output, shape index: {0}]
  %s8 = inlined_call_operand.vmem [shape: f32[64,64], index: 8, kind: output, shape index: {1}]
  %s9 = inlined_call_operand.hbm [shape: s32[1,64], index: 9, kind: output, shape index: {2}]
  %s10 = inlined_call_operand.vmem [shape: f32[1,2], index: 10, kind: output, shape index: {3}]
  %11 = xla_tuple %s7, %s8, %s9, %s10
  %s12 = sld [smem:[#allocation0]]
  $region62: #{multi_head_attention_forward.1} parent=0
    _
  %s14 = ssub.s32 1, %s12
  %s15 = scalar_select 0, %s14, %s12
  $region1: #{multi_head_attention_forward.1} parent=0
    #allocation2 [shape = 'u8[8192]{0}', space=vmem, size = 0x2000, scoped, tag = 'output window, operand 0, single buffered']
    #allocation3 [shape = 's32[1]{0}', space=sflag, size = 0x4, scoped, tag = 'scoped memory for multi_head_attention_forward.1']
    #allocation4 [shape = 'u8[512]{0}', space=vmem, size = 0x400, scoped, tag = 'output window, operand 2, single buffered']
    #allocation5 [shape = 's32[1]{0}', space=sflag, size = 0x4, scoped, tag = 'scoped memory for multi_head_attention_forward.1']
    %16 = vsyncpa [#allocation3], 0
    %17 = vsyncpa [#allocation5], 0
    // Predicated region
    $region2: #{multi_head_attention_forward.1} parent=1 // pred_check
      _
    $region3: #{multi_head_attention_forward.1} parent=1 // pred_check_branch
      %19 = sbr.rel (0) target = $region5
    $region4: #{multi_head_attention_forward.1} parent=1 // pred_region
      _
    $region5: #{multi_head_attention_forward.1} parent=1 // pred_fallthru
      _
    // Predicated region
    $region6: #{multi_head_attention_forward.1} parent=1 // pred_check
      _
    $region7: #{multi_head_attention_forward.1} parent=1 // pred_check_branch
      %21 = sbr.rel (0) target = $region9
    $region8: #{multi_head_attention_forward.1} parent=1 // pred_region
      _
    $region9: #{multi_head_attention_forward.1} parent=1 // pred_fallthru
      _
    // Predicated region
    $region10: #{multi_head_attention_forward.1} parent=1 // pred_check
      _
    $region11: #{multi_head_attention_forward.1} parent=1 // pred_check_branch
      %23 = sbr.rel (0) target = $region13
    $region12: #{multi_head_attention_forward.1} parent=1 // pred_region
      _
    $region13: #{multi_head_attention_forward.1} parent=1 // pred_fallthru
      _
    // Predicated region
    $region14: #{multi_head_attention_forward.1} parent=1 // pred_check
      _
    $region15: #{multi_head_attention_forward.1} parent=1 // pred_check_branch
      %25 = sbr.rel (0) target = $region17
    $region16: #{multi_head_attention_forward.1} parent=1 // pred_region
      _
    $region17: #{multi_head_attention_forward.1} parent=1 // pred_fallthru
      _
    // Predicated region
    $region18: #{multi_head_attention_forward.1} parent=1 // pred_check
      _
    $region19: #{multi_head_attention_forward.1} parent=1 // pred_check_branch
      %27 = sbr.rel (0) target = $region21
    $region20: #{multi_head_attention_forward.1} parent=1 // pred_region
      _
    $region21: #{multi_head_attention_forward.1} parent=1 // pred_fallthru
      _
    // Predicated region
    $region22: #{multi_head_attention_forward.1} parent=1 // pred_check
      _
    $region23: #{multi_head_attention_forward.1} parent=1 // pred_check_branch
      %29 = sbr.rel (0) target = $region25
    $region24: #{multi_head_attention_forward.1} parent=1 // pred_region
      _
    $region25: #{multi_head_attention_forward.1} parent=1 // pred_fallthru
      _
    // Predicated region
    $region26: #{multi_head_attention_forward.1} parent=1 // pred_check
      _
    $region27: #{multi_head_attention_forward.1} parent=1 // pred_check_branch
      %31 = sbr.rel (0) target = $region29
    $region28: #{multi_head_attention_forward.1} parent=1 // pred_region
      _
    $region29: #{multi_head_attention_forward.1} parent=1 // pred_fallthru
      _
    %v32 = vld [vmem:[%s0] sm:$0xff]
    %v33 = vld [vmem:[%s0 + $0x8] sm:$0xff]
    %v34 = vld [vmem:[%s1] sm:$0xff]
    %v35 = vld [vmem:[%s1 + $0x8] sm:$0xff]
    %v36 = vld [vmem:[%s1 + $0x10] sm:$0xff]
    %v37 = vld [vmem:[%s1 + $0x18] sm:$0xff]
    %v38 = vld [vmem:[%s2] sm:$0x1]
    %v40 = vlaneseq
    %v41 = vshrl.u32 %v40, 7
    %v42 = vsub.s32 0, %v41
    %v43 = vrot.slane %v38, %v42
    %vm45 = vcmask 261120
    %v47 = vsel %vm45, %v32, 0
    %v50 = vsel %vm45, %v33, 0
    %52 = vmatprep.subr.mxu0 0.0
    %53 = vmatpush1.msra.mxu0 0.0
    %54 = vmatprep.subr.mxu0 0.0
    %55 = vmatpush1.msra.mxu0 0.0
    %56 = vmatprep.subr.mxu0 0.0
    %57 = vmatpush1.msra.mxu0 0.0
    %58 = vmatprep.subr.mxu0 0.0
    %59 = vmatpush1.msra.mxu0 0.0
    %60 = vmatprep.subr.mxu0 0.0
    %61 = vmatpush1.msra.mxu0 0.0
    %62 = vmatprep.subr.mxu0 0.0
    %63 = vmatpush1.msra.mxu0 0.0
    %64 = vmatprep.subr.mxu0 0.0
    %65 = vmatpush1.msra.mxu0 0.0
    %66 = vmatprep.subr.mxu0 0.0
    %67 = vmatpush1.msra.mxu0 0.0
    %68 = vmatprep.subr.mxu0 0.0
    %69 = vmatpush1.msra.mxu0 0.0
    %70 = vmatprep.subr.mxu0 0.0
    %71 = vmatpush1.msra.mxu0 0.0
    %72 = vmatprep.subr.mxu0 0.0
    %73 = vmatpush1.msra.mxu0 0.0
    %74 = vmatprep.subr.mxu0 0.0
    %75 = vmatpush1.msra.mxu0 0.0
    %76 = vmatprep.subr.mxu0 0.0
    %77 = vmatpush1.msra.mxu0 %v37
    %78 = vmatprep.subr.mxu0 0.0
    %79 = vmatpush1.msra.mxu0 %v36
    %80 = vmatprep.subr.mxu0 0.0
    %81 = vmatpush1.msra.mxu0 %v35
    %82 = vmatprep.subr.mxu0 0.0
    %83 = vmatpush1.msra.mxu0 %v34
    %84 = vmatprep.subr.mxu0 0.0
    %85 = vmatpush2.msra.mxu0 0.0
    %86 = vmatprep.subr.mxu0 0.0
    %87 = vmatpush2.msra.mxu0 0.0
    %88 = vmatprep.subr.mxu0 0.0
    %89 = vmatpush2.msra.mxu0 0.0
    %90 = vmatprep.subr.mxu0 0.0
    %91 = vmatpush2.msra.mxu0 0.0
    %92 = vmatprep.subr.mxu0 0.0
    %93 = vmatpush2.msra.mxu0 0.0
    %94 = vmatprep.subr.mxu0 0.0
    %95 = vmatpush2.msra.mxu0 0.0
    %96 = vmatprep.subr.mxu0 0.0
    %97 = vmatpush2.msra.mxu0 0.0
    %98 = vmatprep.subr.mxu0 0.0
    %99 = vmatpush2.msra.mxu0 0.0
    %100 = vmatprep.subr.mxu0 0.0
    %101 = vmatpush2.msra.mxu0 0.0
    %102 = vmatprep.subr.mxu0 0.0
    %103 = vmatpush2.msra.mxu0 0.0
    %104 = vmatprep.subr.mxu0 0.0
    %105 = vmatpush2.msra.mxu0 0.0
    %106 = vmatprep.subr.mxu0 0.0
    %107 = vmatpush2.msra.mxu0 0.0
    %108 = vmatprep.subr.mxu0 0.0
    %109 = vmatpush2.msra.mxu0 0.0
    %110 = vmatprep.subr.mxu0 0.0
    %111 = vmatpush2.msra.mxu0 0.0
    %112 = vmatprep.subr.mxu0 0.0
    %113 = vmatpush2.msra.mxu0 0.0
    %114 = vmatprep.subr.mxu0 0.0
    %115 = vmatpush2.msra.mxu0 0.0
    %116 = vmatprep.mubr.f32.mxu0 0.0
    %117 = vmatmul.mubr.f32.gmra.mxu0 %v47
    %v118 = vpop.f32.mrf.mxu0
    %v119 = vadd.f32 %v43, %v118
    %v120 = vpop.f32.mrf.mxu0
    %121 = vmatprep.mubr.f32.mxu0 0.0
    %122 = vmatmul.mubr.f32.gmra.mxu0 %v50
    %v123 = vpop.f32.mrf.mxu0
    %v124 = vadd.f32 %v43, %v123
    %v125 = vpop.f32.mrf.mxu0
    %126 = vdwg.mxu0
    %s127 = scalar_lea.vmem %s1, 32
    %v128 = vld [vmem:[%s127] sm:$0xff]
    %v129 = vld [vmem:[%s127 + $0x8] sm:$0xff]
    %v130 = vld [vmem:[%s127 + $0x10] sm:$0xff]
    %v131 = vld [vmem:[%s127 + $0x18] sm:$0xff]
    %s132 = scalar_lea.vmem %s2, 1
    %v133 = vld [vmem:[%s132] sm:$0x1]
    %v135 = vlaneseq
    %v136 = vshrl.u32 %v135, 7
    %v137 = vsub.s32 0, %v136
    %v138 = vrot.slane %v133, %v137
    %140 = vmatprep.subr.mxu0 0.0
    %141 = vmatpush1.msra.mxu0 0.0
    %142 = vmatprep.subr.mxu0 0.0
    %143 = vmatpush1.msra.mxu0 0.0
    %144 = vmatprep.subr.mxu0 0.0
    %145 = vmatpush1.msra.mxu0 0.0
    %146 = vmatprep.subr.mxu0 0.0
    %147 = vmatpush1.msra.mxu0 0.0
    %148 = vmatprep.subr.mxu0 0.0
    %149 = vmatpush1.msra.mxu0 0.0
    %150 = vmatprep.subr.mxu0 0.0
    %151 = vmatpush1.msra.mxu0 0.0
    %152 = vmatprep.subr.mxu0 0.0
    %153 = vmatpush1.msra.mxu0 0.0
    %154 = vmatprep.subr.mxu0 0.0
    %155 = vmatpush1.msra.mxu0 0.0
    %156 = vmatprep.subr.mxu0 0.0
    %157 = vmatpush1.msra.mxu0 0.0
    %158 = vmatprep.subr.mxu0 0.0
    %159 = vmatpush1.msra.mxu0 0.0
    %160 = vmatprep.subr.mxu0 0.0
    %161 = vmatpush1.msra.mxu0 0.0
    %162 = vmatprep.subr.mxu0 0.0
    %163 = vmatpush1.msra.mxu0 0.0
    %164 = vmatprep.subr.mxu0 0.0
    %165 = vmatpush1.msra.mxu0 %v131
    %166 = vmatprep.subr.mxu0 0.0
    %167 = vmatpush1.msra.mxu0 %v130
    %168 = vmatprep.subr.mxu0 0.0
    %169 = vmatpush1.msra.mxu0 %v129
    %170 = vmatprep.subr.mxu0 0.0
    %171 = vmatpush1.msra.mxu0 %v128
    %172 = vmatprep.subr.mxu0 0.0
    %173 = vmatpush2.msra.mxu0 0.0
    %174 = vmatprep.subr.mxu0 0.0
    %175 = vmatpush2.msra.mxu0 0.0
    %176 = vmatprep.subr.mxu0 0.0
    %177 = vmatpush2.msra.mxu0 0.0
    %178 = vmatprep.subr.mxu0 0.0
    %179 = vmatpush2.msra.mxu0 0.0
    %180 = vmatprep.subr.mxu0 0.0
    %181 = vmatpush2.msra.mxu0 0.0
    %182 = vmatprep.subr.mxu0 0.0
    %183 = vmatpush2.msra.mxu0 0.0
    %184 = vmatprep.subr.mxu0 0.0
    %185 = vmatpush2.msra.mxu0 0.0
    %186 = vmatprep.subr.mxu0 0.0
    %187 = vmatpush2.msra.mxu0 0.0
    %188 = vmatprep.subr.mxu0 0.0
    %189 = vmatpush2.msra.mxu0 0.0
    %190 = vmatprep.subr.mxu0 0.0
    %191 = vmatpush2.msra.mxu0 0.0
    %192 = vmatprep.subr.mxu0 0.0
    %193 = vmatpush2.msra.mxu0 0.0
    %194 = vmatprep.subr.mxu0 0.0
    %195 = vmatpush2.msra.mxu0 0.0
    %196 = vmatprep.subr.mxu0 0.0
    %197 = vmatpush2.msra.mxu0 0.0
    %198 = vmatprep.subr.mxu0 0.0
    %199 = vmatpush2.msra.mxu0 0.0
    %200 = vmatprep.subr.mxu0 0.0
    %201 = vmatpush2.msra.mxu0 0.0
    %202 = vmatprep.subr.mxu0 0.0
    %203 = vmatpush2.msra.mxu0 0.0
    %204 = vmatprep.mubr.f32.mxu0 0.0
    %205 = vmatmul.mubr.f32.gmra.mxu0 %v47
    %v206 = vpop.f32.mrf.mxu0
    %v207 = vadd.f32 %v138, %v206
    %v208 = vpop.f32.mrf.mxu0
    %209 = vmatprep.mubr.f32.mxu0 0.0
    %210 = vmatmul.mubr.f32.gmra.mxu0 %v50
    %v211 = vpop.f32.mrf.mxu0
    %v212 = vadd.f32 %v138, %v211
    %v213 = vpop.f32.mrf.mxu0
    %214 = vdwg.mxu0
    %s215 = scalar_lea.vmem %s1, 64
    %v216 = vld [vmem:[%s215] sm:$0xff]
    %v217 = vld [vmem:[%s215 + $0x8] sm:$0xff]
    %v218 = vld [vmem:[%s215 + $0x10] sm:$0xff]
    %v219 = vld [vmem:[%s215 + $0x18] sm:$0xff]
    %s220 = scalar_lea.vmem %s2, 2
    %v221 = vld [vmem:[%s220] sm:$0x1]
    %v223 = vlaneseq
    %v224 = vshrl.u32 %v223, 7
    %v225 = vsub.s32 0, %v224
    %v226 = vrot.slane %v221, %v225
    %228 = vmatprep.subr.mxu0 0.0
    %229 = vmatpush1.msra.mxu0 0.0
    %230 = vmatprep.subr.mxu0 0.0
    %231 = vmatpush1.msra.mxu0 0.0
    %232 = vmatprep.subr.mxu0 0.0
    %233 = vmatpush1.msra.mxu0 0.0
    %234 = vmatprep.subr.mxu0 0.0
    %235 = vmatpush1.msra.mxu0 0.0
    %236 = vmatprep.subr.mxu0 0.0
    %237 = vmatpush1.msra.mxu0 0.0
    %238 = vmatprep.subr.mxu0 0.0
    %239 = vmatpush1.msra.mxu0 0.0
    %240 = vmatprep.subr.mxu0 0.0
    %241 = vmatpush1.msra.mxu0 0.0
    %242 = vmatprep.subr.mxu0 0.0
    %243 = vmatpush1.msra.mxu0 0.0
    %244 = vmatprep.subr.mxu0 0.0
    %245 = vmatpush1.msra.mxu0 0.0
    %246 = vmatprep.subr.mxu0 0.0
    %247 = vmatpush1.msra.mxu0 0.0
    %248 = vmatprep.subr.mxu0 0.0
    %249 = vmatpush1.msra.mxu0 0.0
    %250 = vmatprep.subr.mxu0 0.0
    %251 = vmatpush1.msra.mxu0 0.0
    %252 = vmatprep.subr.mxu0 0.0
    %253 = vmatpush1.msra.mxu0 %v219
    %254 = vmatprep.subr.mxu0 0.0
    %255 = vmatpush1.msra.mxu0 %v218
    %256 = vmatprep.subr.mxu0 0.0
    %257 = vmatpush1.msra.mxu0 %v217
    %258 = vmatprep.subr.mxu0 0.0
    %259 = vmatpush1.msra.mxu0 %v216
    %260 = vmatprep.subr.mxu0 0.0
    %261 = vmatpush2.msra.mxu0 0.0
    %262 = vmatprep.subr.mxu0 0.0
    %263 = vmatpush2.msra.mxu0 0.0
    %264 = vmatprep.subr.mxu0 0.0
    %265 = vmatpush2.msra.mxu0 0.0
    %266 = vmatprep.subr.mxu0 0.0
    %267 = vmatpush2.msra.mxu0 0.0
    %268 = vmatprep.subr.mxu0 0.0
    %269 = vmatpush2.msra.mxu0 0.0
    %270 = vmatprep.subr.mxu0 0.0
    %271 = vmatpush2.msra.mxu0 0.0
    %272 = vmatprep.subr.mxu0 0.0
    %273 = vmatpush2.msra.mxu0 0.0
    %274 = vmatprep.subr.mxu0 0.0
    %275 = vmatpush2.msra.mxu0 0.0
    %276 = vmatprep.subr.mxu0 0.0
    %277 = vmatpush2.msra.mxu0 0.0
    %278 = vmatprep.subr.mxu0 0.0
    %279 = vmatpush2.msra.mxu0 0.0
    %280 = vmatprep.subr.mxu0 0.0
    %281 = vmatpush2.msra.mxu0 0.0
    %282 = vmatprep.subr.mxu0 0.0
    %283 = vmatpush2.msra.mxu0 0.0
    %284 = vmatprep.subr.mxu0 0.0
    %285 = vmatpush2.msra.mxu0 0.0
    %286 = vmatprep.subr.mxu0 0.0
    %287 = vmatpush2.msra.mxu0 0.0
    %288 = vmatprep.subr.mxu0 0.0
    %289 = vmatpush2.msra.mxu0 0.0
    %290 = vmatprep.subr.mxu0 0.0
    %291 = vmatpush2.msra.mxu0 0.0
    %292 = vmatprep.mubr.f32.mxu0 0.0
    %293 = vmatmul.mubr.f32.gmra.mxu0 %v47
    %v294 = vpop.f32.mrf.mxu0
    %v295 = vadd.f32 %v226, %v294
    %v296 = vpop.f32.mrf.mxu0
    %297 = vmatprep.mubr.f32.mxu0 0.0
    %298 = vmatmul.mubr.f32.gmra.mxu0 %v50
    %v299 = vpop.f32.mrf.mxu0
    %v300 = vadd.f32 %v226, %v299
    %v301 = vpop.f32.mrf.mxu0
    %302 = vdwg.mxu0
    %s303 = scalar_lea.vmem %s1, 96
    %v304 = vld [vmem:[%s303] sm:$0xff]
    %v305 = vld [vmem:[%s303 + $0x8] sm:$0xff]
    %v306 = vld [vmem:[%s303 + $0x10] sm:$0xff]
    %v307 = vld [vmem:[%s303 + $0x18] sm:$0xff]
    %s308 = scalar_lea.vmem %s2, 3
    %v309 = vld [vmem:[%s308] sm:$0x1]
    %v311 = vlaneseq
    %v312 = vshrl.u32 %v311, 7
    %v313 = vsub.s32 0, %v312
    %v314 = vrot.slane %v309, %v313
    %316 = vmatprep.subr.mxu0 0.0
    %317 = vmatpush1.msra.mxu0 0.0
    %318 = vmatprep.subr.mxu0 0.0
    %319 = vmatpush1.msra.mxu0 0.0
    %320 = vmatprep.subr.mxu0 0.0
    %321 = vmatpush1.msra.mxu0 0.0
    %322 = vmatprep.subr.mxu0 0.0
    %323 = vmatpush1.msra.mxu0 0.0
    %324 = vmatprep.subr.mxu0 0.0
    %325 = vmatpush1.msra.mxu0 0.0
    %326 = vmatprep.subr.mxu0 0.0
    %327 = vmatpush1.msra.mxu0 0.0
    %328 = vmatprep.subr.mxu0 0.0
    %329 = vmatpush1.msra.mxu0 0.0
    %330 = vmatprep.subr.mxu0 0.0
    %331 = vmatpush1.msra.mxu0 0.0
    %332 = vmatprep.subr.mxu0 0.0
    %333 = vmatpush1.msra.mxu0 0.0
    %334 = vmatprep.subr.mxu0 0.0
    %335 = vmatpush1.msra.mxu0 0.0
    %336 = vmatprep.subr.mxu0 0.0
    %337 = vmatpush1.msra.mxu0 0.0
    %338 = vmatprep.subr.mxu0 0.0
    %339 = vmatpush1.msra.mxu0 0.0
    %340 = vmatprep.subr.mxu0 0.0
    %341 = vmatpush1.msra.mxu0 %v307
    %342 = vmatprep.subr.mxu0 0.0
    %343 = vmatpush1.msra.mxu0 %v306
    %344 = vmatprep.subr.mxu0 0.0
    %345 = vmatpush1.msra.mxu0 %v305
    %346 = vmatprep.subr.mxu0 0.0
    %347 = vmatpush1.msra.mxu0 %v304
    %348 = vmatprep.subr.mxu0 0.0
    %349 = vmatpush2.msra.mxu0 0.0
    %350 = vmatprep.subr.mxu0 0.0
    %351 = vmatpush2.msra.mxu0 0.0
    %352 = vmatprep.subr.mxu0 0.0
    %353 = vmatpush2.msra.mxu0 0.0
    %354 = vmatprep.subr.mxu0 0.0
    %355 = vmatpush2.msra.mxu0 0.0
    %356 = vmatprep.subr.mxu0 0.0
    %357 = vmatpush2.msra.mxu0 0.0
    %358 = vmatprep.subr.mxu0 0.0
    %359 = vmatpush2.msra.mxu0 0.0
    %360 = vmatprep.subr.mxu0 0.0
    %361 = vmatpush2.msra.mxu0 0.0
    %362 = vmatprep.subr.mxu0 0.0
    %363 = vmatpush2.msra.mxu0 0.0
    %364 = vmatprep.subr.mxu0 0.0
    %365 = vmatpush2.msra.mxu0 0.0
    %366 = vmatprep.subr.mxu0 0.0
    %367 = vmatpush2.msra.mxu0 0.0
    %368 = vmatprep.subr.mxu0 0.0
    %369 = vmatpush2.msra.mxu0 0.0
    %370 = vmatprep.subr.mxu0 0.0
    %371 = vmatpush2.msra.mxu0 0.0
    %372 = vmatprep.subr.mxu0 0.0
    %373 = vmatpush2.msra.mxu0 0.0
    %374 = vmatprep.subr.mxu0 0.0
    %375 = vmatpush2.msra.mxu0 0.0
    %376 = vmatprep.subr.mxu0 0.0
    %377 = vmatpush2.msra.mxu0 0.0
    %378 = vmatprep.subr.mxu0 0.0
    %379 = vmatpush2.msra.mxu0 0.0
    %380 = vmatprep.mubr.f32.mxu0 0.0
    %381 = vmatmul.mubr.f32.gmra.mxu0 %v47
    %v382 = vpop.f32.mrf.mxu0
    %v383 = vadd.f32 %v314, %v382
    %v384 = vpop.f32.mrf.mxu0
    %385 = vmatprep.mubr.f32.mxu0 0.0
    %386 = vmatmul.mubr.f32.gmra.mxu0 %v50
    %v387 = vpop.f32.mrf.mxu0
    %v388 = vadd.f32 %v314, %v387
    %v389 = vpop.f32.mrf.mxu0
    %390 = vdwg.mxu0
    %s391 = scalar_lea.vmem %s0, 16
    %v392 = vld [vmem:[%s391] sm:$0xff]
    %v393 = vld [vmem:[%s391 + $0x8] sm:$0xff]
    %s394 = scalar_lea.vmem %s1, 128
    %v395 = vld [vmem:[%s394] sm:$0xff]
    %v396 = vld [vmem:[%s394 + $0x8] sm:$0xff]
    %v397 = vld [vmem:[%s394 + $0x10] sm:$0xff]
    %v398 = vld [vmem:[%s394 + $0x18] sm:$0xff]
    %s399 = scalar_lea.vmem %s2, 4
    %v400 = vld [vmem:[%s399] sm:$0x1]
    %v402 = vlaneseq
    %v403 = vshrl.u32 %v402, 7
    %v404 = vsub.s32 0, %v403
    %v405 = vrot.slane %v400, %v404
    %v408 = vsel %vm45, %v392, 0
    %v411 = vsel %vm45, %v393, 0
    %413 = vmatprep.subr.mxu0 0.0
    %414 = vmatpush1.msra.mxu0 0.0
    %415 = vmatprep.subr.mxu0 0.0
    %416 = vmatpush1.msra.mxu0 0.0
    %417 = vmatprep.subr.mxu0 0.0
    %418 = vmatpush1.msra.mxu0 0.0
    %419 = vmatprep.subr.mxu0 0.0
    %420 = vmatpush1.msra.mxu0 0.0
    %421 = vmatprep.subr.mxu0 0.0
    %422 = vmatpush1.msra.mxu0 0.0
    %423 = vmatprep.subr.mxu0 0.0
    %424 = vmatpush1.msra.mxu0 0.0
    %425 = vmatprep.subr.mxu0 0.0
    %426 = vmatpush1.msra.mxu0 0.0
    %427 = vmatprep.subr.mxu0 0.0
    %428 = vmatpush1.msra.mxu0 0.0
    %429 = vmatprep.subr.mxu0 0.0
    %430 = vmatpush1.msra.mxu0 0.0
    %431 = vmatprep.subr.mxu0 0.0
    %432 = vmatpush1.msra.mxu0 0.0
    %433 = vmatprep.subr.mxu0 0.0
    %434 = vmatpush1.msra.mxu0 0.0
    %435 = vmatprep.subr.mxu0 0.0
    %436 = vmatpush1.msra.mxu0 0.0
    %437 = vmatprep.subr.mxu0 0.0
    %438 = vmatpush1.msra.mxu0 %v398
    %439 = vmatprep.subr.mxu0 0.0
    %440 = vmatpush1.msra.mxu0 %v397
    %441 = vmatprep.subr.mxu0 0.0
    %442 = vmatpush1.msra.mxu0 %v396
    %443 = vmatprep.subr.mxu0 0.0
    %444 = vmatpush1.msra.mxu0 %v395
    %445 = vmatprep.subr.mxu0 0.0
    %446 = vmatpush2.msra.mxu0 0.0
    %447 = vmatprep.subr.mxu0 0.0
    %448 = vmatpush2.msra.mxu0 0.0
    %449 = vmatprep.subr.mxu0 0.0
    %450 = vmatpush2.msra.mxu0 0.0
    %451 = vmatprep.subr.mxu0 0.0
    %452 = vmatpush2.msra.mxu0 0.0
    %453 = vmatprep.subr.mxu0 0.0
    %454 = vmatpush2.msra.mxu0 0.0
    %455 = vmatprep.subr.mxu0 0.0
    %456 = vmatpush2.msra.mxu0 0.0
    %457 = vmatprep.subr.mxu0 0.0
    %458 = vmatpush2.msra.mxu0 0.0
    %459 = vmatprep.subr.mxu0 0.0
    %460 = vmatpush2.msra.mxu0 0.0
    %461 = vmatprep.subr.mxu0 0.0
    %462 = vmatpush2.msra.mxu0 0.0
    %463 = vmatprep.subr.mxu0 0.0
    %464 = vmatpush2.msra.mxu0 0.0
    %465 = vmatprep.subr.mxu0 0.0
    %466 = vmatpush2.msra.mxu0 0.0
    %467 = vmatprep.subr.mxu0 0.0
    %468 = vmatpush2.msra.mxu0 0.0
    %469 = vmatprep.subr.mxu0 0.0
    %470 = vmatpush2.msra.mxu0 0.0
    %471 = vmatprep.subr.mxu0 0.0
    %472 = vmatpush2.msra.mxu0 0.0
    %473 = vmatprep.subr.mxu0 0.0
    %474 = vmatpush2.msra.mxu0 0.0
    %475 = vmatprep.subr.mxu0 0.0
    %476 = vmatpush2.msra.mxu0 0.0
    %477 = vmatprep.mubr.f32.mxu0 0.0
    %478 = vmatmul.mubr.f32.gmra.mxu0 %v408
    %v479 = vpop.f32.mrf.mxu0
    %v480 = vadd.f32 %v405, %v479
    %v481 = vpop.f32.mrf.mxu0
    %482 = vmatprep.mubr.f32.mxu0 0.0
    %483 = vmatmul.mubr.f32.gmra.mxu0 %v411
    %v484 = vpop.f32.mrf.mxu0
    %v485 = vadd.f32 %v405, %v484
    %v486 = vpop.f32.mrf.mxu0
    %487 = vdwg.mxu0
    %s488 = scalar_lea.vmem %s1, 160
    %v489 = vld [vmem:[%s488] sm:$0xff]
    %v490 = vld [vmem:[%s488 + $0x8] sm:$0xff]
    %v491 = vld [vmem:[%s488 + $0x10] sm:$0xff]
    %v492 = vld [vmem:[%s488 + $0x18] sm:$0xff]
    %s493 = scalar_lea.vmem %s2, 5
    %v494 = vld [vmem:[%s493] sm:$0x1]
    %v496 = vlaneseq
    %v497 = vshrl.u32 %v496, 7
    %v498 = vsub.s32 0, %v497
    %v499 = vrot.slane %v494, %v498
    %501 = vmatprep.subr.mxu0 0.0
    %502 = vmatpush1.msra.mxu0 0.0
    %503 = vmatprep.subr.mxu0 0.0
    %504 = vmatpush1.msra.mxu0 0.0
    %505 = vmatprep.subr.mxu0 0.0
    %506 = vmatpush1.msra.mxu0 0.0
    %507 = vmatprep.subr.mxu0 0.0
    %508 = vmatpush1.msra.mxu0 0.0
    %509 = vmatprep.subr.mxu0 0.0
    %510 = vmatpush1.msra.mxu0 0.0
    %511 = vmatprep.subr.mxu0 0.0
    %512 = vmatpush1.msra.mxu0 0.0
    %513 = vmatprep.subr.mxu0 0.0
    %514 = vmatpush1.msra.mxu0 0.0
    %515 = vmatprep.subr.mxu0 0.0
    %516 = vmatpush1.msra.mxu0 0.0
    %517 = vmatprep.subr.mxu0 0.0
    %518 = vmatpush1.msra.mxu0 0.0
    %519 = vmatprep.subr.mxu0 0.0
    %520 = vmatpush1.msra.mxu0 0.0
    %521 = vmatprep.subr.mxu0 0.0
    %522 = vmatpush1.msra.mxu0 0.0
    %523 = vmatprep.subr.mxu0 0.0
    %524 = vmatpush1.msra.mxu0 0.0
    %525 = vmatprep.subr.mxu0 0.0
    %526 = vmatpush1.msra.mxu0 %v492
    %527 = vmatprep.subr.mxu0 0.0
    %528 = vmatpush1.msra.mxu0 %v491
    %529 = vmatprep.subr.mxu0 0.0
    %530 = vmatpush1.msra.mxu0 %v490
    %531 = vmatprep.subr.mxu0 0.0
    %532 = vmatpush1.msra.mxu0 %v489
    %533 = vmatprep.subr.mxu0 0.0
    %534 = vmatpush2.msra.mxu0 0.0
    %535 = vmatprep.subr.mxu0 0.0
    %536 = vmatpush2.msra.mxu0 0.0
    %537 = vmatprep.subr.mxu0 0.0
    %538 = vmatpush2.msra.mxu0 0.0
    %539 = vmatprep.subr.mxu0 0.0
    %540 = vmatpush2.msra.mxu0 0.0
    %541 = vmatprep.subr.mxu0 0.0
    %542 = vmatpush2.msra.mxu0 0.0
    %543 = vmatprep.subr.mxu0 0.0
    %544 = vmatpush2.msra.mxu0 0.0
    %545 = vmatprep.subr.mxu0 0.0
    %546 = vmatpush2.msra.mxu0 0.0
    %547 = vmatprep.subr.mxu0 0.0
    %548 = vmatpush2.msra.mxu0 0.0
    %549 = vmatprep.subr.mxu0 0.0
    %550 = vmatpush2.msra.mxu0 0.0
    %551 = vmatprep.subr.mxu0 0.0
    %552 = vmatpush2.msra.mxu0 0.0
    %553 = vmatprep.subr.mxu0 0.0
    %554 = vmatpush2.msra.mxu0 0.0
    %555 = vmatprep.subr.mxu0 0.0
    %556 = vmatpush2.msra.mxu0 0.0
    %557 = vmatprep.subr.mxu0 0.0
    %558 = vmatpush2.msra.mxu0 0.0
    %559 = vmatprep.subr.mxu0 0.0
    %560 = vmatpush2.msra.mxu0 0.0
    %561 = vmatprep.subr.mxu0 0.0
    %562 = vmatpush2.msra.mxu0 0.0
    %563 = vmatprep.subr.mxu0 0.0
    %564 = vmatpush2.msra.mxu0 0.0
    %565 = vmatprep.mubr.f32.mxu0 0.0
    %566 = vmatmul.mubr.f32.gmra.mxu0 %v408
    %v567 = vpop.f32.mrf.mxu0
    %v568 = vadd.f32 %v499, %v567
    %v569 = vpop.f32.mrf.mxu0
    %570 = vmatprep.mubr.f32.mxu0 0.0
    %571 = vmatmul.mubr.f32.gmra.mxu0 %v411
    %v572 = vpop.f32.mrf.mxu0
    %v573 = vadd.f32 %v499, %v572
    %v574 = vpop.f32.mrf.mxu0
    %575 = vdwg.mxu0
    %s576 = scalar_lea.vmem %s1, 192
    %v577 = vld [vmem:[%s576] sm:$0xff]
    %v578 = vld [vmem:[%s576 + $0x8] sm:$0xff]
    %v579 = vld [vmem:[%s576 + $0x10] sm:$0xff]
    %v580 = vld [vmem:[%s576 + $0x18] sm:$0xff]
    %s581 = scalar_lea.vmem %s2, 6
    %v582 = vld [vmem:[%s581] sm:$0x1]
    %v584 = vlaneseq
    %v585 = vshrl.u32 %v584, 7
    %v586 = vsub.s32 0, %v585
    %v587 = vrot.slane %v582, %v586
    %589 = vmatprep.subr.mxu0 0.0
    %590 = vmatpush1.msra.mxu0 0.0
    %591 = vmatprep.subr.mxu0 0.0
    %592 = vmatpush1.msra.mxu0 0.0
    %593 = vmatprep.subr.mxu0 0.0
    %594 = vmatpush1.msra.mxu0 0.0
    %595 = vmatprep.subr.mxu0 0.0
    %596 = vmatpush1.msra.mxu0 0.0
    %597 = vmatprep.subr.mxu0 0.0
    %598 = vmatpush1.msra.mxu0 0.0
    %599 = vmatprep.subr.mxu0 0.0
    %600 = vmatpush1.msra.mxu0 0.0
    %601 = vmatprep.subr.mxu0 0.0
    %602 = vmatpush1.msra.mxu0 0.0
    %603 = vmatprep.subr.mxu0 0.0
    %604 = vmatpush1.msra.mxu0 0.0
    %605 = vmatprep.subr.mxu0 0.0
    %606 = vmatpush1.msra.mxu0 0.0
    %607 = vmatprep.subr.mxu0 0.0
    %608 = vmatpush1.msra.mxu0 0.0
    %609 = vmatprep.subr.mxu0 0.0
    %610 = vmatpush1.msra.mxu0 0.0
    %611 = vmatprep.subr.mxu0 0.0
    %612 = vmatpush1.msra.mxu0 0.0
    %613 = vmatprep.subr.mxu0 0.0
    %614 = vmatpush1.msra.mxu0 %v580
    %615 = vmatprep.subr.mxu0 0.0
    %616 = vmatpush1.msra.mxu0 %v579
    %617 = vmatprep.subr.mxu0 0.0
    %618 = vmatpush1.msra.mxu0 %v578
    %619 = vmatprep.subr.mxu0 0.0
    %620 = vmatpush1.msra.mxu0 %v577
    %621 = vmatprep.subr.mxu0 0.0
    %622 = vmatpush2.msra.mxu0 0.0
    %623 = vmatprep.subr.mxu0 0.0
    %624 = vmatpush2.msra.mxu0 0.0
    %625 = vmatprep.subr.mxu0 0.0
    %626 = vmatpush2.msra.mxu0 0.0
    %627 = vmatprep.subr.mxu0 0.0
    %628 = vmatpush2.msra.mxu0 0.0
    %629 = vmatprep.subr.mxu0 0.0
    %630 = vmatpush2.msra.mxu0 0.0
    %631 = vmatprep.subr.mxu0 0.0
    %632 = vmatpush2.msra.mxu0 0.0
    %633 = vmatprep.subr.mxu0 0.0
    %634 = vmatpush2.msra.mxu0 0.0
    %635 = vmatprep.subr.mxu0 0.0
    %636 = vmatpush2.msra.mxu0 0.0
    %637 = vmatprep.subr.mxu0 0.0
    %638 = vmatpush2.msra.mxu0 0.0
    %639 = vmatprep.subr.mxu0 0.0
    %640 = vmatpush2.msra.mxu0 0.0
    %641 = vmatprep.subr.mxu0 0.0
    %642 = vmatpush2.msra.mxu0 0.0
    %643 = vmatprep.subr.mxu0 0.0
    %644 = vmatpush2.msra.mxu0 0.0
    %645 = vmatprep.subr.mxu0 0.0
    %646 = vmatpush2.msra.mxu0 0.0
    %647 = vmatprep.subr.mxu0 0.0
    %648 = vmatpush2.msra.mxu0 0.0
    %649 = vmatprep.subr.mxu0 0.0
    %650 = vmatpush2.msra.mxu0 0.0
    %651 = vmatprep.subr.mxu0 0.0
    %652 = vmatpush2.msra.mxu0 0.0
    %653 = vmatprep.mubr.f32.mxu0 0.0
    %654 = vmatmul.mubr.f32.gmra.mxu0 %v408
    %v655 = vpop.f32.mrf.mxu0
    %v656 = vadd.f32 %v587, %v655
    %v657 = vpop.f32.mrf.mxu0
    %658 = vmatprep.mubr.f32.mxu0 0.0
    %659 = vmatmul.mubr.f32.gmra.mxu0 %v411
    %v660 = vpop.f32.mrf.mxu0
    %v661 = vadd.f32 %v587, %v660
    %v662 = vpop.f32.mrf.mxu0
    %663 = vdwg.mxu0
    %s664 = scalar_lea.vmem %s1, 224
    %v665 = vld [vmem:[%s664] sm:$0xff]
    %v666 = vld [vmem:[%s664 + $0x8] sm:$0xff]
    %v667 = vld [vmem:[%s664 + $0x10] sm:$0xff]
    %v668 = vld [vmem:[%s664 + $0x18] sm:$0xff]
    %s669 = scalar_lea.vmem %s2, 7
    %v670 = vld [vmem:[%s669] sm:$0x1]
    %v672 = vlaneseq
    %v673 = vshrl.u32 %v672, 7
    %v674 = vsub.s32 0, %v673
    %v675 = vrot.slane %v670, %v674
    %677 = vmatprep.subr.mxu0 0.0
    %678 = vmatpush1.msra.mxu0 0.0
    %679 = vmatprep.subr.mxu0 0.0
    %680 = vmatpush1.msra.mxu0 0.0
    %681 = vmatprep.subr.mxu0 0.0
    %682 = vmatpush1.msra.mxu0 0.0
    %683 = vmatprep.subr.mxu0 0.0
    %684 = vmatpush1.msra.mxu0 0.0
    %685 = vmatprep.subr.mxu0 0.0
    %686 = vmatpush1.msra.mxu0 0.0
    %687 = vmatprep.subr.mxu0 0.0
    %688 = vmatpush1.msra.mxu0 0.0
    %689 = vmatprep.subr.mxu0 0.0
    %690 = vmatpush1.msra.mxu0 0.0
    %691 = vmatprep.subr.mxu0 0.0
    %692 = vmatpush1.msra.mxu0 0.0
    %693 = vmatprep.subr.mxu0 0.0
    %694 = vmatpush1.msra.mxu0 0.0
    %695 = vmatprep.subr.mxu0 0.0
    %696 = vmatpush1.msra.mxu0 0.0
    %697 = vmatprep.subr.mxu0 0.0
    %698 = vmatpush1.msra.mxu0 0.0
    %699 = vmatprep.subr.mxu0 0.0
    %700 = vmatpush1.msra.mxu0 0.0
    %701 = vmatprep.subr.mxu0 0.0
    %702 = vmatpush1.msra.mxu0 %v668
    %703 = vmatprep.subr.mxu0 0.0
    %704 = vmatpush1.msra.mxu0 %v667
    %705 = vmatprep.subr.mxu0 0.0
    %706 = vmatpush1.msra.mxu0 %v666
    %707 = vmatprep.subr.mxu0 0.0
    %708 = vmatpush1.msra.mxu0 %v665
    %709 = vmatprep.subr.mxu0 0.0
    %710 = vmatpush2.msra.mxu0 0.0
    %711 = vmatprep.subr.mxu0 0.0
    %712 = vmatpush2.msra.mxu0 0.0
    %713 = vmatprep.subr.mxu0 0.0
    %714 = vmatpush2.msra.mxu0 0.0
    %715 = vmatprep.subr.mxu0 0.0
    %716 = vmatpush2.msra.mxu0 0.0
    %717 = vmatprep.subr.mxu0 0.0
    %718 = vmatpush2.msra.mxu0 0.0
    %719 = vmatprep.subr.mxu0 0.0
    %720 = vmatpush2.msra.mxu0 0.0
    %721 = vmatprep.subr.mxu0 0.0
    %722 = vmatpush2.msra.mxu0 0.0
    %723 = vmatprep.subr.mxu0 0.0
    %724 = vmatpush2.msra.mxu0 0.0
    %725 = vmatprep.subr.mxu0 0.0
    %726 = vmatpush2.msra.mxu0 0.0
    %727 = vmatprep.subr.mxu0 0.0
    %728 = vmatpush2.msra.mxu0 0.0
    %729 = vmatprep.subr.mxu0 0.0
    %730 = vmatpush2.msra.mxu0 0.0
    %731 = vmatprep.subr.mxu0 0.0
    %732 = vmatpush2.msra.mxu0 0.0
    %733 = vmatprep.subr.mxu0 0.0
    %734 = vmatpush2.msra.mxu0 0.0
    %735 = vmatprep.subr.mxu0 0.0
    %736 = vmatpush2.msra.mxu0 0.0
    %737 = vmatprep.subr.mxu0 0.0
    %738 = vmatpush2.msra.mxu0 0.0
    %739 = vmatprep.subr.mxu0 0.0
    %740 = vmatpush2.msra.mxu0 0.0
    %741 = vmatprep.mubr.f32.mxu0 0.0
    %742 = vmatmul.mubr.f32.gmra.mxu0 %v408
    %v743 = vpop.f32.mrf.mxu0
    %v744 = vadd.f32 %v675, %v743
    %v745 = vpop.f32.mrf.mxu0
    %746 = vmatprep.mubr.f32.mxu0 0.0
    %747 = vmatmul.mubr.f32.gmra.mxu0 %v411
    %v748 = vpop.f32.mrf.mxu0
    %v749 = vadd.f32 %v675, %v748
    %v750 = vpop.f32.mrf.mxu0
    %751 = vdwg.mxu0
    %s752 = scalar_lea.vmem %s0, 32
    %v753 = vld [vmem:[%s752] sm:$0xff]
    %v754 = vld [vmem:[%s752 + $0x8] sm:$0xff]
    %s755 = scalar_lea.vmem %s1, 256
    %v756 = vld [vmem:[%s755] sm:$0xff]
    %v757 = vld [vmem:[%s755 + $0x8] sm:$0xff]
    %v758 = vld [vmem:[%s755 + $0x10] sm:$0xff]
    %v759 = vld [vmem:[%s755 + $0x18] sm:$0xff]
    %s760 = scalar_lea.vmem %s2, 8
    %v761 = vld [vmem:[%s760] sm:$0x1]
    %v763 = vlaneseq
    %v764 = vshrl.u32 %v763, 7
    %v765 = vsub.s32 0, %v764
    %v766 = vrot.slane %v761, %v765
    %v769 = vsel %vm45, %v753, 0
    %v772 = vsel %vm45, %v754, 0
    %774 = vmatprep.subr.mxu0 0.0
    %775 = vmatpush1.msra.mxu0 0.0
    %776 = vmatprep.subr.mxu0 0.0
    %777 = vmatpush1.msra.mxu0 0.0
    %778 = vmatprep.subr.mxu0 0.0
    %779 = vmatpush1.msra.mxu0 0.0
    %780 = vmatprep.subr.mxu0 0.0
    %781 = vmatpush1.msra.mxu0 0.0
    %782 = vmatprep.subr.mxu0 0.0
    %783 = vmatpush1.msra.mxu0 0.0
    %784 = vmatprep.subr.mxu0 0.0
    %785 = vmatpush1.msra.mxu0 0.0
    %786 = vmatprep.subr.mxu0 0.0
    %787 = vmatpush1.msra.mxu0 0.0
    %788 = vmatprep.subr.mxu0 0.0
    %789 = vmatpush1.msra.mxu0 0.0
    %790 = vmatprep.subr.mxu0 0.0
    %791 = vmatpush1.msra.mxu0 0.0
    %792 = vmatprep.subr.mxu0 0.0
    %793 = vmatpush1.msra.mxu0 0.0
    %794 = vmatprep.subr.mxu0 0.0
    %795 = vmatpush1.msra.mxu0 0.0
    %796 = vmatprep.subr.mxu0 0.0
    %797 = vmatpush1.msra.mxu0 0.0
    %798 = vmatprep.subr.mxu0 0.0
    %799 = vmatpush1.msra.mxu0 %v759
    %800 = vmatprep.subr.mxu0 0.0
    %801 = vmatpush1.msra.mxu0 %v758
    %802 = vmatprep.subr.mxu0 0.0
    %803 = vmatpush1.msra.mxu0 %v757
    %804 = vmatprep.subr.mxu0 0.0
    %805 = vmatpush1.msra.mxu0 %v756
    %806 = vmatprep.subr.mxu0 0.0
    %807 = vmatpush2.msra.mxu0 0.0
    %808 = vmatprep.subr.mxu0 0.0
    %809 = vmatpush2.msra.mxu0 0.0
    %810 = vmatprep.subr.mxu0 0.0
    %811 = vmatpush2.msra.mxu0 0.0
    %812 = vmatprep.subr.mxu0 0.0
    %813 = vmatpush2.msra.mxu0 0.0
    %814 = vmatprep.subr.mxu0 0.0
    %815 = vmatpush2.msra.mxu0 0.0
    %816 = vmatprep.subr.mxu0 0.0
    %817 = vmatpush2.msra.mxu0 0.0
    %818 = vmatprep.subr.mxu0 0.0
    %819 = vmatpush2.msra.mxu0 0.0
    %820 = vmatprep.subr.mxu0 0.0
    %821 = vmatpush2.msra.mxu0 0.0
    %822 = vmatprep.subr.mxu0 0.0
    %823 = vmatpush2.msra.mxu0 0.0
    %824 = vmatprep.subr.mxu0 0.0
    %825 = vmatpush2.msra.mxu0 0.0
    %826 = vmatprep.subr.mxu0 0.0
    %827 = vmatpush2.msra.mxu0 0.0
    %828 = vmatprep.subr.mxu0 0.0
    %829 = vmatpush2.msra.mxu0 0.0
    %830 = vmatprep.subr.mxu0 0.0
    %831 = vmatpush2.msra.mxu0 0.0
    %832 = vmatprep.subr.mxu0 0.0
    %833 = vmatpush2.msra.mxu0 0.0
    %834 = vmatprep.subr.mxu0 0.0
    %835 = vmatpush2.msra.mxu0 0.0
    %836 = vmatprep.subr.mxu0 0.0
    %837 = vmatpush2.msra.mxu0 0.0
    %838 = vmatprep.mubr.f32.mxu0 0.0
    %839 = vmatmul.mubr.f32.gmra.mxu0 %v769
    %v840 = vpop.f32.mrf.mxu0
    %v841 = vadd.f32 %v766, %v840
    %v842 = vpop.f32.mrf.mxu0
    %843 = vmatprep.mubr.f32.mxu0 0.0
    %844 = vmatmul.mubr.f32.gmra.mxu0 %v772
    %v845 = vpop.f32.mrf.mxu0
    %v846 = vadd.f32 %v766, %v845
    %v847 = vpop.f32.mrf.mxu0
    %848 = vdwg.mxu0
    %s849 = scalar_lea.vmem %s1, 288
    %v850 = vld [vmem:[%s849] sm:$0xff]
    %v851 = vld [vmem:[%s849 + $0x8] sm:$0xff]
    %v852 = vld [vmem:[%s849 + $0x10] sm:$0xff]
    %v853 = vld [vmem:[%s849 + $0x18] sm:$0xff]
    %s854 = scalar_lea.vmem %s2, 9
    %v855 = vld [vmem:[%s854] sm:$0x1]
    %v857 = vlaneseq
    %v858 = vshrl.u32 %v857, 7
    %v859 = vsub.s32 0, %v858
    %v860 = vrot.slane %v855, %v859
    %862 = vmatprep.subr.mxu0 0.0
    %863 = vmatpush1.msra.mxu0 0.0
    %864 = vmatprep.subr.mxu0 0.0
    %865 = vmatpush1.msra.mxu0 0.0
    %866 = vmatprep.subr.mxu0 0.0
    %867 = vmatpush1.msra.mxu0 0.0
    %868 = vmatprep.subr.mxu0 0.0
    %869 = vmatpush1.msra.mxu0 0.0
    %870 = vmatprep.subr.mxu0 0.0
    %871 = vmatpush1.msra.mxu0 0.0
    %872 = vmatprep.subr.mxu0 0.0
    %873 = vmatpush1.msra.mxu0 0.0
    %874 = vmatprep.subr.mxu0 0.0
    %875 = vmatpush1.msra.mxu0 0.0
    %876 = vmatprep.subr.mxu0 0.0
    %877 = vmatpush1.msra.mxu0 0.0
    %878 = vmatprep.subr.mxu0 0.0
    %879 = vmatpush1.msra.mxu0 0.0
    %880 = vmatprep.subr.mxu0 0.0
    %881 = vmatpush1.msra.mxu0 0.0
    %882 = vmatprep.subr.mxu0 0.0
    %883 = vmatpush1.msra.mxu0 0.0
    %884 = vmatprep.subr.mxu0 0.0
    %885 = vmatpush1.msra.mxu0 0.0
    %886 = vmatprep.subr.mxu0 0.0
    %887 = vmatpush1.msra.mxu0 %v853
    %888 = vmatprep.subr.mxu0 0.0
    %889 = vmatpush1.msra.mxu0 %v852
    %890 = vmatprep.subr.mxu0 0.0
    %891 = vmatpush1.msra.mxu0 %v851
    %892 = vmatprep.subr.mxu0 0.0
    %893 = vmatpush1.msra.mxu0 %v850
    %894 = vmatprep.subr.mxu0 0.0
    %895 = vmatpush2.msra.mxu0 0.0
    %896 = vmatprep.subr.mxu0 0.0
    %897 = vmatpush2.msra.mxu0 0.0
    %898 = vmatprep.subr.mxu0 0.0
    %899 = vmatpush2.msra.mxu0 0.0
    %900 = vmatprep.subr.mxu0 0.0
    %901 = vmatpush2.msra.mxu0 0.0
    %902 = vmatprep.subr.mxu0 0.0
    %903 = vmatpush2.msra.mxu0 0.0
    %904 = vmatprep.subr.mxu0 0.0
    %905 = vmatpush2.msra.mxu0 0.0
    %906 = vmatprep.subr.mxu0 0.0
    %907 = vmatpush2.msra.mxu0 0.0
    %908 = vmatprep.subr.mxu0 0.0
    %909 = vmatpush2.msra.mxu0 0.0
    %910 = vmatprep.subr.mxu0 0.0
    %911 = vmatpush2.msra.mxu0 0.0
    %912 = vmatprep.subr.mxu0 0.0
    %913 = vmatpush2.msra.mxu0 0.0
    %914 = vmatprep.subr.mxu0 0.0
    %915 = vmatpush2.msra.mxu0 0.0
    %916 = vmatprep.subr.mxu0 0.0
    %917 = vmatpush2.msra.mxu0 0.0
    %918 = vmatprep.subr.mxu0 0.0
    %919 = vmatpush2.msra.mxu0 0.0
    %920 = vmatprep.subr.mxu0 0.0
    %921 = vmatpush2.msra.mxu0 0.0
    %922 = vmatprep.subr.mxu0 0.0
    %923 = vmatpush2.msra.mxu0 0.0
    %924 = vmatprep.subr.mxu0 0.0
    %925 = vmatpush2.msra.mxu0 0.0
    %926 = vmatprep.mubr.f32.mxu0 0.0
    %927 = vmatmul.mubr.f32.gmra.mxu0 %v769
    %v928 = vpop.f32.mrf.mxu0
    %v929 = vadd.f32 %v860, %v928
    %v930 = vpop.f32.mrf.mxu0
    %931 = vmatprep.mubr.f32.mxu0 0.0
    %932 = vmatmul.mubr.f32.gmra.mxu0 %v772
    %v933 = vpop.f32.mrf.mxu0
    %v934 = vadd.f32 %v860, %v933
    %v935 = vpop.f32.mrf.mxu0
    %936 = vdwg.mxu0
    %s937 = scalar_lea.vmem %s1, 320
    %v938 = vld [vmem:[%s937] sm:$0xff]
    %v939 = vld [vmem:[%s937 + $0x8] sm:$0xff]
    %v940 = vld [vmem:[%s937 + $0x10] sm:$0xff]
    %v941 = vld [vmem:[%s937 + $0x18] sm:$0xff]
    %s942 = scalar_lea.vmem %s2, 10
    %v943 = vld [vmem:[%s942] sm:$0x1]
    %v945 = vlaneseq
    %v946 = vshrl.u32 %v945, 7
    %v947 = vsub.s32 0, %v946
    %v948 = vrot.slane %v943, %v947
    %950 = vmatprep.subr.mxu0 0.0
    %951 = vmatpush1.msra.mxu0 0.0
    %952 = vmatprep.subr.mxu0 0.0
    %953 = vmatpush1.msra.mxu0 0.0
    %954 = vmatprep.subr.mxu0 0.0
    %955 = vmatpush1.msra.mxu0 0.0
    %956 = vmatprep.subr.mxu0 0.0
    %957 = vmatpush1.msra.mxu0 0.0
    %958 = vmatprep.subr.mxu0 0.0
    %959 = vmatpush1.msra.mxu0 0.0
    %960 = vmatprep.subr.mxu0 0.0
    %961 = vmatpush1.msra.mxu0 0.0
    %962 = vmatprep.subr.mxu0 0.0
    %963 = vmatpush1.msra.mxu0 0.0
    %964 = vmatprep.subr.mxu0 0.0
    %965 = vmatpush1.msra.mxu0 0.0
    %966 = vmatprep.subr.mxu0 0.0
    %967 = vmatpush1.msra.mxu0 0.0
    %968 = vmatprep.subr.mxu0 0.0
    %969 = vmatpush1.msra.mxu0 0.0
    %970 = vmatprep.subr.mxu0 0.0
    %971 = vmatpush1.msra.mxu0 0.0
    %972 = vmatprep.subr.mxu0 0.0
    %973 = vmatpush1.msra.mxu0 0.0
    %974 = vmatprep.subr.mxu0 0.0
    %975 = vmatpush1.msra.mxu0 %v941
    %976 = vmatprep.subr.mxu0 0.0
    %977 = vmatpush1.msra.mxu0 %v940
    %978 = vmatprep.subr.mxu0 0.0
    %979 = vmatpush1.msra.mxu0 %v939
    %980 = vmatprep.subr.mxu0 0.0
    %981 = vmatpush1.msra.mxu0 %v938
    %982 = vmatprep.subr.mxu0 0.0
    %983 = vmatpush2.msra.mxu0 0.0
    %984 = vmatprep.subr.mxu0 0.0
    %985 = vmatpush2.msra.mxu0 0.0
    %986 = vmatprep.subr.mxu0 0.0
    %987 = vmatpush2.msra.mxu0 0.0
    %988 = vmatprep.subr.mxu0 0.0
    %989 = vmatpush2.msra.mxu0 0.0
    %990 = vmatprep.subr.mxu0 0.0
    %991 = vmatpush2.msra.mxu0 0.0
    %992 = vmatprep.subr.mxu0 0.0
    %993 = vmatpush2.msra.mxu0 0.0
    %994 = vmatprep.subr.mxu0 0.0
    %995 = vmatpush2.msra.mxu0 0.0
    %996 = vmatprep.subr.mxu0 0.0
    %997 = vmatpush2.msra.mxu0 0.0
    %998 = vmatprep.subr.mxu0 0.0
    %999 = vmatpush2.msra.mxu0 0.0
    %1000 = vmatprep.subr.mxu0 0.0
    %1001 = vmatpush2.msra.mxu0 0.0
    %1002 = vmatprep.subr.mxu0 0.0
    %1003 = vmatpush2.msra.mxu0 0.0
    %1004 = vmatprep.subr.mxu0 0.0
    %1005 = vmatpush2.msra.mxu0 0.0
    %1006 = vmatprep.subr.mxu0 0.0
    %1007 = vmatpush2.msra.mxu0 0.0
    %1008 = vmatprep.subr.mxu0 0.0
    %1009 = vmatpush2.msra.mxu0 0.0
    %1010 = vmatprep.subr.mxu0 0.0
    %1011 = vmatpush2.msra.mxu0 0.0
    %1012 = vmatprep.subr.mxu0 0.0
    %1013 = vmatpush2.msra.mxu0 0.0
    %1014 = vmatprep.mubr.f32.mxu0 0.0
    %1015 = vmatmul.mubr.f32.gmra.mxu0 %v769
    %v1016 = vpop.f32.mrf.mxu0
    %v1017 = vadd.f32 %v948, %v1016
    %v1018 = vpop.f32.mrf.mxu0
    %1019 = vmatprep.mubr.f32.mxu0 0.0
    %1020 = vmatmul.mubr.f32.gmra.mxu0 %v772
    %v1021 = vpop.f32.mrf.mxu0
    %v1022 = vadd.f32 %v948, %v1021
    %v1023 = vpop.f32.mrf.mxu0
    %1024 = vdwg.mxu0
    %s1025 = scalar_lea.vmem %s1, 352
    %v1026 = vld [vmem:[%s1025] sm:$0xff]
    %v1027 = vld [vmem:[%s1025 + $0x8] sm:$0xff]
    %v1028 = vld [vmem:[%s1025 + $0x10] sm:$0xff]
    %v1029 = vld [vmem:[%s1025 + $0x18] sm:$0xff]
    %s1030 = scalar_lea.vmem %s2, 11
    %v1031 = vld [vmem:[%s1030] sm:$0x1]
    %v1033 = vlaneseq
    %v1034 = vshrl.u32 %v1033, 7
    %v1035 = vsub.s32 0, %v1034
    %v1036 = vrot.slane %v1031, %v1035
    %1038 = vmatprep.subr.mxu0 0.0
    %1039 = vmatpush1.msra.mxu0 0.0
    %1040 = vmatprep.subr.mxu0 0.0
    %1041 = vmatpush1.msra.mxu0 0.0
    %1042 = vmatprep.subr.mxu0 0.0
    %1043 = vmatpush1.msra.mxu0 0.0
    %1044 = vmatprep.subr.mxu0 0.0
    %1045 = vmatpush1.msra.mxu0 0.0
    %1046 = vmatprep.subr.mxu0 0.0
    %1047 = vmatpush1.msra.mxu0 0.0
    %1048 = vmatprep.subr.mxu0 0.0
    %1049 = vmatpush1.msra.mxu0 0.0
    %1050 = vmatprep.subr.mxu0 0.0
    %1051 = vmatpush1.msra.mxu0 0.0
    %1052 = vmatprep.subr.mxu0 0.0
    %1053 = vmatpush1.msra.mxu0 0.0
    %1054 = vmatprep.subr.mxu0 0.0
    %1055 = vmatpush1.msra.mxu0 0.0
    %1056 = vmatprep.subr.mxu0 0.0
    %1057 = vmatpush1.msra.mxu0 0.0
    %1058 = vmatprep.subr.mxu0 0.0
    %1059 = vmatpush1.msra.mxu0 0.0
    %1060 = vmatprep.subr.mxu0 0.0
    %1061 = vmatpush1.msra.mxu0 0.0
    %1062 = vmatprep.subr.mxu0 0.0
    %1063 = vmatpush1.msra.mxu0 %v1029
    %1064 = vmatprep.subr.mxu0 0.0
    %1065 = vmatpush1.msra.mxu0 %v1028
    %1066 = vmatprep.subr.mxu0 0.0
    %1067 = vmatpush1.msra.mxu0 %v1027
    %1068 = vmatprep.subr.mxu0 0.0
    %1069 = vmatpush1.msra.mxu0 %v1026
    %1070 = vmatprep.subr.mxu0 0.0
    %1071 = vmatpush2.msra.mxu0 0.0
    %1072 = vmatprep.subr.mxu0 0.0
    %1073 = vmatpush2.msra.mxu0 0.0
    %1074 = vmatprep.subr.mxu0 0.0
    %1075 = vmatpush2.msra.mxu0 0.0
    %1076 = vmatprep.subr.mxu0 0.0
    %1077 = vmatpush2.msra.mxu0 0.0
    %1078 = vmatprep.subr.mxu0 0.0
    %1079 = vmatpush2.msra.mxu0 0.0
    %1080 = vmatprep.subr.mxu0 0.0
    %1081 = vmatpush2.msra.mxu0 0.0
    %1082 = vmatprep.subr.mxu0 0.0
    %1083 = vmatpush2.msra.mxu0 0.0
    %1084 = vmatprep.subr.mxu0 0.0
    %1085 = vmatpush2.msra.mxu0 0.0
    %1086 = vmatprep.subr.mxu0 0.0
    %1087 = vmatpush2.msra.mxu0 0.0
    %1088 = vmatprep.subr.mxu0 0.0
    %1089 = vmatpush2.msra.mxu0 0.0
    %1090 = vmatprep.subr.mxu0 0.0
    %1091 = vmatpush2.msra.mxu0 0.0
    %1092 = vmatprep.subr.mxu0 0.0
    %1093 = vmatpush2.msra.mxu0 0.0
    %1094 = vmatprep.subr.mxu0 0.0
    %1095 = vmatpush2.msra.mxu0 0.0
    %1096 = vmatprep.subr.mxu0 0.0
    %1097 = vmatpush2.msra.mxu0 0.0
    %1098 = vmatprep.subr.mxu0 0.0
    %1099 = vmatpush2.msra.mxu0 0.0
    %1100 = vmatprep.subr.mxu0 0.0
    %1101 = vmatpush2.msra.mxu0 0.0
    %1102 = vmatprep.mubr.f32.mxu0 0.0
    %1103 = vmatmul.mubr.f32.gmra.mxu0 %v769
    %v1104 = vpop.f32.mrf.mxu0
    %v1105 = vadd.f32 %v1036, %v1104
    %v1106 = vpop.f32.mrf.mxu0
    %1107 = vmatprep.mubr.f32.mxu0 0.0
    %1108 = vmatmul.mubr.f32.gmra.mxu0 %v772
    %v1109 = vpop.f32.mrf.mxu0
    %v1110 = vadd.f32 %v1036, %v1109
    %v1111 = vpop.f32.mrf.mxu0
    %1112 = vdwg.mxu0
    %v1113 = vld [vmem:[%s5] sm:$0xff]
    %v1114 = vld [vmem:[%s5 + $0x8] sm:$0xff]
    %v1115 = vld [vmem:[%s5 + $0x10] sm:$0xff]
    %v1116 = vld [vmem:[%s5 + $0x18] sm:$0xff]
    %v1117 = vld [vmem:[%s5 + $0x20] sm:$0xff]
    %v1118 = vld [vmem:[%s5 + $0x28] sm:$0xff]
    %v1119 = vld [vmem:[%s5 + $0x30] sm:$0xff]
    %v1120 = vld [vmem:[%s5 + $0x38] sm:$0xff]
    %v1121 = vmul.f32 %v1113, %v1113
    %v1122 = vmul.f32 %v1114, %v1114
    %v1123 = vmul.f32 %v1115, %v1115
    %v1124 = vmul.f32 %v1116, %v1116
    %v1125 = vmul.f32 %v1117, %v1117
    %v1126 = vmul.f32 %v1118, %v1118
    %v1127 = vmul.f32 %v1119, %v1119
    %v1128 = vmul.f32 %v1120, %v1120
    %vm1129 = vcmask 64512
    %v1130 = vsel %vm1129, %v1121, 0.0
    %1131 = vadd.xlane.f32.xlu0 %v1130
    %v1132 = vpop.xlane.xlu0 %1131
    %v1133 = vsel %vm1129, %v1122, 0.0
    %1134 = vadd.xlane.f32.xlu0 %v1133
    %v1135 = vpop.xlane.xlu0 %1134
    %v1136 = vsel %vm1129, %v1123, 0.0
    %1137 = vadd.xlane.f32.xlu0 %v1136
    %v1138 = vpop.xlane.xlu0 %1137
    %v1139 = vsel %vm1129, %v1124, 0.0
    %1140 = vadd.xlane.f32.xlu0 %v1139
    %v1141 = vpop.xlane.xlu0 %1140
    %v1142 = vsel %vm1129, %v1125, 0.0
    %1143 = vadd.xlane.f32.xlu0 %v1142
    %v1144 = vpop.xlane.xlu0 %1143
    %v1145 = vsel %vm1129, %v1126, 0.0
    %1146 = vadd.xlane.f32.xlu0 %v1145
    %v1147 = vpop.xlane.xlu0 %1146
    %v1148 = vsel %vm1129, %v1127, 0.0
    %1149 = vadd.xlane.f32.xlu0 %v1148
    %v1150 = vpop.xlane.xlu0 %1149
    %v1151 = vsel %vm1129, %v1128, 0.0
    %1152 = vadd.xlane.f32.xlu0 %v1151
    %v1153 = vpop.xlane.xlu0 %1152
    %v1155 = vsel %vm1129, %v1113, 0
    %v1158 = vsel %vm1129, %v1114, 0
    %v1161 = vsel %vm1129, %v1115, 0
    %v1164 = vsel %vm1129, %v1116, 0
    %v1167 = vsel %vm1129, %v1117, 0
    %v1170 = vsel %vm1129, %v1118, 0
    %v1173 = vsel %vm1129, %v1119, 0
    %v1176 = vsel %vm1129, %v1120, 0
    %v1179 = vsel %vm1129, %v841, 0
    %v1182 = vsel %vm1129, %v846, 0
    %v1185 = vsel %vm1129, %v929, 0
    %v1188 = vsel %vm1129, %v934, 0
    %v1191 = vsel %vm1129, %v1017, 0
    %v1194 = vsel %vm1129, %v1022, 0
    %v1197 = vsel %vm1129, %v1105, 0
    %v1200 = vsel %vm1129, %v1110, 0
    %1202 = vmatprep.subr.mxu0 0.0
    %1203 = vmatpush1.xpose.msra.mxu0 0.0
    %1204 = vmatprep.subr.mxu0 0.0
    %1205 = vmatpush1.xpose.msra.mxu0 0.0
    %1206 = vmatprep.subr.mxu0 0.0
    %1207 = vmatpush1.xpose.msra.mxu0 0.0
    %1208 = vmatprep.subr.mxu0 0.0
    %1209 = vmatpush1.xpose.msra.mxu0 0.0
    %1210 = vmatprep.subr.mxu0 0.0
    %1211 = vmatpush1.xpose.msra.mxu0 0.0
    %1212 = vmatprep.subr.mxu0 0.0
    %1213 = vmatpush1.xpose.msra.mxu0 0.0
    %1214 = vmatprep.subr.mxu0 0.0
    %1215 = vmatpush1.xpose.msra.mxu0 0.0
    %1216 = vmatprep.subr.mxu0 0.0
    %1217 = vmatpush1.xpose.msra.mxu0 0.0
    %1218 = vmatprep.subr.mxu0 0.0
    %1219 = vmatpush1.xpose.msra.mxu0 %v1200
    %1220 = vmatprep.subr.mxu0 0.0
    %1221 = vmatpush1.xpose.msra.mxu0 %v1197
    %1222 = vmatprep.subr.mxu0 0.0
    %1223 = vmatpush1.xpose.msra.mxu0 %v1194
    %1224 = vmatprep.subr.mxu0 0.0
    %1225 = vmatpush1.xpose.msra.mxu0 %v1191
    %1226 = vmatprep.subr.mxu0 0.0
    %1227 = vmatpush1.xpose.msra.mxu0 %v1188
    %1228 = vmatprep.subr.mxu0 0.0
    %1229 = vmatpush1.xpose.msra.mxu0 %v1185
    %1230 = vmatprep.subr.mxu0 0.0
    %1231 = vmatpush1.xpose.msra.mxu0 %v1182
    %1232 = vmatprep.subr.mxu0 0.0
    %1233 = vmatpush1.xpose.msra.mxu0 %v1179
    %1234 = vmatprep.subr.mxu0 0.0
    %1235 = vmatpush2.xpose.msra.mxu0 0.0
    %1236 = vmatprep.subr.mxu0 0.0
    %1237 = vmatpush2.xpose.msra.mxu0 0.0
    %1238 = vmatprep.subr.mxu0 0.0
    %1239 = vmatpush2.xpose.msra.mxu0 0.0
    %1240 = vmatprep.subr.mxu0 0.0
    %1241 = vmatpush2.xpose.msra.mxu0 0.0
    %1242 = vmatprep.subr.mxu0 0.0
    %1243 = vmatpush2.xpose.msra.mxu0 0.0
    %1244 = vmatprep.subr.mxu0 0.0
    %1245 = vmatpush2.xpose.msra.mxu0 0.0
    %1246 = vmatprep.subr.mxu0 0.0
    %1247 = vmatpush2.xpose.msra.mxu0 0.0
    %1248 = vmatprep.subr.mxu0 0.0
    %1249 = vmatpush2.xpose.msra.mxu0 0.0
    %1250 = vmatprep.subr.mxu0 0.0
    %1251 = vmatpush2.xpose.msra.mxu0 0.0
    %1252 = vmatprep.subr.mxu0 0.0
    %1253 = vmatpush2.xpose.msra.mxu0 0.0
    %1254 = vmatprep.subr.mxu0 0.0
    %1255 = vmatpush2.xpose.msra.mxu0 0.0
    %1256 = vmatprep.subr.mxu0 0.0
    %1257 = vmatpush2.xpose.msra.mxu0 0.0
    %1258 = vmatprep.subr.mxu0 0.0
    %1259 = vmatpush2.xpose.msra.mxu0 0.0
    %1260 = vmatprep.subr.mxu0 0.0
    %1261 = vmatpush2.xpose.msra.mxu0 0.0
    %1262 = vmatprep.subr.mxu0 0.0
    %1263 = vmatpush2.xpose.msra.mxu0 0.0
    %1264 = vmatprep.subr.mxu0 0.0
    %1265 = vmatpush2.xpose.msra.mxu0 0.0
    %1266 = vmatprep.mubr.f32.mxu0 0.0
    %1267 = vmatmul.mubr.f32.gmra.mxu0 %v1155
    %v1268 = vpop.f32.mrf.mxu0
    %v1269 = vadd.f32 0.0, %v1268
    %v1270 = vpop.f32.mrf.mxu0
    %1271 = vmatprep.mubr.f32.mxu0 0.0
    %1272 = vmatmul.mubr.f32.gmra.mxu0 %v1158
    %v1273 = vpop.f32.mrf.mxu0
    %v1274 = vadd.f32 0.0, %v1273
    %v1275 = vpop.f32.mrf.mxu0
    %1276 = vmatprep.mubr.f32.mxu0 0.0
    %1277 = vmatmul.mubr.f32.gmra.mxu0 %v1161
    %v1278 = vpop.f32.mrf.mxu0
    %v1279 = vadd.f32 0.0, %v1278
    %v1280 = vpop.f32.mrf.mxu0
    %1281 = vmatprep.mubr.f32.mxu0 0.0
    %1282 = vmatmul.mubr.f32.gmra.mxu0 %v1164
    %v1283 = vpop.f32.mrf.mxu0
    %v1284 = vadd.f32 0.0, %v1283
    %v1285 = vpop.f32.mrf.mxu0
    %1286 = vmatprep.mubr.f32.mxu0 0.0
    %1287 = vmatmul.mubr.f32.gmra.mxu0 %v1167
    %v1288 = vpop.f32.mrf.mxu0
    %v1289 = vadd.f32 0.0, %v1288
    %v1290 = vpop.f32.mrf.mxu0
    %1291 = vmatprep.mubr.f32.mxu0 0.0
    %1292 = vmatmul.mubr.f32.gmra.mxu0 %v1170
    %v1293 = vpop.f32.mrf.mxu0
    %v1294 = vadd.f32 0.0, %v1293
    %v1295 = vpop.f32.mrf.mxu0
    %1296 = vmatprep.mubr.f32.mxu0 0.0
    %1297 = vmatmul.mubr.f32.gmra.mxu0 %v1173
    %v1298 = vpop.f32.mrf.mxu0
    %v1299 = vadd.f32 0.0, %v1298
    %v1300 = vpop.f32.mrf.mxu0
    %1301 = vmatprep.mubr.f32.mxu0 0.0
    %1302 = vmatmul.mubr.f32.gmra.mxu0 %v1176
    %v1303 = vpop.f32.mrf.mxu0
    %v1304 = vadd.f32 0.0, %v1303
    %v1305 = vpop.f32.mrf.mxu0
    %1306 = vdwg.mxu0
    %v1307 = vmul.f32 %v1269, 2.0
    %v1308 = vmul.f32 %v1274, 2.0
    %v1309 = vmul.f32 %v1279, 2.0
    %v1310 = vmul.f32 %v1284, 2.0
    %v1311 = vmul.f32 %v1289, 2.0
    %v1312 = vmul.f32 %v1294, 2.0
    %v1313 = vmul.f32 %v1299, 2.0
    %v1314 = vmul.f32 %v1304, 2.0
    %v1315 = vsub.f32 %v1132, %v1307
    %v1316 = vsub.f32 %v1135, %v1308
    %v1317 = vsub.f32 %v1138, %v1309
    %v1318 = vsub.f32 %v1141, %v1310
    %v1319 = vsub.f32 %v1144, %v1311
    %v1320 = vsub.f32 %v1147, %v1312
    %v1321 = vsub.f32 %v1150, %v1313
    %v1322 = vsub.f32 %v1153, %v1314
    %v1323 = vlaneseq
    %v1324 = vshrl.u32 %v1323, 7
    %v1325 = vadd.s32 %v1324, 8
    %v1326 = vadd.s32 %v1324, 16
    %v1327 = vadd.s32 %v1324, 24
    %v1328 = vadd.s32 %v1324, 32
    %v1329 = vadd.s32 %v1324, 40
    %v1330 = vadd.s32 %v1324, 48
    %v1331 = vadd.s32 %v1324, 56
    %v1332 = vcvt.s32.f32 %v1324
    %v1333 = vcvt.s32.f32 %v1325
    %v1334 = vcvt.s32.f32 %v1326
    %v1335 = vcvt.s32.f32 %v1327
    %v1336 = vcvt.s32.f32 %v1328
    %v1337 = vcvt.s32.f32 %v1329
    %v1338 = vcvt.s32.f32 %v1330
    %v1339 = vcvt.s32.f32 %v1331
    %vm1340 = vcmask 523264
    %v1341 = vsel %vm1340, %v1315, inf
    %v1342 = vsel %vm1340, %v1316, inf
    %v1343 = vsel %vm1340, %v1317, inf
    %v1344 = vsel %vm1340, %v1318, inf
    %v1345 = vsel %vm1340, %v1319, inf
    %v1346 = vmin.f32 %v1341, %v1345
    %v1347 = vsel %vm1340, %v1320, inf
    %v1348 = vmin.f32 %v1342, %v1347
    %v1349 = vsel %vm1340, %v1321, inf
    %v1350 = vmin.f32 %v1343, %v1349
    %v1351 = vsel %vm1340, %v1322, inf
    %v1352 = vmin.f32 %v1344, %v1351
    %v1353 = vmin.f32 %v1346, %v1348
    %v1354 = vmin.f32 %v1350, %v1352
    %v1355 = vmin.f32 %v1353, %v1354
    %v1356 = vrot.slane %v1355, 4
    %v1357 = vmin.f32 %v1355, %v1356
    %v1358 = vrot.slane %v1357, 2
    %v1359 = vmin.f32 %v1357, %v1358
    %v1360 = vrot.slane %v1359, 1
    %v1361 = vmin.f32 %v1359, %v1360
    %vm1362 = vcmp.eq.f32.partialorder %v1315, %v1361
    %vm1363 = vcmp.eq.f32.partialorder %v1316, %v1361
    %vm1364 = vcmp.eq.f32.partialorder %v1317, %v1361
    %vm1365 = vcmp.eq.f32.partialorder %v1318, %v1361
    %vm1366 = vcmp.eq.f32.partialorder %v1319, %v1361
    %vm1367 = vcmp.eq.f32.partialorder %v1320, %v1361
    %vm1368 = vcmp.eq.f32.partialorder %v1321, %v1361
    %vm1369 = vcmp.eq.f32.partialorder %v1322, %v1361
    %v1370 = vsel %vm1362, %v1332, 64.0
    %v1371 = vsel %vm1363, %v1333, 64.0
    %v1372 = vsel %vm1364, %v1334, 64.0
    %v1373 = vsel %vm1365, %v1335, 64.0
    %v1374 = vsel %vm1366, %v1336, 64.0
    %v1375 = vsel %vm1367, %v1337, 64.0
    %v1376 = vsel %vm1368, %v1338, 64.0
    %v1377 = vsel %vm1369, %v1339, 64.0
    %v1378 = vsel %vm1340, %v1370, inf
    %v1379 = vsel %vm1340, %v1371, inf
    %v1380 = vsel %vm1340, %v1372, inf
    %v1381 = vsel %vm1340, %v1373, inf
    %v1382 = vsel %vm1340, %v1374, inf
    %v1383 = vmin.f32 %v1378, %v1382
    %v1384 = vsel %vm1340, %v1375, inf
    %v1385 = vmin.f32 %v1379, %v1384
    %v1386 = vsel %vm1340, %v1376, inf
    %v1387 = vmin.f32 %v1380, %v1386
    %v1388 = vsel %vm1340, %v1377, inf
    %v1389 = vmin.f32 %v1381, %v1388
    %v1390 = vmin.f32 %v1383, %v1385
    %v1391 = vmin.f32 %v1387, %v1389
    %v1392 = vmin.f32 %v1390, %v1391
    %v1393 = vrot.slane %v1392, 4
    %v1394 = vmin.f32 %v1392, %v1393
    %v1395 = vrot.slane %v1394, 2
    %v1396 = vmin.f32 %v1394, %v1395
    %v1397 = vrot.slane %v1396, 1
    %v1398 = vmin.f32 %v1396, %v1397
    %v1399 = vcvt.f32.s32.to.zero.pseudo %v1398
    %v1400 = vld [vmem:[%s6] sm:$0x1]
    %vm1401 = vcmp.ge.s32.totalorder %v1400, 0
    %v1402 = vsel %vm1401, %v1400, %v1399
    %vm1403 = vcmask 516096
    %1404 = vst.msk [vmem:[#allocation4] sm:$0x1] %vm1403, %v1402
    %v1405 = vlaneseq
    %v1406 = vshrl.u32 %v1405, 7
    %v1407 = vsub.s32 0, %v1406
    %v1408 = vrot.slane %v1402, %v1407
    %vm1409 = vcmp.eq.s32.totalorder %v1324, %v1408
    %vm1410 = vcmp.eq.s32.totalorder %v1325, %v1408
    %vm1411 = vcmp.eq.s32.totalorder %v1326, %v1408
    %vm1412 = vcmp.eq.s32.totalorder %v1327, %v1408
    %vm1413 = vcmp.eq.s32.totalorder %v1328, %v1408
    %vm1414 = vcmp.eq.s32.totalorder %v1329, %v1408
    %vm1415 = vcmp.eq.s32.totalorder %v1330, %v1408
    %vm1416 = vcmp.eq.s32.totalorder %v1331, %v1408
    %v1417 = vsel %vm1409, 1, 0
    %v1418 = vsel %vm1410, 1, 0
    %v1419 = vsel %vm1411, 1, 0
    %v1420 = vsel %vm1412, 1, 0
    %v1421 = vsel %vm1413, 1, 0
    %v1422 = vsel %vm1414, 1, 0
    %v1423 = vsel %vm1415, 1, 0
    %v1424 = vsel %vm1416, 1, 0
    %v1425 = vcvt.s32.f32 %v1417
    %v1426 = vcvt.s32.f32 %v1418
    %v1427 = vcvt.s32.f32 %v1419
    %v1428 = vcvt.s32.f32 %v1420
    %v1429 = vcvt.s32.f32 %v1421
    %v1430 = vcvt.s32.f32 %v1422
    %v1431 = vcvt.s32.f32 %v1423
    %v1432 = vcvt.s32.f32 %v1424
    %v1433 = vsel %vm1340, %v1425, 0.0
    %1434 = vadd.xlane.f32.xlu0 %v1433
    %v1435 = vpop.xlane.xlu0 %1434
    %v1436 = vsel %vm1340, %v1426, 0.0
    %1437 = vadd.xlane.f32.xlu0 %v1436
    %v1438 = vpop.xlane.xlu0 %1437
    %v1439 = vsel %vm1340, %v1427, 0.0
    %1440 = vadd.xlane.f32.xlu0 %v1439
    %v1441 = vpop.xlane.xlu0 %1440
    %v1442 = vsel %vm1340, %v1428, 0.0
    %1443 = vadd.xlane.f32.xlu0 %v1442
    %v1444 = vpop.xlane.xlu0 %1443
    %v1445 = vsel %vm1340, %v1429, 0.0
    %1446 = vadd.xlane.f32.xlu0 %v1445
    %v1447 = vpop.xlane.xlu0 %1446
    %v1448 = vsel %vm1340, %v1430, 0.0
    %1449 = vadd.xlane.f32.xlu0 %v1448
    %v1450 = vpop.xlane.xlu0 %1449
    %v1451 = vsel %vm1340, %v1431, 0.0
    %1452 = vadd.xlane.f32.xlu0 %v1451
    %v1453 = vpop.xlane.xlu0 %1452
    %v1454 = vsel %vm1340, %v1432, 0.0
    %1455 = vadd.xlane.f32.xlu0 %v1454
    %v1456 = vpop.xlane.xlu0 %1455
    %v1457 = vmul.f32 %v1435, %v1132
    %v1458 = vmul.f32 %v1438, %v1135
    %v1459 = vmul.f32 %v1441, %v1138
    %v1460 = vmul.f32 %v1444, %v1141
    %v1461 = vmul.f32 %v1447, %v1144
    %v1462 = vmul.f32 %v1450, %v1147
    %v1463 = vmul.f32 %v1453, %v1150
    %v1464 = vmul.f32 %v1456, %v1153
    %v1465 = vadd.f32 %v1457, %v1458
    %v1466 = vadd.f32 %v1465, %v1459
    %v1467 = vadd.f32 %v1466, %v1460
    %v1468 = vadd.f32 %v1467, %v1461
    %v1469 = vadd.f32 %v1468, %v1462
    %v1470 = vadd.f32 %v1469, %v1463
    %v1471 = vadd.f32 %v1470, %v1464
    %v1472 = vrot.slane %v1471, 4
    %v1473 = vadd.f32 %v1471, %v1472
    %v1474 = vrot.slane %v1473, 2
    %v1475 = vadd.f32 %v1473, %v1474
    %v1476 = vrot.slane %v1475, 1
    %v1477 = vadd.f32 %v1475, %v1476
    %v1478 = vmul.f32 %v1425, %v1269
    %v1479 = vmul.f32 %v1426, %v1274
    %v1480 = vmul.f32 %v1427, %v1279
    %v1481 = vmul.f32 %v1428, %v1284
    %v1482 = vmul.f32 %v1429, %v1289
    %v1483 = vmul.f32 %v1430, %v1294
    %v1484 = vmul.f32 %v1431, %v1299
    %v1485 = vmul.f32 %v1432, %v1304
    %v1486 = vsel %vm1340, %v1478, 0.0
    %1487 = vadd.xlane.f32.xlu0 %v1486
    %v1488 = vpop.xlane.xlu0 %1487
    %v1489 = vsel %vm1340, %v1479, 0.0
    %1490 = vadd.xlane.f32.xlu0 %v1489
    %v1491 = vpop.xlane.xlu0 %1490
    %v1492 = vsel %vm1340, %v1480, 0.0
    %1493 = vadd.xlane.f32.xlu0 %v1492
    %v1494 = vpop.xlane.xlu0 %1493
    %v1495 = vsel %vm1340, %v1481, 0.0
    %1496 = vadd.xlane.f32.xlu0 %v1495
    %v1497 = vpop.xlane.xlu0 %1496
    %v1498 = vsel %vm1340, %v1482, 0.0
    %1499 = vadd.xlane.f32.xlu0 %v1498
    %v1500 = vpop.xlane.xlu0 %1499
    %v1501 = vsel %vm1340, %v1483, 0.0
    %1502 = vadd.xlane.f32.xlu0 %v1501
    %v1503 = vpop.xlane.xlu0 %1502
    %v1504 = vsel %vm1340, %v1484, 0.0
    %1505 = vadd.xlane.f32.xlu0 %v1504
    %v1506 = vpop.xlane.xlu0 %1505
    %v1507 = vsel %vm1340, %v1485, 0.0
    %1508 = vadd.xlane.f32.xlu0 %v1507
    %v1509 = vpop.xlane.xlu0 %1508
    %v1510 = vadd.f32 %v1488, %v1491
    %v1511 = vadd.f32 %v1510, %v1494
    %v1512 = vadd.f32 %v1511, %v1497
    %v1513 = vadd.f32 %v1512, %v1500
    %v1514 = vadd.f32 %v1513, %v1503
    %v1515 = vadd.f32 %v1514, %v1506
    %v1516 = vadd.f32 %v1515, %v1509
    %v1517 = vrot.slane %v1516, 4
    %v1518 = vadd.f32 %v1516, %v1517
    %v1519 = vrot.slane %v1518, 2
    %v1520 = vadd.f32 %v1518, %v1519
    %v1521 = vrot.slane %v1520, 1
    %v1522 = vadd.f32 %v1520, %v1521
    %v1523 = vmul.f32 %v841, %v841
    %v1524 = vmul.f32 %v846, %v846
    %v1525 = vmul.f32 %v929, %v929
    %v1526 = vmul.f32 %v934, %v934
    %v1527 = vmul.f32 %v1017, %v1017
    %v1528 = vmul.f32 %v1022, %v1022
    %v1529 = vmul.f32 %v1105, %v1105
    %v1530 = vmul.f32 %v1110, %v1110
    %v1531 = vsel %vm1129, %v1523, 0.0
    %1532 = vadd.xlane.f32.xlu0 %v1531
    %v1533 = vpop.xlane.xlu0 %1532
    %v1534 = vsel %vm1129, %v1524, 0.0
    %1535 = vadd.xlane.f32.xlu0 %v1534
    %v1536 = vpop.xlane.xlu0 %1535
    %v1537 = vsel %vm1129, %v1525, 0.0
    %1538 = vadd.xlane.f32.xlu0 %v1537
    %v1539 = vpop.xlane.xlu0 %1538
    %v1540 = vsel %vm1129, %v1526, 0.0
    %1541 = vadd.xlane.f32.xlu0 %v1540
    %v1542 = vpop.xlane.xlu0 %1541
    %v1543 = vsel %vm1129, %v1527, 0.0
    %1544 = vadd.xlane.f32.xlu0 %v1543
    %v1545 = vpop.xlane.xlu0 %1544
    %v1546 = vsel %vm1129, %v1528, 0.0
    %1547 = vadd.xlane.f32.xlu0 %v1546
    %v1548 = vpop.xlane.xlu0 %1547
    %v1549 = vsel %vm1129, %v1529, 0.0
    %1550 = vadd.xlane.f32.xlu0 %v1549
    %v1551 = vpop.xlane.xlu0 %1550
    %v1552 = vsel %vm1129, %v1530, 0.0
    %1553 = vadd.xlane.f32.xlu0 %v1552
    %v1554 = vpop.xlane.xlu0 %1553
    %v1555 = vadd.f32 %v1533, %v1536
    %v1556 = vadd.f32 %v1555, %v1539
    %v1557 = vadd.f32 %v1556, %v1542
    %v1558 = vadd.f32 %v1557, %v1545
    %v1559 = vadd.f32 %v1558, %v1548
    %v1560 = vadd.f32 %v1559, %v1551
    %v1561 = vadd.f32 %v1560, %v1554
    %v1562 = vrot.slane %v1561, 4
    %v1563 = vadd.f32 %v1561, %v1562
    %v1564 = vrot.slane %v1563, 2
    %v1565 = vadd.f32 %v1563, %v1564
    %v1566 = vrot.slane %v1565, 1
    %v1567 = vadd.f32 %v1565, %v1566
    %v1568 = vmul.f32 %v1522, 2.0
    %v1569 = vsub.f32 %v1477, %v1568
    %v1570 = vadd.f32 %v1569, %v1567
    %v1571 = vmul.f32 %v1570, 1.25
    %v1572 = vmul.f32 %v1571, 0.001953125
    %v1573 = vmul.f32 %v1435, 0.015625
    %v1574 = vmul.f32 %v1438, 0.015625
    %v1575 = vmul.f32 %v1441, 0.015625
    %v1576 = vmul.f32 %v1444, 0.015625
    %v1577 = vmul.f32 %v1447, 0.015625
    %v1578 = vmul.f32 %v1450, 0.015625
    %v1579 = vmul.f32 %v1453, 0.015625
    %v1580 = vmul.f32 %v1456, 0.015625
    %v1581 = vadd.f32 %v1573, 1e-10
    %v1582 = vadd.f32 %v1574, 1e-10
    %v1583 = vadd.f32 %v1575, 1e-10
    %v1584 = vadd.f32 %v1576, 1e-10
    %v1585 = vadd.f32 %v1577, 1e-10
    %v1586 = vadd.f32 %v1578, 1e-10
    %v1587 = vadd.f32 %v1579, 1e-10
    %v1588 = vadd.f32 %v1580, 1e-10
    %v1589 = vlog2.pop %v1581
    %v1590 = vmul.f32 %v1589, 0.6931472
    %v1591 = vlog2.pop %v1582
    %v1592 = vmul.f32 %v1591, 0.6931472
    %v1593 = vlog2.pop %v1583
    %v1594 = vmul.f32 %v1593, 0.6931472
    %v1595 = vlog2.pop %v1584
    %v1596 = vmul.f32 %v1595, 0.6931472
    %v1597 = vlog2.pop %v1585
    %v1598 = vmul.f32 %v1597, 0.6931472
    %v1599 = vlog2.pop %v1586
    %v1600 = vmul.f32 %v1599, 0.6931472
    %v1601 = vlog2.pop %v1587
    %v1602 = vmul.f32 %v1601, 0.6931472
    %v1603 = vlog2.pop %v1588
    %v1604 = vmul.f32 %v1603, 0.6931472
    %v1605 = vmul.f32 %v1573, %v1590
    %v1606 = vmul.f32 %v1574, %v1592
    %v1607 = vmul.f32 %v1575, %v1594
    %v1608 = vmul.f32 %v1576, %v1596
    %v1609 = vmul.f32 %v1577, %v1598
    %v1610 = vmul.f32 %v1578, %v1600
    %v1611 = vmul.f32 %v1579, %v1602
    %v1612 = vmul.f32 %v1580, %v1604
    %v1613 = vadd.f32 %v1605, %v1606
    %v1614 = vadd.f32 %v1613, %v1607
    %v1615 = vadd.f32 %v1614, %v1608
    %v1616 = vadd.f32 %v1615, %v1609
    %v1617 = vadd.f32 %v1616, %v1610
    %v1618 = vadd.f32 %v1617, %v1611
    %v1619 = vadd.f32 %v1618, %v1612
    %v1620 = vrot.slane %v1619, 4
    %v1621 = vadd.f32 %v1619, %v1620
    %v1622 = vrot.slane %v1621, 2
    %v1623 = vadd.f32 %v1621, %v1622
    %v1624 = vrot.slane %v1623, 1
    %v1625 = vadd.f32 %v1623, %v1624
    %v1626 = vsub.f32 0.0, %v1625
    %v1627 = vmul.f32 %v1626, 1.442695
    %v1628 = vpow.pop %v1627
    %v1629 = vlaneseq
    %v1630 = vand.u32 %v1629, 127
    %vm1631 = vcmp.eq.s32.totalorder %v1630, 0
    %v1632 = vsel %vm1631, %v1572, %v1628
    %vm1633 = vcmask 8192
    %1634 = vst.msk [vmem:[%s10] sm:$0x1] %vm1633, %v1632
    %v1636 = vsel %vm1129, %v119, 0
    %v1639 = vsel %vm1129, %v124, 0
    %v1642 = vsel %vm1129, %v207, 0
    %v1645 = vsel %vm1129, %v212, 0
    %v1648 = vsel %vm1129, %v295, 0
    %v1651 = vsel %vm1129, %v300, 0
    %v1654 = vsel %vm1129, %v383, 0
    %v1657 = vsel %vm1129, %v388, 0
    %v1660 = vsel %vm1129, %v480, 0
    %v1663 = vsel %vm1129, %v485, 0
    %v1666 = vsel %vm1129, %v568, 0
    %v1669 = vsel %vm1129, %v573, 0
    %v1672 = vsel %vm1129, %v656, 0
    %v1675 = vsel %vm1129, %v661, 0
    %v1678 = vsel %vm1129, %v744, 0
    %v1681 = vsel %vm1129, %v749, 0
    %1683 = vmatprep.subr.mxu0 0.0
    %1684 = vmatpush1.xpose.msra.mxu0 0.0
    %1685 = vmatprep.subr.mxu0 0.0
    %1686 = vmatpush1.xpose.msra.mxu0 0.0
    %1687 = vmatprep.subr.mxu0 0.0
    %1688 = vmatpush1.xpose.msra.mxu0 0.0
    %1689 = vmatprep.subr.mxu0 0.0
    %1690 = vmatpush1.xpose.msra.mxu0 0.0
    %1691 = vmatprep.subr.mxu0 0.0
    %1692 = vmatpush1.xpose.msra.mxu0 0.0
    %1693 = vmatprep.subr.mxu0 0.0
    %1694 = vmatpush1.xpose.msra.mxu0 0.0
    %1695 = vmatprep.subr.mxu0 0.0
    %1696 = vmatpush1.xpose.msra.mxu0 0.0
    %1697 = vmatprep.subr.mxu0 0.0
    %1698 = vmatpush1.xpose.msra.mxu0 0.0
    %1699 = vmatprep.subr.mxu0 0.0
    %1700 = vmatpush1.xpose.msra.mxu0 %v1681
    %1701 = vmatprep.subr.mxu0 0.0
    %1702 = vmatpush1.xpose.msra.mxu0 %v1678
    %1703 = vmatprep.subr.mxu0 0.0
    %1704 = vmatpush1.xpose.msra.mxu0 %v1675
    %1705 = vmatprep.subr.mxu0 0.0
    %1706 = vmatpush1.xpose.msra.mxu0 %v1672
    %1707 = vmatprep.subr.mxu0 0.0
    %1708 = vmatpush1.xpose.msra.mxu0 %v1669
    %1709 = vmatprep.subr.mxu0 0.0
    %1710 = vmatpush1.xpose.msra.mxu0 %v1666
    %1711 = vmatprep.subr.mxu0 0.0
    %1712 = vmatpush1.xpose.msra.mxu0 %v1663
    %1713 = vmatprep.subr.mxu0 0.0
    %1714 = vmatpush1.xpose.msra.mxu0 %v1660
    %1715 = vmatprep.subr.mxu0 0.0
    %1716 = vmatpush2.xpose.msra.mxu0 0.0
    %1717 = vmatprep.subr.mxu0 0.0
    %1718 = vmatpush2.xpose.msra.mxu0 0.0
    %1719 = vmatprep.subr.mxu0 0.0
    %1720 = vmatpush2.xpose.msra.mxu0 0.0
    %1721 = vmatprep.subr.mxu0 0.0
    %1722 = vmatpush2.xpose.msra.mxu0 0.0
    %1723 = vmatprep.subr.mxu0 0.0
    %1724 = vmatpush2.xpose.msra.mxu0 0.0
    %1725 = vmatprep.subr.mxu0 0.0
    %1726 = vmatpush2.xpose.msra.mxu0 0.0
    %1727 = vmatprep.subr.mxu0 0.0
    %1728 = vmatpush2.xpose.msra.mxu0 0.0
    %1729 = vmatprep.subr.mxu0 0.0
    %1730 = vmatpush2.xpose.msra.mxu0 0.0
    %1731 = vmatprep.subr.mxu0 0.0
    %1732 = vmatpush2.xpose.msra.mxu0 0.0
    %1733 = vmatprep.subr.mxu0 0.0
    %1734 = vmatpush2.xpose.msra.mxu0 0.0
    %1735 = vmatprep.subr.mxu0 0.0
    %1736 = vmatpush2.xpose.msra.mxu0 0.0
    %1737 = vmatprep.subr.mxu0 0.0
    %1738 = vmatpush2.xpose.msra.mxu0 0.0
    %1739 = vmatprep.subr.mxu0 0.0
    %1740 = vmatpush2.xpose.msra.mxu0 0.0
    %1741 = vmatprep.subr.mxu0 0.0
    %1742 = vmatpush2.xpose.msra.mxu0 0.0
    %1743 = vmatprep.subr.mxu0 0.0
    %1744 = vmatpush2.xpose.msra.mxu0 0.0
    %1745 = vmatprep.subr.mxu0 0.0
    %1746 = vmatpush2.xpose.msra.mxu0 0.0
    %1747 = vmatprep.mubr.f32.mxu0 0.0
    %1748 = vmatmul.mubr.f32.gmra.mxu0 %v1636
    %v1749 = vpop.f32.mrf.mxu0
    %v1750 = vadd.f32 0.0, %v1749
    %v1751 = vpop.f32.mrf.mxu0
    %1752 = vmatprep.mubr.f32.mxu0 0.0
    %1753 = vmatmul.mubr.f32.gmra.mxu0 %v1639
    %v1754 = vpop.f32.mrf.mxu0
    %v1755 = vadd.f32 0.0, %v1754
    %v1756 = vpop.f32.mrf.mxu0
    %1757 = vmatprep.mubr.f32.mxu0 0.0
    %1758 = vmatmul.mubr.f32.gmra.mxu0 %v1642
    %v1759 = vpop.f32.mrf.mxu0
    %v1760 = vadd.f32 0.0, %v1759
    %v1761 = vpop.f32.mrf.mxu0
    %1762 = vmatprep.mubr.f32.mxu0 0.0
    %1763 = vmatmul.mubr.f32.gmra.mxu0 %v1645
    %v1764 = vpop.f32.mrf.mxu0
    %v1765 = vadd.f32 0.0, %v1764
    %v1766 = vpop.f32.mrf.mxu0
    %1767 = vmatprep.mubr.f32.mxu0 0.0
    %1768 = vmatmul.mubr.f32.gmra.mxu0 %v1648
    %v1769 = vpop.f32.mrf.mxu0
    %v1770 = vadd.f32 0.0, %v1769
    %v1771 = vpop.f32.mrf.mxu0
    %1772 = vmatprep.mubr.f32.mxu0 0.0
    %1773 = vmatmul.mubr.f32.gmra.mxu0 %v1651
    %v1774 = vpop.f32.mrf.mxu0
    %v1775 = vadd.f32 0.0, %v1774
    %v1776 = vpop.f32.mrf.mxu0
    %1777 = vmatprep.mubr.f32.mxu0 0.0
    %1778 = vmatmul.mubr.f32.gmra.mxu0 %v1654
    %v1779 = vpop.f32.mrf.mxu0
    %v1780 = vadd.f32 0.0, %v1779
    %v1781 = vpop.f32.mrf.mxu0
    %1782 = vmatprep.mubr.f32.mxu0 0.0
    %1783 = vmatmul.mubr.f32.gmra.mxu0 %v1657
    %v1784 = vpop.f32.mrf.mxu0
    %v1785 = vadd.f32 0.0, %v1784
    %v1786 = vpop.f32.mrf.mxu0
    %1787 = vdwg.mxu0
    %v1788 = vcvt.s32.f32 %v1630
    %v1789 = vadd.f32 %v1332, 0.5
    %v1790 = vadd.f32 %v1333, 0.5
    %v1791 = vadd.f32 %v1334, 0.5
    %v1792 = vadd.f32 %v1335, 0.5
    %v1793 = vadd.f32 %v1336, 0.5
    %v1794 = vadd.f32 %v1337, 0.5
    %v1795 = vadd.f32 %v1338, 0.5
    %v1796 = vadd.f32 %v1339, 0.5
    %v1797 = vmul.f32 %v1789, 0.125
    %v1798 = vmul.f32 %v1790, 0.125
    %v1799 = vmul.f32 %v1791, 0.125
    %v1800 = vmul.f32 %v1792, 0.125
    %v1801 = vmul.f32 %v1793, 0.125
    %v1802 = vmul.f32 %v1794, 0.125
    %v1803 = vmul.f32 %v1795, 0.125
    %v1804 = vmul.f32 %v1796, 0.125
    %v1805 = vfloor.f32 %v1797
    %v1806 = vfloor.f32 %v1798
    %v1807 = vfloor.f32 %v1799
    %v1808 = vfloor.f32 %v1800
    %v1809 = vfloor.f32 %v1801
    %v1810 = vfloor.f32 %v1802
    %v1811 = vfloor.f32 %v1803
    %v1812 = vfloor.f32 %v1804
    %v1813 = vadd.f32 %v1788, 0.5
    %v1814 = vmul.f32 %v1813, 0.125
    %v1815 = vfloor.f32 %v1814
    %vm1816 = vcmp.eq.f32.partialorder %v1805, %v1815
    %vm1817 = vcmp.eq.f32.partialorder %v1806, %v1815
    %vm1818 = vcmp.eq.f32.partialorder %v1807, %v1815
    %vm1819 = vcmp.eq.f32.partialorder %v1808, %v1815
    %vm1820 = vcmp.eq.f32.partialorder %v1809, %v1815
    %vm1821 = vcmp.eq.f32.partialorder %v1810, %v1815
    %vm1822 = vcmp.eq.f32.partialorder %v1811, %v1815
    %vm1823 = vcmp.eq.f32.partialorder %v1812, %v1815
    %v1824 = vsel %vm1816, %v1750, -1e+30
    %v1825 = vsel %vm1817, %v1755, -1e+30
    %v1826 = vsel %vm1818, %v1760, -1e+30
    %v1827 = vsel %vm1819, %v1765, -1e+30
    %v1828 = vsel %vm1820, %v1770, -1e+30
    %v1829 = vsel %vm1821, %v1775, -1e+30
    %v1830 = vsel %vm1822, %v1780, -1e+30
    %v1831 = vsel %vm1823, %v1785, -1e+30
    %v1832 = vsel %vm1340, %v1824, -inf
    %1833 = vmax.xlane.f32.xlu0 %v1832
    %v1834 = vpop.xlane.xlu0 %1833
    %v1835 = vsel %vm1340, %v1825, -inf
    %1836 = vmax.xlane.f32.xlu0 %v1835
    %v1837 = vpop.xlane.xlu0 %1836
    %v1838 = vsel %vm1340, %v1826, -inf
    %1839 = vmax.xlane.f32.xlu0 %v1838
    %v1840 = vpop.xlane.xlu0 %1839
    %v1841 = vsel %vm1340, %v1827, -inf
    %1842 = vmax.xlane.f32.xlu0 %v1841
    %v1843 = vpop.xlane.xlu0 %1842
    %v1844 = vsel %vm1340, %v1828, -inf
    %1845 = vmax.xlane.f32.xlu0 %v1844
    %v1846 = vpop.xlane.xlu0 %1845
    %v1847 = vsel %vm1340, %v1829, -inf
    %1848 = vmax.xlane.f32.xlu0 %v1847
    %v1849 = vpop.xlane.xlu0 %1848
    %v1850 = vsel %vm1340, %v1830, -inf
    %1851 = vmax.xlane.f32.xlu0 %v1850
    %v1852 = vpop.xlane.xlu0 %1851
    %v1853 = vsel %vm1340, %v1831, -inf
    %1854 = vmax.xlane.f32.xlu0 %v1853
    %v1855 = vpop.xlane.xlu0 %1854
    %v1856 = vsub.f32 %v1824, %v1834
    %v1857 = vsub.f32 %v1825, %v1837
    %v1858 = vsub.f32 %v1826, %v1840
    %v1859 = vsub.f32 %v1827, %v1843
    %v1860 = vsub.f32 %v1828, %v1846
    %v1861 = vsub.f32 %v1829, %v1849
    %v1862 = vsub.f32 %v1830, %v1852
    %v1863 = vsub.f32 %v1831, %v1855
    %v1864 = vmul.f32 %v1856, 1.442695
    %v1865 = vpow.pop %v1864
    %v1866 = vmul.f32 %v1857, 1.442695
    %v1867 = vpow.pop %v1866
    %v1868 = vmul.f32 %v1858, 1.442695
    %v1869 = vpow.pop %v1868
    %v1870 = vmul.f32 %v1859, 1.442695
    %v1871 = vpow.pop %v1870
    %v1872 = vmul.f32 %v1860, 1.442695
    %v1873 = vpow.pop %v1872
    %v1874 = vmul.f32 %v1861, 1.442695
    %v1875 = vpow.pop %v1874
    %v1876 = vmul.f32 %v1862, 1.442695
    %v1877 = vpow.pop %v1876
    %v1878 = vmul.f32 %v1863, 1.442695
    %v1879 = vpow.pop %v1878
    %v1880 = vsel %vm1340, %v1865, 0.0
    %1881 = vadd.xlane.f32.xlu0 %v1880
    %v1882 = vpop.xlane.xlu0 %1881
    %v1883 = vsel %vm1340, %v1867, 0.0
    %1884 = vadd.xlane.f32.xlu0 %v1883
    %v1885 = vpop.xlane.xlu0 %1884
    %v1886 = vsel %vm1340, %v1869, 0.0
    %1887 = vadd.xlane.f32.xlu0 %v1886
    %v1888 = vpop.xlane.xlu0 %1887
    %v1889 = vsel %vm1340, %v1871, 0.0
    %1890 = vadd.xlane.f32.xlu0 %v1889
    %v1891 = vpop.xlane.xlu0 %1890
    %v1892 = vsel %vm1340, %v1873, 0.0
    %1893 = vadd.xlane.f32.xlu0 %v1892
    %v1894 = vpop.xlane.xlu0 %1893
    %v1895 = vsel %vm1340, %v1875, 0.0
    %1896 = vadd.xlane.f32.xlu0 %v1895
    %v1897 = vpop.xlane.xlu0 %1896
    %v1898 = vsel %vm1340, %v1877, 0.0
    %1899 = vadd.xlane.f32.xlu0 %v1898
    %v1900 = vpop.xlane.xlu0 %1899
    %v1901 = vsel %vm1340, %v1879, 0.0
    %1902 = vadd.xlane.f32.xlu0 %v1901
    %v1903 = vpop.xlane.xlu0 %1902
    %v1904 = vrcp.pop %v1882
    %v1905 = vmul.f32 %v1865, %v1904
    %v1906 = vrcp.pop %v1885
    %v1907 = vmul.f32 %v1867, %v1906
    %v1908 = vrcp.pop %v1888
    %v1909 = vmul.f32 %v1869, %v1908
    %v1910 = vrcp.pop %v1891
    %v1911 = vmul.f32 %v1871, %v1910
    %v1912 = vrcp.pop %v1894
    %v1913 = vmul.f32 %v1873, %v1912
    %v1914 = vrcp.pop %v1897
    %v1915 = vmul.f32 %v1875, %v1914
    %v1916 = vrcp.pop %v1900
    %v1917 = vmul.f32 %v1877, %v1916
    %v1918 = vrcp.pop %v1903
    %v1919 = vmul.f32 %v1879, %v1918
    %1920 = vst.msk [vmem:[%s8] sm:$0xff] %vm1340, %v1905
    %1921 = vst.msk [vmem:[%s8 + $0x8] sm:$0xff] %vm1340, %v1907
    %1922 = vst.msk [vmem:[%s8 + $0x10] sm:$0xff] %vm1340, %v1909
    %1923 = vst.msk [vmem:[%s8 + $0x18] sm:$0xff] %vm1340, %v1911
    %1924 = vst.msk [vmem:[%s8 + $0x20] sm:$0xff] %vm1340, %v1913
    %1925 = vst.msk [vmem:[%s8 + $0x28] sm:$0xff] %vm1340, %v1915
    %1926 = vst.msk [vmem:[%s8 + $0x30] sm:$0xff] %vm1340, %v1917
    %1927 = vst.msk [vmem:[%s8 + $0x38] sm:$0xff] %vm1340, %v1919
    %v1929 = vsel %vm1340, %v1905, 0
    %v1932 = vsel %vm1340, %v1907, 0
    %v1935 = vsel %vm1340, %v1909, 0
    %v1938 = vsel %vm1340, %v1911, 0
    %v1941 = vsel %vm1340, %v1913, 0
    %v1944 = vsel %vm1340, %v1915, 0
    %v1947 = vsel %vm1340, %v1917, 0
    %v1950 = vsel %vm1340, %v1919, 0
    %v1953 = vsel %vm1340, %v1425, 0
    %v1956 = vsel %vm1340, %v1426, 0
    %v1959 = vsel %vm1340, %v1427, 0
    %v1962 = vsel %vm1340, %v1428, 0
    %v1965 = vsel %vm1340, %v1429, 0
    %v1968 = vsel %vm1340, %v1430, 0
    %v1971 = vsel %vm1340, %v1431, 0
    %v1974 = vsel %vm1340, %v1432, 0
    %1976 = vmatprep.subr.mxu0 0.0
    %1977 = vmatpush1.xpose.msra.mxu0 0.0
    %1978 = vmatprep.subr.mxu0 0.0
    %1979 = vmatpush1.xpose.msra.mxu0 0.0
    %1980 = vmatprep.subr.mxu0 0.0
    %1981 = vmatpush1.xpose.msra.mxu0 0.0
    %1982 = vmatprep.subr.mxu0 0.0
    %1983 = vmatpush1.xpose.msra.mxu0 0.0
    %1984 = vmatprep.subr.mxu0 0.0
    %1985 = vmatpush1.xpose.msra.mxu0 0.0
    %1986 = vmatprep.subr.mxu0 0.0
    %1987 = vmatpush1.xpose.msra.mxu0 0.0
    %1988 = vmatprep.subr.mxu0 0.0
    %1989 = vmatpush1.xpose.msra.mxu0 0.0
    %1990 = vmatprep.subr.mxu0 0.0
    %1991 = vmatpush1.xpose.msra.mxu0 0.0
    %1992 = vmatprep.subr.mxu0 0.0
    %1993 = vmatpush1.xpose.msra.mxu0 %v1974
    %1994 = vmatprep.subr.mxu0 0.0
    %1995 = vmatpush1.xpose.msra.mxu0 %v1971
    %1996 = vmatprep.subr.mxu0 0.0
    %1997 = vmatpush1.xpose.msra.mxu0 %v1968
    %1998 = vmatprep.subr.mxu0 0.0
    %1999 = vmatpush1.xpose.msra.mxu0 %v1965
    %2000 = vmatprep.subr.mxu0 0.0
    %2001 = vmatpush1.xpose.msra.mxu0 %v1962
    %2002 = vmatprep.subr.mxu0 0.0
    %2003 = vmatpush1.xpose.msra.mxu0 %v1959
    %2004 = vmatprep.subr.mxu0 0.0
    %2005 = vmatpush1.xpose.msra.mxu0 %v1956
    %2006 = vmatprep.subr.mxu0 0.0
    %2007 = vmatpush1.xpose.msra.mxu0 %v1953
    %2008 = vmatprep.subr.mxu0 0.0
    %2009 = vmatpush2.xpose.msra.mxu0 0.0
    %2010 = vmatprep.subr.mxu0 0.0
    %2011 = vmatpush2.xpose.msra.mxu0 0.0
    %2012 = vmatprep.subr.mxu0 0.0
    %2013 = vmatpush2.xpose.msra.mxu0 0.0
    %2014 = vmatprep.subr.mxu0 0.0
    %2015 = vmatpush2.xpose.msra.mxu0 0.0
    %2016 = vmatprep.subr.mxu0 0.0
    %2017 = vmatpush2.xpose.msra.mxu0 0.0
    %2018 = vmatprep.subr.mxu0 0.0
    %2019 = vmatpush2.xpose.msra.mxu0 0.0
    %2020 = vmatprep.subr.mxu0 0.0
    %2021 = vmatpush2.xpose.msra.mxu0 0.0
    %2022 = vmatprep.subr.mxu0 0.0
    %2023 = vmatpush2.xpose.msra.mxu0 0.0
    %2024 = vmatprep.subr.mxu0 0.0
    %2025 = vmatpush2.xpose.msra.mxu0 0.0
    %2026 = vmatprep.subr.mxu0 0.0
    %2027 = vmatpush2.xpose.msra.mxu0 0.0
    %2028 = vmatprep.subr.mxu0 0.0
    %2029 = vmatpush2.xpose.msra.mxu0 0.0
    %2030 = vmatprep.subr.mxu0 0.0
    %2031 = vmatpush2.xpose.msra.mxu0 0.0
    %2032 = vmatprep.subr.mxu0 0.0
    %2033 = vmatpush2.xpose.msra.mxu0 0.0
    %2034 = vmatprep.subr.mxu0 0.0
    %2035 = vmatpush2.xpose.msra.mxu0 0.0
    %2036 = vmatprep.subr.mxu0 0.0
    %2037 = vmatpush2.xpose.msra.mxu0 0.0
    %2038 = vmatprep.subr.mxu0 0.0
    %2039 = vmatpush2.xpose.msra.mxu0 0.0
    %2040 = vmatprep.mubr.f32.mxu0 0.0
    %2041 = vmatmul.mubr.f32.gmra.mxu0 %v1929
    %v2042 = vpop.f32.mrf.mxu0
    %v2043 = vadd.f32 0.0, %v2042
    %v2044 = vpop.f32.mrf.mxu0
    %2045 = vmatprep.mubr.f32.mxu0 0.0
    %2046 = vmatmul.mubr.f32.gmra.mxu0 %v1932
    %v2047 = vpop.f32.mrf.mxu0
    %v2048 = vadd.f32 0.0, %v2047
    %v2049 = vpop.f32.mrf.mxu0
    %2050 = vmatprep.mubr.f32.mxu0 0.0
    %2051 = vmatmul.mubr.f32.gmra.mxu0 %v1935
    %v2052 = vpop.f32.mrf.mxu0
    %v2053 = vadd.f32 0.0, %v2052
    %v2054 = vpop.f32.mrf.mxu0
    %2055 = vmatprep.mubr.f32.mxu0 0.0
    %2056 = vmatmul.mubr.f32.gmra.mxu0 %v1938
    %v2057 = vpop.f32.mrf.mxu0
    %v2058 = vadd.f32 0.0, %v2057
    %v2059 = vpop.f32.mrf.mxu0
    %2060 = vmatprep.mubr.f32.mxu0 0.0
    %2061 = vmatmul.mubr.f32.gmra.mxu0 %v1941
    %v2062 = vpop.f32.mrf.mxu0
    %v2063 = vadd.f32 0.0, %v2062
    %v2064 = vpop.f32.mrf.mxu0
    %2065 = vmatprep.mubr.f32.mxu0 0.0
    %2066 = vmatmul.mubr.f32.gmra.mxu0 %v1944
    %v2067 = vpop.f32.mrf.mxu0
    %v2068 = vadd.f32 0.0, %v2067
    %v2069 = vpop.f32.mrf.mxu0
    %2070 = vmatprep.mubr.f32.mxu0 0.0
    %2071 = vmatmul.mubr.f32.gmra.mxu0 %v1947
    %v2072 = vpop.f32.mrf.mxu0
    %v2073 = vadd.f32 0.0, %v2072
    %v2074 = vpop.f32.mrf.mxu0
    %2075 = vmatprep.mubr.f32.mxu0 0.0
    %2076 = vmatmul.mubr.f32.gmra.mxu0 %v1950
    %v2077 = vpop.f32.mrf.mxu0
    %v2078 = vadd.f32 0.0, %v2077
    %v2079 = vpop.f32.mrf.mxu0
    %2080 = vdwg.mxu0
    %v2082 = vsel %vm1340, %v2043, 0
    %v2085 = vsel %vm1340, %v2048, 0
    %v2088 = vsel %vm1340, %v2053, 0
    %v2091 = vsel %vm1340, %v2058, 0
    %v2094 = vsel %vm1340, %v2063, 0
    %v2097 = vsel %vm1340, %v2068, 0
    %v2100 = vsel %vm1340, %v2073, 0
    %v2103 = vsel %vm1340, %v2078, 0
    %2105 = vmatprep.subr.mxu0 0.0
    %2106 = vmatpush1.msra.mxu0 0.0
    %2107 = vmatprep.subr.mxu0 0.0
    %2108 = vmatpush1.msra.mxu0 0.0
    %2109 = vmatprep.subr.mxu0 0.0
    %2110 = vmatpush1.msra.mxu0 0.0
    %2111 = vmatprep.subr.mxu0 0.0
    %2112 = vmatpush1.msra.mxu0 0.0
    %2113 = vmatprep.subr.mxu0 0.0
    %2114 = vmatpush1.msra.mxu0 0.0
    %2115 = vmatprep.subr.mxu0 0.0
    %2116 = vmatpush1.msra.mxu0 0.0
    %2117 = vmatprep.subr.mxu0 0.0
    %2118 = vmatpush1.msra.mxu0 0.0
    %2119 = vmatprep.subr.mxu0 0.0
    %2120 = vmatpush1.msra.mxu0 0.0
    %2121 = vmatprep.subr.mxu0 0.0
    %2122 = vmatpush1.msra.mxu0 %v1120
    %2123 = vmatprep.subr.mxu0 0.0
    %2124 = vmatpush1.msra.mxu0 %v1119
    %2125 = vmatprep.subr.mxu0 0.0
    %2126 = vmatpush1.msra.mxu0 %v1118
    %2127 = vmatprep.subr.mxu0 0.0
    %2128 = vmatpush1.msra.mxu0 %v1117
    %2129 = vmatprep.subr.mxu0 0.0
    %2130 = vmatpush1.msra.mxu0 %v1116
    %2131 = vmatprep.subr.mxu0 0.0
    %2132 = vmatpush1.msra.mxu0 %v1115
    %2133 = vmatprep.subr.mxu0 0.0
    %2134 = vmatpush1.msra.mxu0 %v1114
    %2135 = vmatprep.subr.mxu0 0.0
    %2136 = vmatpush1.msra.mxu0 %v1113
    %2137 = vmatprep.subr.mxu0 0.0
    %2138 = vmatpush2.msra.mxu0 0.0
    %2139 = vmatprep.subr.mxu0 0.0
    %2140 = vmatpush2.msra.mxu0 0.0
    %2141 = vmatprep.subr.mxu0 0.0
    %2142 = vmatpush2.msra.mxu0 0.0
    %2143 = vmatprep.subr.mxu0 0.0
    %2144 = vmatpush2.msra.mxu0 0.0
    %2145 = vmatprep.subr.mxu0 0.0
    %2146 = vmatpush2.msra.mxu0 0.0
    %2147 = vmatprep.subr.mxu0 0.0
    %2148 = vmatpush2.msra.mxu0 0.0
    %2149 = vmatprep.subr.mxu0 0.0
    %2150 = vmatpush2.msra.mxu0 0.0
    %2151 = vmatprep.subr.mxu0 0.0
    %2152 = vmatpush2.msra.mxu0 0.0
    %2153 = vmatprep.subr.mxu0 0.0
    %2154 = vmatpush2.msra.mxu0 0.0
    %2155 = vmatprep.subr.mxu0 0.0
    %2156 = vmatpush2.msra.mxu0 0.0
    %2157 = vmatprep.subr.mxu0 0.0
    %2158 = vmatpush2.msra.mxu0 0.0
    %2159 = vmatprep.subr.mxu0 0.0
    %2160 = vmatpush2.msra.mxu0 0.0
    %2161 = vmatprep.subr.mxu0 0.0
    %2162 = vmatpush2.msra.mxu0 0.0
    %2163 = vmatprep.subr.mxu0 0.0
    %2164 = vmatpush2.msra.mxu0 0.0
    %2165 = vmatprep.subr.mxu0 0.0
    %2166 = vmatpush2.msra.mxu0 0.0
    %2167 = vmatprep.subr.mxu0 0.0
    %2168 = vmatpush2.msra.mxu0 0.0
    %2169 = vmatprep.mubr.f32.mxu0 0.0
    %2170 = vmatmul.mubr.f32.gmra.mxu0 %v2082
    %v2171 = vpop.f32.mrf.mxu0
    %v2172 = vadd.f32 0.0, %v2171
    %v2173 = vpop.f32.mrf.mxu0
    %2174 = vmatprep.mubr.f32.mxu0 0.0
    %2175 = vmatmul.mubr.f32.gmra.mxu0 %v2085
    %v2176 = vpop.f32.mrf.mxu0
    %v2177 = vadd.f32 0.0, %v2176
    %v2178 = vpop.f32.mrf.mxu0
    %2179 = vmatprep.mubr.f32.mxu0 0.0
    %2180 = vmatmul.mubr.f32.gmra.mxu0 %v2088
    %v2181 = vpop.f32.mrf.mxu0
    %v2182 = vadd.f32 0.0, %v2181
    %v2183 = vpop.f32.mrf.mxu0
    %2184 = vmatprep.mubr.f32.mxu0 0.0
    %2185 = vmatmul.mubr.f32.gmra.mxu0 %v2091
    %v2186 = vpop.f32.mrf.mxu0
    %v2187 = vadd.f32 0.0, %v2186
    %v2188 = vpop.f32.mrf.mxu0
    %2189 = vmatprep.mubr.f32.mxu0 0.0
    %2190 = vmatmul.mubr.f32.gmra.mxu0 %v2094
    %v2191 = vpop.f32.mrf.mxu0
    %v2192 = vadd.f32 0.0, %v2191
    %v2193 = vpop.f32.mrf.mxu0
    %2194 = vmatprep.mubr.f32.mxu0 0.0
    %2195 = vmatmul.mubr.f32.gmra.mxu0 %v2097
    %v2196 = vpop.f32.mrf.mxu0
    %v2197 = vadd.f32 0.0, %v2196
    %v2198 = vpop.f32.mrf.mxu0
    %2199 = vmatprep.mubr.f32.mxu0 0.0
    %2200 = vmatmul.mubr.f32.gmra.mxu0 %v2100
    %v2201 = vpop.f32.mrf.mxu0
    %v2202 = vadd.f32 0.0, %v2201
    %v2203 = vpop.f32.mrf.mxu0
    %2204 = vmatprep.mubr.f32.mxu0 0.0
    %2205 = vmatmul.mubr.f32.gmra.mxu0 %v2103
    %v2206 = vpop.f32.mrf.mxu0
    %v2207 = vadd.f32 0.0, %v2206
    %v2208 = vpop.f32.mrf.mxu0
    %2209 = vdwg.mxu0
    %v2210 = vld [vmem:[%s4] sm:$0x1]
    %v2211 = vld [vmem:[%s3] sm:$0xff]
    %v2213 = vsel %vm1129, %v2172, 0
    %v2216 = vsel %vm1129, %v2177, 0
    %2218 = vmatprep.subr.mxu0 0.0
    %2219 = vmatpush1.msra.mxu0 0.0
    %2220 = vmatprep.subr.mxu0 0.0
    %2221 = vmatpush1.msra.mxu0 0.0
    %2222 = vmatprep.subr.mxu0 0.0
    %2223 = vmatpush1.msra.mxu0 0.0
    %2224 = vmatprep.subr.mxu0 0.0
    %2225 = vmatpush1.msra.mxu0 0.0
    %2226 = vmatprep.subr.mxu0 0.0
    %2227 = vmatpush1.msra.mxu0 0.0
    %2228 = vmatprep.subr.mxu0 0.0
    %2229 = vmatpush1.msra.mxu0 0.0
    %2230 = vmatprep.subr.mxu0 0.0
    %2231 = vmatpush1.msra.mxu0 0.0
    %2232 = vmatprep.subr.mxu0 0.0
    %2233 = vmatpush1.msra.mxu0 0.0
    %2234 = vmatprep.subr.mxu0 0.0
    %2235 = vmatpush1.msra.mxu0 0.0
    %2236 = vmatprep.subr.mxu0 0.0
    %2237 = vmatpush1.msra.mxu0 0.0
    %2238 = vmatprep.subr.mxu0 0.0
    %2239 = vmatpush1.msra.mxu0 0.0
    %2240 = vmatprep.subr.mxu0 0.0
    %2241 = vmatpush1.msra.mxu0 0.0
    %2242 = vmatprep.subr.mxu0 0.0
    %2243 = vmatpush1.msra.mxu0 0.0
    %2244 = vmatprep.subr.mxu0 0.0
    %2245 = vmatpush1.msra.mxu0 0.0
    %2246 = vmatprep.subr.mxu0 0.0
    %2247 = vmatpush1.msra.mxu0 0.0
    %2248 = vmatprep.subr.mxu0 0.0
    %2249 = vmatpush1.msra.mxu0 %v2211
    %2250 = vmatprep.subr.mxu0 0.0
    %2251 = vmatpush2.msra.mxu0 0.0
    %2252 = vmatprep.subr.mxu0 0.0
    %2253 = vmatpush2.msra.mxu0 0.0
    %2254 = vmatprep.subr.mxu0 0.0
    %2255 = vmatpush2.msra.mxu0 0.0
    %2256 = vmatprep.subr.mxu0 0.0
    %2257 = vmatpush2.msra.mxu0 0.0
    %2258 = vmatprep.subr.mxu0 0.0
    %2259 = vmatpush2.msra.mxu0 0.0
    %2260 = vmatprep.subr.mxu0 0.0
    %2261 = vmatpush2.msra.mxu0 0.0
    %2262 = vmatprep.subr.mxu0 0.0
    %2263 = vmatpush2.msra.mxu0 0.0
    %2264 = vmatprep.subr.mxu0 0.0
    %2265 = vmatpush2.msra.mxu0 0.0
    %2266 = vmatprep.subr.mxu0 0.0
    %2267 = vmatpush2.msra.mxu0 0.0
    %2268 = vmatprep.subr.mxu0 0.0
    %2269 = vmatpush2.msra.mxu0 0.0
    %2270 = vmatprep.subr.mxu0 0.0
    %2271 = vmatpush2.msra.mxu0 0.0
    %2272 = vmatprep.subr.mxu0 0.0
    %2273 = vmatpush2.msra.mxu0 0.0
    %2274 = vmatprep.subr.mxu0 0.0
    %2275 = vmatpush2.msra.mxu0 0.0
    %2276 = vmatprep.subr.mxu0 0.0
    %2277 = vmatpush2.msra.mxu0 0.0
    %2278 = vmatprep.subr.mxu0 0.0
    %2279 = vmatpush2.msra.mxu0 0.0
    %2280 = vmatprep.subr.mxu0 0.0
    %2281 = vmatpush2.msra.mxu0 0.0
    %2282 = vmatprep.mubr.f32.mxu0 0.0
    %2283 = vmatmul.mubr.f32.gmra.mxu0 %v2213
    %v2284 = vpop.f32.mrf.mxu0
    %v2285 = vadd.f32 0.0, %v2284
    %v2286 = vpop.f32.mrf.mxu0
    %2287 = vmatprep.mubr.f32.mxu0 0.0
    %2288 = vmatmul.mubr.f32.gmra.mxu0 %v2216
    %v2289 = vpop.f32.mrf.mxu0
    %v2290 = vadd.f32 0.0, %v2289
    %v2291 = vpop.f32.mrf.mxu0
    %2292 = vdwg.mxu0
    %v2294 = vlaneseq
    %v2295 = vshrl.u32 %v2294, 7
    %v2296 = vsub.s32 0, %v2295
    %v2297 = vrot.slane %v2210, %v2296
    %v2299 = vadd.f32 %v2297, %v2285
    %v2300 = vadd.f32 %v2297, %v2290
    %s2301 = scalar_lea.vmem %s3, 8
    %v2302 = vld [vmem:[%s2301] sm:$0xff]
    %v2304 = vsel %vm1129, %v2182, 0
    %v2307 = vsel %vm1129, %v2187, 0
    %2309 = vmatprep.subr.mxu0 0.0
    %2310 = vmatpush1.msra.mxu0 0.0
    %2311 = vmatprep.subr.mxu0 0.0
    %2312 = vmatpush1.msra.mxu0 0.0
    %2313 = vmatprep.subr.mxu0 0.0
    %2314 = vmatpush1.msra.mxu0 0.0
    %2315 = vmatprep.subr.mxu0 0.0
    %2316 = vmatpush1.msra.mxu0 0.0
    %2317 = vmatprep.subr.mxu0 0.0
    %2318 = vmatpush1.msra.mxu0 0.0
    %2319 = vmatprep.subr.mxu0 0.0
    %2320 = vmatpush1.msra.mxu0 0.0
    %2321 = vmatprep.subr.mxu0 0.0
    %2322 = vmatpush1.msra.mxu0 0.0
    %2323 = vmatprep.subr.mxu0 0.0
    %2324 = vmatpush1.msra.mxu0 0.0
    %2325 = vmatprep.subr.mxu0 0.0
    %2326 = vmatpush1.msra.mxu0 0.0
    %2327 = vmatprep.subr.mxu0 0.0
    %2328 = vmatpush1.msra.mxu0 0.0
    %2329 = vmatprep.subr.mxu0 0.0
    %2330 = vmatpush1.msra.mxu0 0.0
    %2331 = vmatprep.subr.mxu0 0.0
    %2332 = vmatpush1.msra.mxu0 0.0
    %2333 = vmatprep.subr.mxu0 0.0
    %2334 = vmatpush1.msra.mxu0 0.0
    %2335 = vmatprep.subr.mxu0 0.0
    %2336 = vmatpush1.msra.mxu0 0.0
    %2337 = vmatprep.subr.mxu0 0.0
    %2338 = vmatpush1.msra.mxu0 0.0
    %2339 = vmatprep.subr.mxu0 0.0
    %2340 = vmatpush1.msra.mxu0 %v2302
    %2341 = vmatprep.subr.mxu0 0.0
    %2342 = vmatpush2.msra.mxu0 0.0
    %2343 = vmatprep.subr.mxu0 0.0
    %2344 = vmatpush2.msra.mxu0 0.0
    %2345 = vmatprep.subr.mxu0 0.0
    %2346 = vmatpush2.msra.mxu0 0.0
    %2347 = vmatprep.subr.mxu0 0.0
    %2348 = vmatpush2.msra.mxu0 0.0
    %2349 = vmatprep.subr.mxu0 0.0
    %2350 = vmatpush2.msra.mxu0 0.0
    %2351 = vmatprep.subr.mxu0 0.0
    %2352 = vmatpush2.msra.mxu0 0.0
    %2353 = vmatprep.subr.mxu0 0.0
    %2354 = vmatpush2.msra.mxu0 0.0
    %2355 = vmatprep.subr.mxu0 0.0
    %2356 = vmatpush2.msra.mxu0 0.0
    %2357 = vmatprep.subr.mxu0 0.0
    %2358 = vmatpush2.msra.mxu0 0.0
    %2359 = vmatprep.subr.mxu0 0.0
    %2360 = vmatpush2.msra.mxu0 0.0
    %2361 = vmatprep.subr.mxu0 0.0
    %2362 = vmatpush2.msra.mxu0 0.0
    %2363 = vmatprep.subr.mxu0 0.0
    %2364 = vmatpush2.msra.mxu0 0.0
    %2365 = vmatprep.subr.mxu0 0.0
    %2366 = vmatpush2.msra.mxu0 0.0
    %2367 = vmatprep.subr.mxu0 0.0
    %2368 = vmatpush2.msra.mxu0 0.0
    %2369 = vmatprep.subr.mxu0 0.0
    %2370 = vmatpush2.msra.mxu0 0.0
    %2371 = vmatprep.subr.mxu0 0.0
    %2372 = vmatpush2.msra.mxu0 0.0
    %2373 = vmatprep.mubr.f32.mxu0 0.0
    %2374 = vmatmul.mubr.f32.gmra.mxu0 %v2304
    %v2375 = vpop.f32.mrf.mxu0
    %v2376 = vadd.f32 0.0, %v2375
    %v2377 = vpop.f32.mrf.mxu0
    %2378 = vmatprep.mubr.f32.mxu0 0.0
    %2379 = vmatmul.mubr.f32.gmra.mxu0 %v2307
    %v2380 = vpop.f32.mrf.mxu0
    %v2381 = vadd.f32 0.0, %v2380
    %v2382 = vpop.f32.mrf.mxu0
    %2383 = vdwg.mxu0
    %v2384 = vadd.f32 %v2299, %v2376
    %v2385 = vadd.f32 %v2300, %v2381
    %s2386 = scalar_lea.vmem %s3, 16
    %v2387 = vld [vmem:[%s2386] sm:$0xff]
    %v2389 = vsel %vm1129, %v2192, 0
    %v2392 = vsel %vm1129, %v2197, 0
    %2394 = vmatprep.subr.mxu0 0.0
    %2395 = vmatpush1.msra.mxu0 0.0
    %2396 = vmatprep.subr.mxu0 0.0
    %2397 = vmatpush1.msra.mxu0 0.0
    %2398 = vmatprep.subr.mxu0 0.0
    %2399 = vmatpush1.msra.mxu0 0.0
    %2400 = vmatprep.subr.mxu0 0.0
    %2401 = vmatpush1.msra.mxu0 0.0
    %2402 = vmatprep.subr.mxu0 0.0
    %2403 = vmatpush1.msra.mxu0 0.0
    %2404 = vmatprep.subr.mxu0 0.0
    %2405 = vmatpush1.msra.mxu0 0.0
    %2406 = vmatprep.subr.mxu0 0.0
    %2407 = vmatpush1.msra.mxu0 0.0
    %2408 = vmatprep.subr.mxu0 0.0
    %2409 = vmatpush1.msra.mxu0 0.0
    %2410 = vmatprep.subr.mxu0 0.0
    %2411 = vmatpush1.msra.mxu0 0.0
    %2412 = vmatprep.subr.mxu0 0.0
    %2413 = vmatpush1.msra.mxu0 0.0
    %2414 = vmatprep.subr.mxu0 0.0
    %2415 = vmatpush1.msra.mxu0 0.0
    %2416 = vmatprep.subr.mxu0 0.0
    %2417 = vmatpush1.msra.mxu0 0.0
    %2418 = vmatprep.subr.mxu0 0.0
    %2419 = vmatpush1.msra.mxu0 0.0
    %2420 = vmatprep.subr.mxu0 0.0
    %2421 = vmatpush1.msra.mxu0 0.0
    %2422 = vmatprep.subr.mxu0 0.0
    %2423 = vmatpush1.msra.mxu0 0.0
    %2424 = vmatprep.subr.mxu0 0.0
    %2425 = vmatpush1.msra.mxu0 %v2387
    %2426 = vmatprep.subr.mxu0 0.0
    %2427 = vmatpush2.msra.mxu0 0.0
    %2428 = vmatprep.subr.mxu0 0.0
    %2429 = vmatpush2.msra.mxu0 0.0
    %2430 = vmatprep.subr.mxu0 0.0
    %2431 = vmatpush2.msra.mxu0 0.0
    %2432 = vmatprep.subr.mxu0 0.0
    %2433 = vmatpush2.msra.mxu0 0.0
    %2434 = vmatprep.subr.mxu0 0.0
    %2435 = vmatpush2.msra.mxu0 0.0
    %2436 = vmatprep.subr.mxu0 0.0
    %2437 = vmatpush2.msra.mxu0 0.0
    %2438 = vmatprep.subr.mxu0 0.0
    %2439 = vmatpush2.msra.mxu0 0.0
    %2440 = vmatprep.subr.mxu0 0.0
    %2441 = vmatpush2.msra.mxu0 0.0
    %2442 = vmatprep.subr.mxu0 0.0
    %2443 = vmatpush2.msra.mxu0 0.0
    %2444 = vmatprep.subr.mxu0 0.0
    %2445 = vmatpush2.msra.mxu0 0.0
    %2446 = vmatprep.subr.mxu0 0.0
    %2447 = vmatpush2.msra.mxu0 0.0
    %2448 = vmatprep.subr.mxu0 0.0
    %2449 = vmatpush2.msra.mxu0 0.0
    %2450 = vmatprep.subr.mxu0 0.0
    %2451 = vmatpush2.msra.mxu0 0.0
    %2452 = vmatprep.subr.mxu0 0.0
    %2453 = vmatpush2.msra.mxu0 0.0
    %2454 = vmatprep.subr.mxu0 0.0
    %2455 = vmatpush2.msra.mxu0 0.0
    %2456 = vmatprep.subr.mxu0 0.0
    %2457 = vmatpush2.msra.mxu0 0.0
    %2458 = vmatprep.mubr.f32.mxu0 0.0
    %2459 = vmatmul.mubr.f32.gmra.mxu0 %v2389
    %v2460 = vpop.f32.mrf.mxu0
    %v2461 = vadd.f32 0.0, %v2460
    %v2462 = vpop.f32.mrf.mxu0
    %2463 = vmatprep.mubr.f32.mxu0 0.0
    %2464 = vmatmul.mubr.f32.gmra.mxu0 %v2392
    %v2465 = vpop.f32.mrf.mxu0
    %v2466 = vadd.f32 0.0, %v2465
    %v2467 = vpop.f32.mrf.mxu0
    %2468 = vdwg.mxu0
    %v2469 = vadd.f32 %v2384, %v2461
    %v2470 = vadd.f32 %v2385, %v2466
    %s2471 = scalar_lea.vmem %s3, 24
    %v2472 = vld [vmem:[%s2471] sm:$0xff]
    %v2474 = vsel %vm1129, %v2202, 0
    %v2477 = vsel %vm1129, %v2207, 0
    %2479 = vmatprep.subr.mxu0 0.0
    %2480 = vmatpush1.msra.mxu0 0.0
    %2481 = vmatprep.subr.mxu0 0.0
    %2482 = vmatpush1.msra.mxu0 0.0
    %2483 = vmatprep.subr.mxu0 0.0
    %2484 = vmatpush1.msra.mxu0 0.0
    %2485 = vmatprep.subr.mxu0 0.0
    %2486 = vmatpush1.msra.mxu0 0.0
    %2487 = vmatprep.subr.mxu0 0.0
    %2488 = vmatpush1.msra.mxu0 0.0
    %2489 = vmatprep.subr.mxu0 0.0
    %2490 = vmatpush1.msra.mxu0 0.0
    %2491 = vmatprep.subr.mxu0 0.0
    %2492 = vmatpush1.msra.mxu0 0.0
    %2493 = vmatprep.subr.mxu0 0.0
    %2494 = vmatpush1.msra.mxu0 0.0
    %2495 = vmatprep.subr.mxu0 0.0
    %2496 = vmatpush1.msra.mxu0 0.0
    %2497 = vmatprep.subr.mxu0 0.0
    %2498 = vmatpush1.msra.mxu0 0.0
    %2499 = vmatprep.subr.mxu0 0.0
    %2500 = vmatpush1.msra.mxu0 0.0
    %2501 = vmatprep.subr.mxu0 0.0
    %2502 = vmatpush1.msra.mxu0 0.0
    %2503 = vmatprep.subr.mxu0 0.0
    %2504 = vmatpush1.msra.mxu0 0.0
    %2505 = vmatprep.subr.mxu0 0.0
    %2506 = vmatpush1.msra.mxu0 0.0
    %2507 = vmatprep.subr.mxu0 0.0
    %2508 = vmatpush1.msra.mxu0 0.0
    %2509 = vmatprep.subr.mxu0 0.0
    %2510 = vmatpush1.msra.mxu0 %v2472
    %2511 = vmatprep.subr.mxu0 0.0
    %2512 = vmatpush2.msra.mxu0 0.0
    %2513 = vmatprep.subr.mxu0 0.0
    %2514 = vmatpush2.msra.mxu0 0.0
    %2515 = vmatprep.subr.mxu0 0.0
    %2516 = vmatpush2.msra.mxu0 0.0
    %2517 = vmatprep.subr.mxu0 0.0
    %2518 = vmatpush2.msra.mxu0 0.0
    %2519 = vmatprep.subr.mxu0 0.0
    %2520 = vmatpush2.msra.mxu0 0.0
    %2521 = vmatprep.subr.mxu0 0.0
    %2522 = vmatpush2.msra.mxu0 0.0
    %2523 = vmatprep.subr.mxu0 0.0
    %2524 = vmatpush2.msra.mxu0 0.0
    %2525 = vmatprep.subr.mxu0 0.0
    %2526 = vmatpush2.msra.mxu0 0.0
    %2527 = vmatprep.subr.mxu0 0.0
    %2528 = vmatpush2.msra.mxu0 0.0
    %2529 = vmatprep.subr.mxu0 0.0
    %2530 = vmatpush2.msra.mxu0 0.0
    %2531 = vmatprep.subr.mxu0 0.0
    %2532 = vmatpush2.msra.mxu0 0.0
    %2533 = vmatprep.subr.mxu0 0.0
    %2534 = vmatpush2.msra.mxu0 0.0
    %2535 = vmatprep.subr.mxu0 0.0
    %2536 = vmatpush2.msra.mxu0 0.0
    %2537 = vmatprep.subr.mxu0 0.0
    %2538 = vmatpush2.msra.mxu0 0.0
    %2539 = vmatprep.subr.mxu0 0.0
    %2540 = vmatpush2.msra.mxu0 0.0
    %2541 = vmatprep.subr.mxu0 0.0
    %2542 = vmatpush2.msra.mxu0 0.0
    %2543 = vmatprep.mubr.f32.mxu0 0.0
    %2544 = vmatmul.mubr.f32.gmra.mxu0 %v2474
    %v2545 = vpop.f32.mrf.mxu0
    %v2546 = vadd.f32 0.0, %v2545
    %v2547 = vpop.f32.mrf.mxu0
    %2548 = vmatprep.mubr.f32.mxu0 0.0
    %2549 = vmatmul.mubr.f32.gmra.mxu0 %v2477
    %v2550 = vpop.f32.mrf.mxu0
    %v2551 = vadd.f32 0.0, %v2550
    %v2552 = vpop.f32.mrf.mxu0
    %2553 = vdwg.mxu0
    %v2554 = vadd.f32 %v2469, %v2546
    %v2555 = vadd.f32 %v2470, %v2551
    %v2556 = vsel %vm45, %v2554, 0.0
    %2557 = vadd.xlane.f32.xlu0 %v2556
    %v2558 = vpop.xlane.xlu0 %2557
    %v2559 = vsel %vm45, %v2555, 0.0
    %2560 = vadd.xlane.f32.xlu0 %v2559
    %v2561 = vpop.xlane.xlu0 %2560
    %v2562 = vrcp.pop 32.0
    %v2563 = vmul.f32 %v2558, %v2562
    %v2564 = vmul.f32 %v2561, %v2562
    %v2565 = vsub.f32 %v2554, %v2563
    %v2566 = vsub.f32 %v2555, %v2564
    %v2567 = vmul.f32 %v2565, %v2565
    %v2568 = vmul.f32 %v2566, %v2566
    %v2569 = vsel %vm45, %v2567, 0.0
    %2570 = vadd.xlane.f32.xlu0 %v2569
    %v2571 = vpop.xlane.xlu0 %2570
    %v2572 = vsel %vm45, %v2568, 0.0
    %2573 = vadd.xlane.f32.xlu0 %v2572
    %v2574 = vpop.xlane.xlu0 %2573
    %v2575 = vmul.f32 %v2571, %v2562
    %v2576 = vmul.f32 %v2574, %v2562
    %v2577 = vadd.f32 %v2575, 1e-05
    %v2578 = vadd.f32 %v2576, 1e-05
    %v2579 = vrsqrt.pop %v2577
    %v2580 = vrsqrt.pop %v2578
    %v2581 = vmul.f32 %v2565, %v2579
    %v2582 = vmul.f32 %v2566, %v2580
    %s2583 = scalar_lea.vmem %s4, 1
    %v2584 = vld [vmem:[%s2583] sm:$0x1]
    %v2586 = vlaneseq
    %v2587 = vshrl.u32 %v2586, 7
    %v2588 = vsub.s32 0, %v2587
    %v2589 = vrot.slane %v2584, %v2588
    %v2591 = vmul.f32 %v2581, %v2589
    %v2592 = vmul.f32 %v2582, %v2589
    %s2593 = scalar_lea.vmem %s4, 2
    %v2594 = vld [vmem:[%s2593] sm:$0x1]
    %v2596 = vlaneseq
    %v2597 = vshrl.u32 %v2596, 7
    %v2598 = vsub.s32 0, %v2597
    %v2599 = vrot.slane %v2594, %v2598
    %v2601 = vadd.f32 %v2591, %v2599
    %v2602 = vadd.f32 %v2592, %v2599
    %2603 = vst.msk [vmem:[#allocation2] sm:$0xff] %vm45, %v2601
    %2604 = vst.msk [vmem:[#allocation2 + $0x8] sm:$0xff] %vm45, %v2602
    // Predicated region
    $region30: #{multi_head_attention_forward.1} parent=1 // pred_check
      _
    $region31: #{multi_head_attention_forward.1} parent=1 // pred_check_branch
      %2606 = sbr.rel (0) target = $region33
    $region32: #{multi_head_attention_forward.1} parent=1 // pred_region
      %s2608 = ssub.s32 256, 256
      %2609 = vsyncadd [#allocation3], %s2608
      %s2610 = sshll.u32 [#allocation2], 4
      %s2611 = int_to_ptr.vmem [resolvable:$true] %s2610
      %2616 = dma.vmem_to_hbm [thread:$0]  %s2611, 256, %s7, [#allocation3], 128, 128, 8
    $region33: #{multi_head_attention_forward.1} parent=1 // pred_fallthru
      _
    // Predicated region
    $region34: #{multi_head_attention_forward.1} parent=1 // pred_check
      _
    $region35: #{multi_head_attention_forward.1} parent=1 // pred_check_branch
      %2618 = sbr.rel (0) target = $region37
    $region36: #{multi_head_attention_forward.1} parent=1 // pred_region
      _
    $region37: #{multi_head_attention_forward.1} parent=1 // pred_fallthru
      _
    // Predicated region
    $region38: #{multi_head_attention_forward.1} parent=1 // pred_check
      _
    $region39: #{multi_head_attention_forward.1} parent=1 // pred_check_branch
      %2620 = sbr.rel (0) target = $region41
    $region40: #{multi_head_attention_forward.1} parent=1 // pred_region
      %s2622 = ssub.s32 16, 16
      %2623 = vsyncadd [#allocation5], %s2622
      %s2625 = sshll.u32 [#allocation4], 4
      %s2626 = int_to_ptr.vmem [resolvable:$true] %s2625
      %2628 = dma.vmem_to_hbm [thread:$0]  %s2626, 16, %s9, [#allocation5]
    $region41: #{multi_head_attention_forward.1} parent=1 // pred_fallthru
      _
    // Predicated region
    $region42: #{multi_head_attention_forward.1} parent=1 // pred_check
      _
    $region43: #{multi_head_attention_forward.1} parent=1 // pred_check_branch
      %2630 = sbr.rel (0) target = $region45
    $region44: #{multi_head_attention_forward.1} parent=1 // pred_region
      _
    $region45: #{multi_head_attention_forward.1} parent=1 // pred_fallthru
      _
    // Predicated region
    $region46: #{multi_head_attention_forward.1} parent=1 // pred_check
      _
    $region47: #{multi_head_attention_forward.1} parent=1 // pred_check_branch
      %2632 = sbr.rel (0) target = $region49
    $region48: #{multi_head_attention_forward.1} parent=1 // pred_region
      %2633 = dma.done [#allocation3], 256
    $region49: #{multi_head_attention_forward.1} parent=1 // pred_fallthru
      _
    // Predicated region
    $region50: #{multi_head_attention_forward.1} parent=1 // pred_check
      _
    $region51: #{multi_head_attention_forward.1} parent=1 // pred_check_branch
      %2635 = sbr.rel (0) target = $region53
    $region52: #{multi_head_attention_forward.1} parent=1 // pred_region
      _
    $region53: #{multi_head_attention_forward.1} parent=1 // pred_fallthru
      _
    // Predicated region
    $region54: #{multi_head_attention_forward.1} parent=1 // pred_check
      _
    $region55: #{multi_head_attention_forward.1} parent=1 // pred_check_branch
      %2637 = sbr.rel (0) target = $region57
    $region56: #{multi_head_attention_forward.1} parent=1 // pred_region
      %2638 = dma.done [#allocation5], 16
    $region57: #{multi_head_attention_forward.1} parent=1 // pred_fallthru
      _
    // Predicated region
    $region58: #{multi_head_attention_forward.1} parent=1 // pred_check
      _
    $region59: #{multi_head_attention_forward.1} parent=1 // pred_check_branch
      %2640 = sbr.rel (0) target = $region61
    $region60: #{multi_head_attention_forward.1} parent=1 // pred_region
      _
    $region61: #{multi_head_attention_forward.1} parent=1 // pred_fallthru
      _
    %2641 = vsyncpa [#allocation3], 1
    %2642 = vsyncpa [#allocation5], 1

</llo_original>
